<compile_context>
chip_gen: v6e
topology: v6e:2x2x1
jax: 0.10.0
libtpu: 0.0.40
codegen_flags: <defaults>
</compile_context>

<pallas_src>
import jax
import jax.numpy as jnp
from jax.experimental import pallas as pl
from jax.experimental.pallas import tpu as pltpu


# ----------------------------------------------------------------------------
# Kernels
# ----------------------------------------------------------------------------
def _conv_pool_kernel(p_ref, w_ref, b_ref, o_ref):
    """conv(+bias)+ReLU+2x2-maxpool for one row tile, as one MXU matmul.

    p_ref : (4, TM, K) im2col patches; axis 0 = position inside the 2x2 pool
            window, TM rows = pooled output pixels of this tile, K = kh*kw*cin.
    w_ref : (K, N)     flattened conv weight (kh, kw, cin) x cout (unpadded).
    b_ref : (1, N)     bias.
    o_ref : (TM, N)    pooled activations for this tile.
    """
    tm = p_ref.shape[1]
    k = p_ref.shape[2]
    # One long MXU pass over all 4 pool positions (amortizes MXU fill/drain);
    # the (4, TM, K) -> (4*TM, K) collapse is tile-aligned (TM % 8 == 0).
    y = jnp.dot(p_ref[...].reshape(4 * tm, k), w_ref[...],
                preferred_element_type=jnp.float32)
    y = jnp.maximum(y + b_ref[...], 0.0)                       # bias + ReLU
    # 2x2 max-pool = elementwise max of the four TM-row slices (pure VPU,
    # sublane-aligned static slices -> no relayout).
    o_ref[...] = jnp.maximum(
        jnp.maximum(y[0 * tm:1 * tm], y[1 * tm:2 * tm]),
        jnp.maximum(y[2 * tm:3 * tm], y[3 * tm:4 * tm]),
    ).astype(o_ref.dtype)


def _mlp_kernel(x_ref, w1_ref, b1_ref, w2_ref, b2_ref, w3_ref, b3_ref, o_ref):
    """Fused fc1+ReLU -> fc2+ReLU -> fc3 for one batch tile (weights resident)."""
    h = jnp.dot(x_ref[...], w1_ref[...],
                preferred_element_type=jnp.float32) + b1_ref[...]
    h = jnp.maximum(h, 0.0)
    h = jnp.dot(h, w2_ref[...],
                preferred_element_type=jnp.float32) + b2_ref[...]
    h = jnp.maximum(h, 0.0)
    o_ref[...] = (jnp.dot(h, w3_ref[...],
                          preferred_element_type=jnp.float32)
                  + b3_ref[...]).astype(o_ref.dtype)


# ----------------------------------------------------------------------------
# Wrapper helpers (layout plumbing only — no compute hoisted out of kernels)
# ----------------------------------------------------------------------------
def _round_up(n, m):
    return ((n + m - 1) // m) * m


def _pad_to(a, axis, target):
    pad = target - a.shape[axis]
    if pad <= 0:
        return a
    widths = [(0, 0)] * a.ndim
    widths[axis] = (0, pad)
    return jnp.pad(a, widths)


def _pool_grouped_patches(x_nhwc, ksize, pooled_hw):
    """im2col patches grouped by 2x2-pool window position.

    x_nhwc: (B, H, W, C) -> (4, B*ph*pw, ksize*ksize*C); patch flatten order is
    (kh, kw, cin), matching the flattened conv weight layout.
    """
    # TODO(synk): move patch assembly in-kernel (or fully fuse the net per
    # batch tile) to remove the remaining ~13-19x im2col HBM blow-up.
    B, H, W, C = x_nhwc.shape
    ph, pw = pooled_hw
    groups = []
    for dy in range(2):
        for dx in range(2):
            rows = 2 * jnp.arange(ph) + dy                  # conv-output rows
            cols = 2 * jnp.arange(pw) + dx                  # conv-output cols
            ridx = rows[:, None] + jnp.arange(ksize)        # (ph, k)
            cidx = cols[:, None] + jnp.arange(ksize)        # (pw, k)
            patches = x_nhwc[:, ridx, :, :]                 # (B, ph, k, W, C)
            patches = patches[:, :, :, cidx, :]             # (B, ph, k, pw, k, C)
            patches = jnp.transpose(patches, (0, 1, 3, 2, 4, 5))  # (B,ph,pw,kh,kw,C)
            groups.append(patches.reshape(B * ph * pw, ksize * ksize * C))
    return jnp.stack(groups, axis=0)


def _conv_pool(patches, w_mat, bias, *, m_valid, tile_m=512):
    """Gridded conv+ReLU+pool. patches: (4, M, K) f32, K/N left at true sizes."""
    _, M, K = patches.shape
    N = w_mat.shape[1]
    tm = min(tile_m, _round_up(M, 8))        # 512 for big batches, padded-M else
    Mp = _round_up(M, tm)
    patches = _pad_to(patches, 1, Mp)        # zero rows, sliced off below
    out = pl.pallas_call(
        _conv_pool_kernel,
        out_shape=jax.ShapeDtypeStruct((Mp, N), jnp.float32),
        grid=(Mp // tm,),
        in_specs=[
            pl.BlockSpec((4, tm, K), lambda i: (0, i, 0)),   # row-tiled patches
            pl.BlockSpec((K, N), lambda i: (0, 0)),          # weight, resident
            pl.BlockSpec((1, N), lambda i: (0, 0)),          # bias, resident
        ],
        out_specs=pl.BlockSpec((tm, N), lambda i: (i, 0)),
        compiler_params=pltpu.CompilerParams(
            dimension_semantics=("parallel",)),
    )(patches, w_mat, bias.reshape(1, N))
    return out[:m_valid]


def _mlp(x, params, *, tile_b=256):
    B, F = x.shape
    nc = params["fc3_w"].shape[0]
    tb = min(tile_b, _round_up(B, 8))
    Bp = _round_up(B, tb)
    xp = _pad_to(x, 0, Bp)
    w1 = params["fc1_w"].T                    # (400, 120)
    w2 = params["fc2_w"].T                    # (120, 84)
    w3 = params["fc3_w"].T                    # (84, nc)
    b1 = params["fc1_b"].reshape(1, -1)
    b2 = params["fc2_b"].reshape(1, -1)
    b3 = params["fc3_b"].reshape(1, -1)
    H1, H2 = w1.shape[1], w2.shape[1]
    const = lambda i: (0, 0)                  # weights: fetched once, resident
    out = pl.pallas_call(
        _mlp_kernel,
        out_shape=jax.ShapeDtypeStruct((Bp, nc), jnp.float32),
        grid=(Bp // tb,),
        in_specs=[
            pl.BlockSpec((tb, F), lambda i: (i, 0)),
            pl.BlockSpec((F, H1), const), pl.BlockSpec((1, H1), const),
            pl.BlockSpec((H1, H2), const), pl.BlockSpec((1, H2), const),
            pl.BlockSpec((H2, nc), const), pl.BlockSpec((1, nc), const),
        ],
        out_specs=pl.BlockSpec((tb, nc), lambda i: (i, 0)),
        compiler_params=pltpu.CompilerParams(
            dimension_semantics=("parallel",)),
    )(xp, w1, b1, w2, b2, w3, b3)
    return out[:B]


# ----------------------------------------------------------------------------
# Public forward (matches CNNCifar.forward; input is NCHW like PyTorch)
# ----------------------------------------------------------------------------
@jax.jit
def cnn_forward(x_nchw, params):
    B = x_nchw.shape[0]
    x = jnp.transpose(x_nchw, (0, 2, 3, 1))                    # NHWC

    # Stage 1: conv1(3->6, 5x5) + ReLU + maxpool2x2 (fused, gridded kernel)
    p1 = _pool_grouped_patches(x, 5, (14, 14))                  # (4, B*196, 75)
    w1m = jnp.transpose(params["conv1_w"], (2, 3, 1, 0)).reshape(75, 6)
    y1 = _conv_pool(p1, w1m, params["conv1_b"], m_valid=B * 196)
    y1 = y1.reshape(B, 14, 14, 6)

    # Stage 2: conv2(6->16, 5x5) + ReLU + maxpool2x2 (fused, gridded kernel)
    p2 = _pool_grouped_patches(y1, 5, (5, 5))                   # (4, B*25, 150)
    w2m = jnp.transpose(params["conv2_w"], (2, 3, 1, 0)).reshape(150, 16)
    y2 = _conv_pool(p2, w2m, params["conv2_b"], m_valid=B * 25)
    y2 = y2.reshape(B, 5, 5, 16)

    # Flatten exactly like x.view(-1, 16*5*5) on an NCHW tensor: (c, h, w) order.
    flat = jnp.transpose(y2, (0, 3, 1, 2)).reshape(B, 16 * 5 * 5)

    # Stage 3: fc1+ReLU, fc2+ReLU, fc3 (single fused kernel, gridded over batch)
    return _mlp(flat, params)


# ----------------------------------------------------------------------------
# Pure-JAX reference (validation only)
# ----------------------------------------------------------------------------
def _maxpool_nchw(y):
    B, C, H, W = y.shape
    return y.reshape(B, C, H // 2, 2, W // 2, 2).max(axis=(3, 5))


def cnn_forward_ref(x_nchw, params):
    dn = ("NCHW", "OIHW", "NCHW")
    y = jax.lax.conv_general_dilated(x_nchw, params["conv1_w"], (1, 1), "VALID",
                                     dimension_numbers=dn)
    y = jax.nn.relu(y + params["conv1_b"][None, :, None, None])
    y = _maxpool_nchw(y)
    y = jax.lax.conv_general_dilated(y, params["conv2_w"], (1, 1), "VALID",
                                     dimension_numbers=dn)
    y = jax.nn.relu(y + params["conv2_b"][None, :, None, None])
    y = _maxpool_nchw(y)
    y = y.reshape(y.shape[0], -1)
    y = jax.nn.relu(y @ params["fc1_w"].T + params["fc1_b"])
    y = jax.nn.relu(y @ params["fc2_w"].T + params["fc2_b"])
    return y @ params["fc3_w"].T + params["fc3_b"]


# ----------------------------------------------------------------------------
# Deterministic parameter init (PyTorch-style uniform(-1/sqrt(fan_in), ...))
# ----------------------------------------------------------------------------
def init_params(key, num_classes):
    def uni(k, shape, fan_in):
        bound = 1.0 / jnp.sqrt(fan_in)
        return jax.random.uniform(k, shape, jnp.float32, -bound, bound)

    keys = jax.random.split(key, 10)
    return {
        "conv1_w": uni(keys[0], (6, 3, 5, 5), 3 * 25),
        "conv1_b": uni(keys[1], (6,), 3 * 25),
        "conv2_w": uni(keys[2], (16, 6, 5, 5), 6 * 25),
        "conv2_b": uni(keys[3], (16,), 6 * 25),
        "fc1_w":   uni(keys[4], (120, 400), 400),
        "fc1_b":   uni(keys[5], (120,), 400),
        "fc2_w":   uni(keys[6], (84, 120), 120),
        "fc2_b":   uni(keys[7], (84,), 120),
        "fc3_w":   uni(keys[8], (num_classes, 84), 84),
        "fc3_b":   uni(keys[9], (num_classes,), 84),
    }


# ----------------------------------------------------------------------------
if __name__ == "__main__":
    batch, num_classes = 2, 10

    key = jax.random.PRNGKey(0)
    key, xkey = jax.random.split(key)
    x = jax.random.normal(xkey, (batch, 3, 32, 32), jnp.float32)   # CIFAR-shaped
    params = init_params(key, num_classes)

    out = jax.block_until_ready(cnn_forward(x, params))
    assert out.shape == (batch, num_classes), out.shape

    ref = jax.block_until_ready(cnn_forward_ref(x, params))
    assert jnp.allclose(out, ref, atol=1e-3, rtol=1e-3), (
        float(jnp.max(jnp.abs(out - ref))))

    print("KERNEL_OK")
</pallas_src>

<mosaic_0001>
module attributes {stable_mosaic.version = 11 : i64} {
  func.func @_conv_pool_kernel(%arg0: i32, %arg1: memref<4x392x75xf32, #tpu.memory_space<vmem>>, %arg2: memref<75x6xf32, #tpu.memory_space<vmem>>, %arg3: memref<1x6xf32, #tpu.memory_space<vmem>>, %arg4: memref<392x6xf32, #tpu.memory_space<vmem>>) attributes {dimension_semantics = [#tpu.dimension_semantics<parallel>], iteration_bounds = array<i64: 1>, scalar_prefetch = 0 : i64, scratch_operands = 0 : i64, tpu.core_type = #tpu.core_type<tc>, window_params = [{transform_indices = @transform_0, window_bounds = array<i64: 4, 392, 75>}, {pipeline_mode = #tpu.pipeline_mode<synchronous>, transform_indices = @transform_1, window_bounds = array<i64: 75, 6>}, {pipeline_mode = #tpu.pipeline_mode<synchronous>, transform_indices = @transform_2, window_bounds = array<i64: 1, 6>}, {transform_indices = @transform_3, window_bounds = array<i64: 392, 6>}]} {
    %c0 = arith.constant 0 : index
    %c0_0 = arith.constant 0 : index
    %c0_1 = arith.constant 0 : index
    %0 = vector.load %arg1[%c0, %c0_0, %c0_1] : memref<4x392x75xf32, #tpu.memory_space<vmem>>, vector<4x392x75xf32>
    %1 = vector.shape_cast %0 : vector<4x392x75xf32> to vector<1568x75xf32>
    %c0_2 = arith.constant 0 : index
    %c0_3 = arith.constant 0 : index
    %2 = vector.load %arg2[%c0_2, %c0_3] : memref<75x6xf32, #tpu.memory_space<vmem>>, vector<75x6xf32>
    %cst = arith.constant dense<0.000000e+00> : vector<1568x6xf32>
    %3 = tpu.matmul %1, %2, %cst {dimension_numbers = #tpu.dot_dimension_numbers<[1], [0], [0], [1], [0, 0, 1, 1], [], []>} : vector<1568x75xf32>, vector<75x6xf32>, vector<1568x6xf32> -> vector<1568x6xf32>
    %c0_4 = arith.constant 0 : index
    %c0_5 = arith.constant 0 : index
    %4 = vector.load %arg3[%c0_4, %c0_5] : memref<1x6xf32, #tpu.memory_space<vmem>>, vector<1x6xf32>
    %5 = vector.broadcast %4 : vector<1x6xf32> to vector<1568x6xf32>
    %6 = arith.addf %3, %5 : vector<1568x6xf32>
    %cst_6 = arith.constant 0.000000e+00 : f32
    %7 = vector.broadcast %cst_6 : f32 to vector<1568x6xf32>
    %8 = arith.maximumf %6, %7 : vector<1568x6xf32>
    %9 = vector.extract_strided_slice %8 {offsets = [0, 0], sizes = [392, 6], strides = [1, 1]} : vector<1568x6xf32> to vector<392x6xf32>
    %10 = vector.extract_strided_slice %8 {offsets = [392, 0], sizes = [392, 6], strides = [1, 1]} : vector<1568x6xf32> to vector<392x6xf32>
    %11 = arith.maximumf %9, %10 : vector<392x6xf32>
    %12 = vector.extract_strided_slice %8 {offsets = [784, 0], sizes = [392, 6], strides = [1, 1]} : vector<1568x6xf32> to vector<392x6xf32>
    %13 = vector.extract_strided_slice %8 {offsets = [1176, 0], sizes = [392, 6], strides = [1, 1]} : vector<1568x6xf32> to vector<392x6xf32>
    %14 = arith.maximumf %12, %13 : vector<392x6xf32>
    %15 = arith.maximumf %11, %14 : vector<392x6xf32>
    %c0_7 = arith.constant 0 : index
    %c0_8 = arith.constant 0 : index
    %16 = vector.load %arg4[%c0_7, %c0_8] : memref<392x6xf32, #tpu.memory_space<vmem>>, vector<392x6xf32>
    tpu.vector_store %arg4[%c0_7, %c0_8], %15 {strides = array<i32>} : memref<392x6xf32, #tpu.memory_space<vmem>>, vector<392x6xf32>,
    return
  }
  func.func @transform_0(%arg0: i32) -> (i32, i32, i32) {
    %c0_i32 = arith.constant 0 : i32
    %c0_i32_0 = arith.constant 0 : i32
    %c0_i32_1 = arith.constant 0 : i32
    return %c0_i32, %arg0, %c0_i32_0 : i32, i32, i32
  }
  func.func @transform_1(%arg0: i32) -> (i32, i32) {
    %c0_i32 = arith.constant 0 : i32
    %c0_i32_0 = arith.constant 0 : i32
    %c0_i32_1 = arith.constant 0 : i32
    return %c0_i32, %c0_i32_0 : i32, i32
  }
  func.func @transform_2(%arg0: i32) -> (i32, i32) {
    %c0_i32 = arith.constant 0 : i32
    %c0_i32_0 = arith.constant 0 : i32
    %c0_i32_1 = arith.constant 0 : i32
    return %c0_i32, %c0_i32_0 : i32, i32
  }
  func.func @transform_3(%arg0: i32) -> (i32, i32) {
    %c0_i32 = arith.constant 0 : i32
    %c0_i32_0 = arith.constant 0 : i32
    return %arg0, %c0_i32 : i32, i32
  }
}

module attributes {stable_mosaic.version = 11 : i64} {
  func.func @_conv_pool_kernel(%arg0: i32, %arg1: memref<4x56x150xf32, #tpu.memory_space<vmem>>, %arg2: memref<150x16xf32, #tpu.memory_space<vmem>>, %arg3: memref<1x16xf32, #tpu.memory_space<vmem>>, %arg4: memref<56x16xf32, #tpu.memory_space<vmem>>) attributes {dimension_semantics = [#tpu.dimension_semantics<parallel>], iteration_bounds = array<i64: 1>, scalar_prefetch = 0 : i64, scratch_operands = 0 : i64, tpu.core_type = #tpu.core_type<tc>, window_params = [{transform_indices = @transform_0, window_bounds = array<i64: 4, 56, 150>}, {pipeline_mode = #tpu.pipeline_mode<synchronous>, transform_indices = @transform_1, window_bounds = array<i64: 150, 16>}, {pipeline_mode = #tpu.pipeline_mode<synchronous>, transform_indices = @transform_2, window_bounds = array<i64: 1, 16>}, {transform_indices = @transform_3, window_bounds = array<i64: 56, 16>}]} {
    %c0 = arith.constant 0 : index
    %c0_0 = arith.constant 0 : index
    %c0_1 = arith.constant 0 : index
    %0 = vector.load %arg1[%c0, %c0_0, %c0_1] : memref<4x56x150xf32, #tpu.memory_space<vmem>>, vector<4x56x150xf32>
    %1 = vector.shape_cast %0 : vector<4x56x150xf32> to vector<224x150xf32>
    %c0_2 = arith.constant 0 : index
    %c0_3 = arith.constant 0 : index
    %2 = vector.load %arg2[%c0_2, %c0_3] : memref<150x16xf32, #tpu.memory_space<vmem>>, vector<150x16xf32>
    %cst = arith.constant dense<0.000000e+00> : vector<224x16xf32>
    %3 = tpu.matmul %1, %2, %cst {dimension_numbers = #tpu.dot_dimension_numbers<[1], [0], [0], [1], [0, 0, 1, 1], [], []>} : vector<224x150xf32>, vector<150x16xf32>, vector<224x16xf32> -> vector<224x16xf32>
    %c0_4 = arith.constant 0 : index
    %c0_5 = arith.constant 0 : index
    %4 = vector.load %arg3[%c0_4, %c0_5] : memref<1x16xf32, #tpu.memory_space<vmem>>, vector<1x16xf32>
    %5 = vector.broadcast %4 : vector<1x16xf32> to vector<224x16xf32>
    %6 = arith.addf %3, %5 : vector<224x16xf32>
    %cst_6 = arith.constant 0.000000e+00 : f32
    %7 = vector.broadcast %cst_6 : f32 to vector<224x16xf32>
    %8 = arith.maximumf %6, %7 : vector<224x16xf32>
    %9 = vector.extract_strided_slice %8 {offsets = [0, 0], sizes = [56, 16], strides = [1, 1]} : vector<224x16xf32> to vector<56x16xf32>
    %10 = vector.extract_strided_slice %8 {offsets = [56, 0], sizes = [56, 16], strides = [1, 1]} : vector<224x16xf32> to vector<56x16xf32>
    %11 = arith.maximumf %9, %10 : vector<56x16xf32>
    %12 = vector.extract_strided_slice %8 {offsets = [112, 0], sizes = [56, 16], strides = [1, 1]} : vector<224x16xf32> to vector<56x16xf32>
    %13 = vector.extract_strided_slice %8 {offsets = [168, 0], sizes = [56, 16], strides = [1, 1]} : vector<224x16xf32> to vector<56x16xf32>
    %14 = arith.maximumf %12, %13 : vector<56x16xf32>
    %15 = arith.maximumf %11, %14 : vector<56x16xf32>
    %c0_7 = arith.constant 0 : index
    %c0_8 = arith.constant 0 : index
    %16 = vector.load %arg4[%c0_7, %c0_8] : memref<56x16xf32, #tpu.memory_space<vmem>>, vector<56x16xf32>
    tpu.vector_store %arg4[%c0_7, %c0_8], %15 {strides = array<i32>} : memref<56x16xf32, #tpu.memory_space<vmem>>, vector<56x16xf32>,
    return
  }
  func.func @transform_0(%arg0: i32) -> (i32, i32, i32) {
    %c0_i32 = arith.constant 0 : i32
    %c0_i32_0 = arith.constant 0 : i32
    %c0_i32_1 = arith.constant 0 : i32
    return %c0_i32, %arg0, %c0_i32_0 : i32, i32, i32
  }
  func.func @transform_1(%arg0: i32) -> (i32, i32) {
    %c0_i32 = arith.constant 0 : i32
    %c0_i32_0 = arith.constant 0 : i32
    %c0_i32_1 = arith.constant 0 : i32
    return %c0_i32, %c0_i32_0 : i32, i32
  }
  func.func @transform_2(%arg0: i32) -> (i32, i32) {
    %c0_i32 = arith.constant 0 : i32
    %c0_i32_0 = arith.constant 0 : i32
    %c0_i32_1 = arith.constant 0 : i32
    return %c0_i32, %c0_i32_0 : i32, i32
  }
  func.func @transform_3(%arg0: i32) -> (i32, i32) {
    %c0_i32 = arith.constant 0 : i32
    %c0_i32_0 = arith.constant 0 : i32
    return %arg0, %c0_i32 : i32, i32
  }
}

module attributes {stable_mosaic.version = 11 : i64} {
  func.func @_mlp_kernel(%arg0: i32, %arg1: memref<8x400xf32, #tpu.memory_space<vmem>>, %arg2: memref<400x120xf32, #tpu.memory_space<vmem>>, %arg3: memref<1x120xf32, #tpu.memory_space<vmem>>, %arg4: memref<120x84xf32, #tpu.memory_space<vmem>>, %arg5: memref<1x84xf32, #tpu.memory_space<vmem>>, %arg6: memref<84x10xf32, #tpu.memory_space<vmem>>, %arg7: memref<1x10xf32, #tpu.memory_space<vmem>>, %arg8: memref<8x10xf32, #tpu.memory_space<vmem>>) attributes {dimension_semantics = [#tpu.dimension_semantics<parallel>], iteration_bounds = array<i64: 1>, scalar_prefetch = 0 : i64, scratch_operands = 0 : i64, tpu.core_type = #tpu.core_type<tc>, window_params = [{transform_indices = @transform_0, window_bounds = array<i64: 8, 400>}, {pipeline_mode = #tpu.pipeline_mode<synchronous>, transform_indices = @transform_1, window_bounds = array<i64: 400, 120>}, {pipeline_mode = #tpu.pipeline_mode<synchronous>, transform_indices = @transform_2, window_bounds = array<i64: 1, 120>}, {pipeline_mode = #tpu.pipeline_mode<synchronous>, transform_indices = @transform_3, window_bounds = array<i64: 120, 84>}, {pipeline_mode = #tpu.pipeline_mode<synchronous>, transform_indices = @transform_4, window_bounds = array<i64: 1, 84>}, {pipeline_mode = #tpu.pipeline_mode<synchronous>, transform_indices = @transform_5, window_bounds = array<i64: 84, 10>}, {pipeline_mode = #tpu.pipeline_mode<synchronous>, transform_indices = @transform_6, window_bounds = array<i64: 1, 10>}, {transform_indices = @transform_7, window_bounds = array<i64: 8, 10>}]} {
    %c0 = arith.constant 0 : index
    %c0_0 = arith.constant 0 : index
    %0 = vector.load %arg1[%c0, %c0_0] : memref<8x400xf32, #tpu.memory_space<vmem>>, vector<8x400xf32>
    %c0_1 = arith.constant 0 : index
    %c0_2 = arith.constant 0 : index
    %1 = vector.load %arg2[%c0_1, %c0_2] : memref<400x120xf32, #tpu.memory_space<vmem>>, vector<400x120xf32>
    %cst = arith.constant dense<0.000000e+00> : vector<8x120xf32>
    %2 = tpu.matmul %0, %1, %cst {dimension_numbers = #tpu.dot_dimension_numbers<[1], [0], [0], [1], [0, 0, 1, 1], [], []>} : vector<8x400xf32>, vector<400x120xf32>, vector<8x120xf32> -> vector<8x120xf32>
    %c0_3 = arith.constant 0 : index
    %c0_4 = arith.constant 0 : index
    %3 = vector.load %arg3[%c0_3, %c0_4] : memref<1x120xf32, #tpu.memory_space<vmem>>, vector<1x120xf32>
    %4 = vector.broadcast %3 : vector<1x120xf32> to vector<8x120xf32>
    %5 = arith.addf %2, %4 : vector<8x120xf32>
    %cst_5 = arith.constant 0.000000e+00 : f32
    %6 = vector.broadcast %cst_5 : f32 to vector<8x120xf32>
    %7 = arith.maximumf %5, %6 : vector<8x120xf32>
    %c0_6 = arith.constant 0 : index
    %c0_7 = arith.constant 0 : index
    %8 = vector.load %arg4[%c0_6, %c0_7] : memref<120x84xf32, #tpu.memory_space<vmem>>, vector<120x84xf32>
    %cst_8 = arith.constant dense<0.000000e+00> : vector<8x84xf32>
    %9 = tpu.matmul %7, %8, %cst_8 {dimension_numbers = #tpu.dot_dimension_numbers<[1], [0], [0], [1], [0, 0, 1, 1], [], []>} : vector<8x120xf32>, vector<120x84xf32>, vector<8x84xf32> -> vector<8x84xf32>
    %c0_9 = arith.constant 0 : index
    %c0_10 = arith.constant 0 : index
    %10 = vector.load %arg5[%c0_9, %c0_10] : memref<1x84xf32, #tpu.memory_space<vmem>>, vector<1x84xf32>
    %11 = vector.broadcast %10 : vector<1x84xf32> to vector<8x84xf32>
    %12 = arith.addf %9, %11 : vector<8x84xf32>
    %cst_11 = arith.constant 0.000000e+00 : f32
    %13 = vector.broadcast %cst_11 : f32 to vector<8x84xf32>
    %14 = arith.maximumf %12, %13 : vector<8x84xf32>
    %c0_12 = arith.constant 0 : index
    %c0_13 = arith.constant 0 : index
    %15 = vector.load %arg6[%c0_12, %c0_13] : memref<84x10xf32, #tpu.memory_space<vmem>>, vector<84x10xf32>
    %cst_14 = arith.constant dense<0.000000e+00> : vector<8x10xf32>
    %16 = tpu.matmul %14, %15, %cst_14 {dimension_numbers = #tpu.dot_dimension_numbers<[1], [0], [0], [1], [0, 0, 1, 1], [], []>} : vector<8x84xf32>, vector<84x10xf32>, vector<8x10xf32> -> vector<8x10xf32>
    %c0_15 = arith.constant 0 : index
    %c0_16 = arith.constant 0 : index
    %17 = vector.load %arg7[%c0_15, %c0_16] : memref<1x10xf32, #tpu.memory_space<vmem>>, vector<1x10xf32>
    %18 = vector.broadcast %17 : vector<1x10xf32> to vector<8x10xf32>
    %19 = arith.addf %16, %18 : vector<8x10xf32>
    %c0_17 = arith.constant 0 : index
    %c0_18 = arith.constant 0 : index
    %20 = vector.load %arg8[%c0_17, %c0_18] : memref<8x10xf32, #tpu.memory_space<vmem>>, vector<8x10xf32>
    tpu.vector_store %arg8[%c0_17, %c0_18], %19 {strides = array<i32>} : memref<8x10xf32, #tpu.memory_space<vmem>>, vector<8x10xf32>,
    return
  }
  func.func @transform_0(%arg0: i32) -> (i32, i32) {
    %c0_i32 = arith.constant 0 : i32
    %c0_i32_0 = arith.constant 0 : i32
    return %arg0, %c0_i32 : i32, i32
  }
  func.func @transform_1(%arg0: i32) -> (i32, i32) {
    %c0_i32 = arith.constant 0 : i32
    %c0_i32_0 = arith.constant 0 : i32
    %c0_i32_1 = arith.constant 0 : i32
    return %c0_i32, %c0_i32_0 : i32, i32
  }
  func.func @transform_2(%arg0: i32) -> (i32, i32) {
    %c0_i32 = arith.constant 0 : i32
    %c0_i32_0 = arith.constant 0 : i32
    %c0_i32_1 = arith.constant 0 : i32
    return %c0_i32, %c0_i32_0 : i32, i32
  }
  func.func @transform_3(%arg0: i32) -> (i32, i32) {
    %c0_i32 = arith.constant 0 : i32
    %c0_i32_0 = arith.constant 0 : i32
    %c0_i32_1 = arith.constant 0 : i32
    return %c0_i32, %c0_i32_0 : i32, i32
  }
  func.func @transform_4(%arg0: i32) -> (i32, i32) {
    %c0_i32 = arith.constant 0 : i32
    %c0_i32_0 = arith.constant 0 : i32
    %c0_i32_1 = arith.constant 0 : i32
    return %c0_i32, %c0_i32_0 : i32, i32
  }
  func.func @transform_5(%arg0: i32) -> (i32, i32) {
    %c0_i32 = arith.constant 0 : i32
    %c0_i32_0 = arith.constant 0 : i32
    %c0_i32_1 = arith.constant 0 : i32
    return %c0_i32, %c0_i32_0 : i32, i32
  }
  func.func @transform_6(%arg0: i32) -> (i32, i32) {
    %c0_i32 = arith.constant 0 : i32
    %c0_i32_0 = arith.constant 0 : i32
    %c0_i32_1 = arith.constant 0 : i32
    return %c0_i32, %c0_i32_0 : i32, i32
  }
  func.func @transform_7(%arg0: i32) -> (i32, i32) {
    %c0_i32 = arith.constant 0 : i32
    %c0_i32_0 = arith.constant 0 : i32
    return %arg0, %c0_i32 : i32, i32
  }
}

</mosaic_0001>

<llo_original>
// kernel: cnn_forward.3
$region0: #{cnn_forward.3}
  #allocation0 [shape = 'u32[]', space=smem, size = 0x4, offset = 0x4, fixed_abs, tag = 'smem constant byte address 0x4 - core index']
  #allocation1 [shape = 'u32[144,128]{1,0:T(1,128)}', space=vmem, size = 0x12000, scoped, tag = 'internal scratch']
  %s0 = inlined_call_operand.vmem [shape: f32[4,392,75], index: 0, kind: input, shape index: {}]
  %s1 = inlined_call_operand.vmem [shape: f32[75,6], index: 1, kind: input, shape index: {}]
  %s2 = inlined_call_operand.vmem [shape: f32[1,6], index: 2, kind: input, shape index: {}]
  %s3 = inlined_call_operand.vmem [shape: f32[392,6], index: 3, kind: output, shape index: {}]
  %s4 = sld [smem:[#allocation0]]
  $region22: #{cnn_forward.3} parent=0
    _
  %s6 = ssub.s32 1, %s4
  %s7 = scalar_select 0, %s6, %s4
  // Predicated region
  $region2: #{cnn_forward.3} parent=0 // pred_check
    _
  $region3: #{cnn_forward.3} parent=0 // pred_check_branch
    %9 = sbr.rel (0) target = $region5
  $region4: #{cnn_forward.3} parent=0 // pred_region
    _
  $region5: #{cnn_forward.3} parent=0 // pred_fallthru
    _
  // Predicated region
  $region6: #{cnn_forward.3} parent=0 // pred_check
    _
  $region7: #{cnn_forward.3} parent=0 // pred_check_branch
    %11 = sbr.rel (0) target = $region9
  $region8: #{cnn_forward.3} parent=0 // pred_region
    _
  $region9: #{cnn_forward.3} parent=0 // pred_fallthru
    _
  // Predicated region
  $region10: #{cnn_forward.3} parent=0 // pred_check
    _
  $region11: #{cnn_forward.3} parent=0 // pred_check_branch
    %13 = sbr.rel (0) target = $region13
  $region12: #{cnn_forward.3} parent=0 // pred_region
    _
  $region13: #{cnn_forward.3} parent=0 // pred_fallthru
    _
  %v14 = vld [vmem:[%s0] sm:$0xff]
  %v15 = vld [vmem:[%s0 + $0x8] sm:$0xff]
  %v16 = vld [vmem:[%s0 + $0x10] sm:$0xff]
  %v17 = vld [vmem:[%s0 + $0x18] sm:$0xff]
  %v18 = vld [vmem:[%s0 + $0x20] sm:$0xff]
  %v19 = vld [vmem:[%s0 + $0x28] sm:$0xff]
  %v20 = vld [vmem:[%s0 + $0x30] sm:$0xff]
  %v21 = vld [vmem:[%s0 + $0x38] sm:$0xff]
  %v22 = vld [vmem:[%s0 + $0x40] sm:$0xff]
  %v23 = vld [vmem:[%s0 + $0x48] sm:$0xff]
  %v24 = vld [vmem:[%s0 + $0x50] sm:$0xff]
  %v25 = vld [vmem:[%s0 + $0x58] sm:$0xff]
  %v26 = vld [vmem:[%s0 + $0x60] sm:$0xff]
  %v27 = vld [vmem:[%s0 + $0x68] sm:$0xff]
  %v28 = vld [vmem:[%s0 + $0x70] sm:$0xff]
  %v29 = vld [vmem:[%s0 + $0x78] sm:$0xff]
  %v30 = vld [vmem:[%s0 + $0x80] sm:$0xff]
  %v31 = vld [vmem:[%s0 + $0x88] sm:$0xff]
  %v32 = vld [vmem:[%s0 + $0x90] sm:$0xff]
  %v33 = vld [vmem:[%s0 + $0x98] sm:$0xff]
  %v34 = vld [vmem:[%s0 + $0xa0] sm:$0xff]
  %v35 = vld [vmem:[%s0 + $0xa8] sm:$0xff]
  %v36 = vld [vmem:[%s0 + $0xb0] sm:$0xff]
  %v37 = vld [vmem:[%s0 + $0xb8] sm:$0xff]
  %v38 = vld [vmem:[%s0 + $0xc0] sm:$0xff]
  %v39 = vld [vmem:[%s0 + $0xc8] sm:$0xff]
  %v40 = vld [vmem:[%s0 + $0xd0] sm:$0xff]
  %v41 = vld [vmem:[%s0 + $0xd8] sm:$0xff]
  %v42 = vld [vmem:[%s0 + $0xe0] sm:$0xff]
  %v43 = vld [vmem:[%s0 + $0xe8] sm:$0xff]
  %v44 = vld [vmem:[%s0 + $0xf0] sm:$0xff]
  %v45 = vld [vmem:[%s0 + $0xf8] sm:$0xff]
  %v46 = vld [vmem:[%s0 + $0x100] sm:$0xff]
  %v47 = vld [vmem:[%s0 + $0x108] sm:$0xff]
  %v48 = vld [vmem:[%s0 + $0x110] sm:$0xff]
  %v49 = vld [vmem:[%s0 + $0x118] sm:$0xff]
  %v50 = vld [vmem:[%s0 + $0x120] sm:$0xff]
  %v51 = vld [vmem:[%s0 + $0x128] sm:$0xff]
  %v52 = vld [vmem:[%s0 + $0x130] sm:$0xff]
  %v53 = vld [vmem:[%s0 + $0x138] sm:$0xff]
  %v54 = vld [vmem:[%s0 + $0x140] sm:$0xff]
  %v55 = vld [vmem:[%s0 + $0x148] sm:$0xff]
  %v56 = vld [vmem:[%s0 + $0x150] sm:$0xff]
  %v57 = vld [vmem:[%s0 + $0x158] sm:$0xff]
  %v58 = vld [vmem:[%s0 + $0x160] sm:$0xff]
  %v59 = vld [vmem:[%s0 + $0x168] sm:$0xff]
  %v60 = vld [vmem:[%s0 + $0x170] sm:$0xff]
  %v61 = vld [vmem:[%s0 + $0x178] sm:$0xff]
  %v62 = vld [vmem:[%s0 + $0x180] sm:$0xff]
  %v63 = vld [vmem:[%s0 + $0x188] sm:$0xff]
  %v64 = vld [vmem:[%s0 + $0x190] sm:$0xff]
  %v65 = vld [vmem:[%s0 + $0x198] sm:$0xff]
  %v66 = vld [vmem:[%s0 + $0x1a0] sm:$0xff]
  %v67 = vld [vmem:[%s0 + $0x1a8] sm:$0xff]
  %v68 = vld [vmem:[%s0 + $0x1b0] sm:$0xff]
  %v69 = vld [vmem:[%s0 + $0x1b8] sm:$0xff]
  %v70 = vld [vmem:[%s0 + $0x1c0] sm:$0xff]
  %v71 = vld [vmem:[%s0 + $0x1c8] sm:$0xff]
  %v72 = vld [vmem:[%s0 + $0x1d0] sm:$0xff]
  %v73 = vld [vmem:[%s0 + $0x1d8] sm:$0xff]
  %v74 = vld [vmem:[%s0 + $0x1e0] sm:$0xff]
  %v75 = vld [vmem:[%s0 + $0x1e8] sm:$0xff]
  %v76 = vld [vmem:[%s0 + $0x1f0] sm:$0xff]
  %v77 = vld [vmem:[%s0 + $0x1f8] sm:$0xff]
  %v78 = vld [vmem:[%s0 + $0x200] sm:$0xff]
  %v79 = vld [vmem:[%s0 + $0x208] sm:$0xff]
  %v80 = vld [vmem:[%s0 + $0x210] sm:$0xff]
  %v81 = vld [vmem:[%s0 + $0x218] sm:$0xff]
  %v82 = vld [vmem:[%s0 + $0x220] sm:$0xff]
  %v83 = vld [vmem:[%s0 + $0x228] sm:$0xff]
  %v84 = vld [vmem:[%s0 + $0x230] sm:$0xff]
  %v85 = vld [vmem:[%s0 + $0x238] sm:$0xff]
  %v86 = vld [vmem:[%s0 + $0x240] sm:$0xff]
  %v87 = vld [vmem:[%s0 + $0x248] sm:$0xff]
  %v88 = vld [vmem:[%s0 + $0x250] sm:$0xff]
  %v89 = vld [vmem:[%s0 + $0x258] sm:$0xff]
  %v90 = vld [vmem:[%s0 + $0x260] sm:$0xff]
  %v91 = vld [vmem:[%s0 + $0x268] sm:$0xff]
  %v92 = vld [vmem:[%s0 + $0x270] sm:$0xff]
  %v93 = vld [vmem:[%s0 + $0x278] sm:$0xff]
  %v94 = vld [vmem:[%s0 + $0x280] sm:$0xff]
  %v95 = vld [vmem:[%s0 + $0x288] sm:$0xff]
  %v96 = vld [vmem:[%s0 + $0x290] sm:$0xff]
  %v97 = vld [vmem:[%s0 + $0x298] sm:$0xff]
  %v98 = vld [vmem:[%s0 + $0x2a0] sm:$0xff]
  %v99 = vld [vmem:[%s0 + $0x2a8] sm:$0xff]
  %v100 = vld [vmem:[%s0 + $0x2b0] sm:$0xff]
  %v101 = vld [vmem:[%s0 + $0x2b8] sm:$0xff]
  %v102 = vld [vmem:[%s0 + $0x2c0] sm:$0xff]
  %v103 = vld [vmem:[%s0 + $0x2c8] sm:$0xff]
  %v104 = vld [vmem:[%s0 + $0x2d0] sm:$0xff]
  %v105 = vld [vmem:[%s0 + $0x2d8] sm:$0xff]
  %v106 = vld [vmem:[%s0 + $0x2e0] sm:$0xff]
  %v107 = vld [vmem:[%s0 + $0x2e8] sm:$0xff]
  %v108 = vld [vmem:[%s0 + $0x2f0] sm:$0xff]
  %v109 = vld [vmem:[%s0 + $0x2f8] sm:$0xff]
  %v110 = vld [vmem:[%s0 + $0x300] sm:$0xff]
  %v111 = vld [vmem:[%s0 + $0x308] sm:$0xff]
  %v112 = vld [vmem:[%s0 + $0x310] sm:$0xff]
  %v113 = vld [vmem:[%s0 + $0x318] sm:$0xff]
  %v114 = vld [vmem:[%s0 + $0x320] sm:$0xff]
  %v115 = vld [vmem:[%s0 + $0x328] sm:$0xff]
  %v116 = vld [vmem:[%s0 + $0x330] sm:$0xff]
  %v117 = vld [vmem:[%s0 + $0x338] sm:$0xff]
  %v118 = vld [vmem:[%s0 + $0x340] sm:$0xff]
  %v119 = vld [vmem:[%s0 + $0x348] sm:$0xff]
  %v120 = vld [vmem:[%s0 + $0x350] sm:$0xff]
  %v121 = vld [vmem:[%s0 + $0x358] sm:$0xff]
  %v122 = vld [vmem:[%s0 + $0x360] sm:$0xff]
  %v123 = vld [vmem:[%s0 + $0x368] sm:$0xff]
  %v124 = vld [vmem:[%s0 + $0x370] sm:$0xff]
  %v125 = vld [vmem:[%s0 + $0x378] sm:$0xff]
  %v126 = vld [vmem:[%s0 + $0x380] sm:$0xff]
  %v127 = vld [vmem:[%s0 + $0x388] sm:$0xff]
  %v128 = vld [vmem:[%s0 + $0x390] sm:$0xff]
  %v129 = vld [vmem:[%s0 + $0x398] sm:$0xff]
  %v130 = vld [vmem:[%s0 + $0x3a0] sm:$0xff]
  %v131 = vld [vmem:[%s0 + $0x3a8] sm:$0xff]
  %v132 = vld [vmem:[%s0 + $0x3b0] sm:$0xff]
  %v133 = vld [vmem:[%s0 + $0x3b8] sm:$0xff]
  %v134 = vld [vmem:[%s0 + $0x3c0] sm:$0xff]
  %v135 = vld [vmem:[%s0 + $0x3c8] sm:$0xff]
  %v136 = vld [vmem:[%s0 + $0x3d0] sm:$0xff]
  %v137 = vld [vmem:[%s0 + $0x3d8] sm:$0xff]
  %v138 = vld [vmem:[%s0 + $0x3e0] sm:$0xff]
  %v139 = vld [vmem:[%s0 + $0x3e8] sm:$0xff]
  %v140 = vld [vmem:[%s0 + $0x3f0] sm:$0xff]
  %v141 = vld [vmem:[%s0 + $0x3f8] sm:$0xff]
  %v142 = vld [vmem:[%s0 + $0x400] sm:$0xff]
  %v143 = vld [vmem:[%s0 + $0x408] sm:$0xff]
  %v144 = vld [vmem:[%s0 + $0x410] sm:$0xff]
  %v145 = vld [vmem:[%s0 + $0x418] sm:$0xff]
  %v146 = vld [vmem:[%s0 + $0x420] sm:$0xff]
  %v147 = vld [vmem:[%s0 + $0x428] sm:$0xff]
  %v148 = vld [vmem:[%s0 + $0x430] sm:$0xff]
  %v149 = vld [vmem:[%s0 + $0x438] sm:$0xff]
  %v150 = vld [vmem:[%s0 + $0x440] sm:$0xff]
  %v151 = vld [vmem:[%s0 + $0x448] sm:$0xff]
  %v152 = vld [vmem:[%s0 + $0x450] sm:$0xff]
  %v153 = vld [vmem:[%s0 + $0x458] sm:$0xff]
  %v154 = vld [vmem:[%s0 + $0x460] sm:$0xff]
  %v155 = vld [vmem:[%s0 + $0x468] sm:$0xff]
  %v156 = vld [vmem:[%s0 + $0x470] sm:$0xff]
  %v157 = vld [vmem:[%s0 + $0x478] sm:$0xff]
  %v158 = vld [vmem:[%s0 + $0x480] sm:$0xff]
  %v159 = vld [vmem:[%s0 + $0x488] sm:$0xff]
  %v160 = vld [vmem:[%s0 + $0x490] sm:$0xff]
  %v161 = vld [vmem:[%s0 + $0x498] sm:$0xff]
  %v162 = vld [vmem:[%s0 + $0x4a0] sm:$0xff]
  %v163 = vld [vmem:[%s0 + $0x4a8] sm:$0xff]
  %v164 = vld [vmem:[%s0 + $0x4b0] sm:$0xff]
  %v165 = vld [vmem:[%s0 + $0x4b8] sm:$0xff]
  %v166 = vld [vmem:[%s0 + $0x4c0] sm:$0xff]
  %v167 = vld [vmem:[%s0 + $0x4c8] sm:$0xff]
  %v168 = vld [vmem:[%s0 + $0x4d0] sm:$0xff]
  %v169 = vld [vmem:[%s0 + $0x4d8] sm:$0xff]
  %v170 = vld [vmem:[%s0 + $0x4e0] sm:$0xff]
  %v171 = vld [vmem:[%s0 + $0x4e8] sm:$0xff]
  %v172 = vld [vmem:[%s0 + $0x4f0] sm:$0xff]
  %v173 = vld [vmem:[%s0 + $0x4f8] sm:$0xff]
  %v174 = vld [vmem:[%s0 + $0x500] sm:$0xff]
  %v175 = vld [vmem:[%s0 + $0x508] sm:$0xff]
  %v176 = vld [vmem:[%s0 + $0x510] sm:$0xff]
  %v177 = vld [vmem:[%s0 + $0x518] sm:$0xff]
  %v178 = vld [vmem:[%s0 + $0x520] sm:$0xff]
  %v179 = vld [vmem:[%s0 + $0x528] sm:$0xff]
  %v180 = vld [vmem:[%s0 + $0x530] sm:$0xff]
  %v181 = vld [vmem:[%s0 + $0x538] sm:$0xff]
  %v182 = vld [vmem:[%s0 + $0x540] sm:$0xff]
  %v183 = vld [vmem:[%s0 + $0x548] sm:$0xff]
  %v184 = vld [vmem:[%s0 + $0x550] sm:$0xff]
  %v185 = vld [vmem:[%s0 + $0x558] sm:$0xff]
  %v186 = vld [vmem:[%s0 + $0x560] sm:$0xff]
  %v187 = vld [vmem:[%s0 + $0x568] sm:$0xff]
  %v188 = vld [vmem:[%s0 + $0x570] sm:$0xff]
  %v189 = vld [vmem:[%s0 + $0x578] sm:$0xff]
  %v190 = vld [vmem:[%s0 + $0x580] sm:$0xff]
  %v191 = vld [vmem:[%s0 + $0x588] sm:$0xff]
  %v192 = vld [vmem:[%s0 + $0x590] sm:$0xff]
  %v193 = vld [vmem:[%s0 + $0x598] sm:$0xff]
  %v194 = vld [vmem:[%s0 + $0x5a0] sm:$0xff]
  %v195 = vld [vmem:[%s0 + $0x5a8] sm:$0xff]
  %v196 = vld [vmem:[%s0 + $0x5b0] sm:$0xff]
  %v197 = vld [vmem:[%s0 + $0x5b8] sm:$0xff]
  %v198 = vld [vmem:[%s0 + $0x5c0] sm:$0xff]
  %v199 = vld [vmem:[%s0 + $0x5c8] sm:$0xff]
  %v200 = vld [vmem:[%s0 + $0x5d0] sm:$0xff]
  %v201 = vld [vmem:[%s0 + $0x5d8] sm:$0xff]
  %v202 = vld [vmem:[%s0 + $0x5e0] sm:$0xff]
  %v203 = vld [vmem:[%s0 + $0x5e8] sm:$0xff]
  %v204 = vld [vmem:[%s0 + $0x5f0] sm:$0xff]
  %v205 = vld [vmem:[%s0 + $0x5f8] sm:$0xff]
  %v206 = vld [vmem:[%s0 + $0x600] sm:$0xff]
  %v207 = vld [vmem:[%s0 + $0x608] sm:$0xff]
  %v208 = vld [vmem:[%s0 + $0x610] sm:$0xff]
  %v209 = vld [vmem:[%s0 + $0x618] sm:$0xff]
  %v210 = vld [vmem:[%s1] sm:$0xff]
  %v211 = vld [vmem:[%s1 + $0x8] sm:$0xff]
  %v212 = vld [vmem:[%s1 + $0x10] sm:$0xff]
  %v213 = vld [vmem:[%s1 + $0x18] sm:$0xff]
  %v214 = vld [vmem:[%s1 + $0x20] sm:$0xff]
  %v215 = vld [vmem:[%s1 + $0x28] sm:$0xff]
  %v216 = vld [vmem:[%s1 + $0x30] sm:$0xff]
  %v217 = vld [vmem:[%s1 + $0x38] sm:$0xff]
  %v218 = vld [vmem:[%s1 + $0x40] sm:$0xff]
  %v219 = vld [vmem:[%s1 + $0x48] sm:$0x7]
  %v220 = vld [vmem:[%s2] sm:$0x1]
  %v222 = vlaneseq
  %v223 = vshrl.u32 %v222, 7
  %v224 = vsub.s32 0, %v223
  %v225 = vrot.slane %v220, %v224
  %vm227 = vcmask 613376
  %v229 = vsel %vm227, %v14, 0
  %v232 = vsel %vm227, %v15, 0
  %v235 = vsel %vm227, %v16, 0
  %v238 = vsel %vm227, %v17, 0
  %v241 = vsel %vm227, %v18, 0
  %v244 = vsel %vm227, %v19, 0
  %v247 = vsel %vm227, %v20, 0
  %v250 = vsel %vm227, %v21, 0
  %v253 = vsel %vm227, %v22, 0
  %v256 = vsel %vm227, %v23, 0
  %v259 = vsel %vm227, %v24, 0
  %v262 = vsel %vm227, %v25, 0
  %v265 = vsel %vm227, %v26, 0
  %v268 = vsel %vm227, %v27, 0
  %v271 = vsel %vm227, %v28, 0
  %v274 = vsel %vm227, %v29, 0
  %v277 = vsel %vm227, %v30, 0
  %v280 = vsel %vm227, %v31, 0
  %v283 = vsel %vm227, %v32, 0
  %v286 = vsel %vm227, %v33, 0
  %v289 = vsel %vm227, %v34, 0
  %v292 = vsel %vm227, %v35, 0
  %v295 = vsel %vm227, %v36, 0
  %v298 = vsel %vm227, %v37, 0
  %v301 = vsel %vm227, %v38, 0
  %v304 = vsel %vm227, %v39, 0
  %v307 = vsel %vm227, %v40, 0
  %v310 = vsel %vm227, %v41, 0
  %v313 = vsel %vm227, %v42, 0
  %v316 = vsel %vm227, %v43, 0
  %v319 = vsel %vm227, %v44, 0
  %v322 = vsel %vm227, %v45, 0
  %v325 = vsel %vm227, %v46, 0
  %v328 = vsel %vm227, %v47, 0
  %v331 = vsel %vm227, %v48, 0
  %v334 = vsel %vm227, %v49, 0
  %v337 = vsel %vm227, %v50, 0
  %v340 = vsel %vm227, %v51, 0
  %v343 = vsel %vm227, %v52, 0
  %v346 = vsel %vm227, %v53, 0
  %v349 = vsel %vm227, %v54, 0
  %v352 = vsel %vm227, %v55, 0
  %v355 = vsel %vm227, %v56, 0
  %v358 = vsel %vm227, %v57, 0
  %v361 = vsel %vm227, %v58, 0
  %v364 = vsel %vm227, %v59, 0
  %v367 = vsel %vm227, %v60, 0
  %v370 = vsel %vm227, %v61, 0
  %v373 = vsel %vm227, %v62, 0
  %v376 = vsel %vm227, %v63, 0
  %v379 = vsel %vm227, %v64, 0
  %v382 = vsel %vm227, %v65, 0
  %v385 = vsel %vm227, %v66, 0
  %v388 = vsel %vm227, %v67, 0
  %v391 = vsel %vm227, %v68, 0
  %v394 = vsel %vm227, %v69, 0
  %v397 = vsel %vm227, %v70, 0
  %v400 = vsel %vm227, %v71, 0
  %v403 = vsel %vm227, %v72, 0
  %v406 = vsel %vm227, %v73, 0
  %v409 = vsel %vm227, %v74, 0
  %v412 = vsel %vm227, %v75, 0
  %v415 = vsel %vm227, %v76, 0
  %v418 = vsel %vm227, %v77, 0
  %v421 = vsel %vm227, %v78, 0
  %v424 = vsel %vm227, %v79, 0
  %v427 = vsel %vm227, %v80, 0
  %v430 = vsel %vm227, %v81, 0
  %v433 = vsel %vm227, %v82, 0
  %v436 = vsel %vm227, %v83, 0
  %v439 = vsel %vm227, %v84, 0
  %v442 = vsel %vm227, %v85, 0
  %v445 = vsel %vm227, %v86, 0
  %v448 = vsel %vm227, %v87, 0
  %v451 = vsel %vm227, %v88, 0
  %v454 = vsel %vm227, %v89, 0
  %v457 = vsel %vm227, %v90, 0
  %v460 = vsel %vm227, %v91, 0
  %v463 = vsel %vm227, %v92, 0
  %v466 = vsel %vm227, %v93, 0
  %v469 = vsel %vm227, %v94, 0
  %v472 = vsel %vm227, %v95, 0
  %v475 = vsel %vm227, %v96, 0
  %v478 = vsel %vm227, %v97, 0
  %v481 = vsel %vm227, %v98, 0
  %v484 = vsel %vm227, %v99, 0
  %v487 = vsel %vm227, %v100, 0
  %v490 = vsel %vm227, %v101, 0
  %v493 = vsel %vm227, %v102, 0
  %v496 = vsel %vm227, %v103, 0
  %v499 = vsel %vm227, %v104, 0
  %v502 = vsel %vm227, %v105, 0
  %v505 = vsel %vm227, %v106, 0
  %v508 = vsel %vm227, %v107, 0
  %v511 = vsel %vm227, %v108, 0
  %v514 = vsel %vm227, %v109, 0
  %v517 = vsel %vm227, %v110, 0
  %v520 = vsel %vm227, %v111, 0
  %v523 = vsel %vm227, %v112, 0
  %v526 = vsel %vm227, %v113, 0
  %v529 = vsel %vm227, %v114, 0
  %v532 = vsel %vm227, %v115, 0
  %v535 = vsel %vm227, %v116, 0
  %v538 = vsel %vm227, %v117, 0
  %v541 = vsel %vm227, %v118, 0
  %v544 = vsel %vm227, %v119, 0
  %v547 = vsel %vm227, %v120, 0
  %v550 = vsel %vm227, %v121, 0
  %v553 = vsel %vm227, %v122, 0
  %v556 = vsel %vm227, %v123, 0
  %v559 = vsel %vm227, %v124, 0
  %v562 = vsel %vm227, %v125, 0
  %v565 = vsel %vm227, %v126, 0
  %v568 = vsel %vm227, %v127, 0
  %v571 = vsel %vm227, %v128, 0
  %v574 = vsel %vm227, %v129, 0
  %v577 = vsel %vm227, %v130, 0
  %v580 = vsel %vm227, %v131, 0
  %v583 = vsel %vm227, %v132, 0
  %v586 = vsel %vm227, %v133, 0
  %v589 = vsel %vm227, %v134, 0
  %v592 = vsel %vm227, %v135, 0
  %v595 = vsel %vm227, %v136, 0
  %v598 = vsel %vm227, %v137, 0
  %v601 = vsel %vm227, %v138, 0
  %v604 = vsel %vm227, %v139, 0
  %v607 = vsel %vm227, %v140, 0
  %v610 = vsel %vm227, %v141, 0
  %v613 = vsel %vm227, %v142, 0
  %v616 = vsel %vm227, %v143, 0
  %v619 = vsel %vm227, %v144, 0
  %v622 = vsel %vm227, %v145, 0
  %v625 = vsel %vm227, %v146, 0
  %v628 = vsel %vm227, %v147, 0
  %v631 = vsel %vm227, %v148, 0
  %v634 = vsel %vm227, %v149, 0
  %v637 = vsel %vm227, %v150, 0
  %v640 = vsel %vm227, %v151, 0
  %v643 = vsel %vm227, %v152, 0
  %v646 = vsel %vm227, %v153, 0
  %v649 = vsel %vm227, %v154, 0
  %v652 = vsel %vm227, %v155, 0
  %v655 = vsel %vm227, %v156, 0
  %v658 = vsel %vm227, %v157, 0
  %v661 = vsel %vm227, %v158, 0
  %v664 = vsel %vm227, %v159, 0
  %v667 = vsel %vm227, %v160, 0
  %v670 = vsel %vm227, %v161, 0
  %v673 = vsel %vm227, %v162, 0
  %v676 = vsel %vm227, %v163, 0
  %v679 = vsel %vm227, %v164, 0
  %v682 = vsel %vm227, %v165, 0
  %v685 = vsel %vm227, %v166, 0
  %v688 = vsel %vm227, %v167, 0
  %v691 = vsel %vm227, %v168, 0
  %v694 = vsel %vm227, %v169, 0
  %v697 = vsel %vm227, %v170, 0
  %v700 = vsel %vm227, %v171, 0
  %v703 = vsel %vm227, %v172, 0
  %v706 = vsel %vm227, %v173, 0
  %v709 = vsel %vm227, %v174, 0
  %v712 = vsel %vm227, %v175, 0
  %v715 = vsel %vm227, %v176, 0
  %v718 = vsel %vm227, %v177, 0
  %v721 = vsel %vm227, %v178, 0
  %v724 = vsel %vm227, %v179, 0
  %v727 = vsel %vm227, %v180, 0
  %v730 = vsel %vm227, %v181, 0
  %v733 = vsel %vm227, %v182, 0
  %v736 = vsel %vm227, %v183, 0
  %v739 = vsel %vm227, %v184, 0
  %v742 = vsel %vm227, %v185, 0
  %v745 = vsel %vm227, %v186, 0
  %v748 = vsel %vm227, %v187, 0
  %v751 = vsel %vm227, %v188, 0
  %v754 = vsel %vm227, %v189, 0
  %v757 = vsel %vm227, %v190, 0
  %v760 = vsel %vm227, %v191, 0
  %v763 = vsel %vm227, %v192, 0
  %v766 = vsel %vm227, %v193, 0
  %v769 = vsel %vm227, %v194, 0
  %v772 = vsel %vm227, %v195, 0
  %v775 = vsel %vm227, %v196, 0
  %v778 = vsel %vm227, %v197, 0
  %v781 = vsel %vm227, %v198, 0
  %v784 = vsel %vm227, %v199, 0
  %v787 = vsel %vm227, %v200, 0
  %v790 = vsel %vm227, %v201, 0
  %v793 = vsel %vm227, %v202, 0
  %v796 = vsel %vm227, %v203, 0
  %v799 = vsel %vm227, %v204, 0
  %v802 = vsel %vm227, %v205, 0
  %v805 = vsel %vm227, %v206, 0
  %v808 = vsel %vm227, %v207, 0
  %v811 = vsel %vm227, %v208, 0
  %v814 = vsel %vm227, %v209, 0
  %vm816 = vcmask 1042432
  %v818 = vsel %vm816, %v219, 0
  %820 = vmatprep.subr.mxu0 0.0
  %821 = vmatpush1.msra.mxu0 0.0
  %822 = vmatprep.subr.mxu0 0.0
  %823 = vmatpush1.msra.mxu0 0.0
  %824 = vmatprep.subr.mxu0 0.0
  %825 = vmatpush1.msra.mxu0 0.0
  %826 = vmatprep.subr.mxu0 0.0
  %827 = vmatpush1.msra.mxu0 0.0
  %828 = vmatprep.subr.mxu0 0.0
  %829 = vmatpush1.msra.mxu0 0.0
  %830 = vmatprep.subr.mxu0 0.0
  %831 = vmatpush1.msra.mxu0 0.0
  %832 = vmatprep.subr.mxu0 0.0
  %833 = vmatpush1.msra.mxu0 %v818
  %834 = vmatprep.subr.mxu0 0.0
  %835 = vmatpush1.msra.mxu0 %v218
  %836 = vmatprep.subr.mxu0 0.0
  %837 = vmatpush1.msra.mxu0 %v217
  %838 = vmatprep.subr.mxu0 0.0
  %839 = vmatpush1.msra.mxu0 %v216
  %840 = vmatprep.subr.mxu0 0.0
  %841 = vmatpush1.msra.mxu0 %v215
  %842 = vmatprep.subr.mxu0 0.0
  %843 = vmatpush1.msra.mxu0 %v214
  %844 = vmatprep.subr.mxu0 0.0
  %845 = vmatpush1.msra.mxu0 %v213
  %846 = vmatprep.subr.mxu0 0.0
  %847 = vmatpush1.msra.mxu0 %v212
  %848 = vmatprep.subr.mxu0 0.0
  %849 = vmatpush1.msra.mxu0 %v211
  %850 = vmatprep.subr.mxu0 0.0
  %851 = vmatpush1.msra.mxu0 %v210
  %852 = vmatprep.subr.mxu0 0.0
  %853 = vmatpush2.msra.mxu0 0.0
  %854 = vmatprep.subr.mxu0 0.0
  %855 = vmatpush2.msra.mxu0 0.0
  %856 = vmatprep.subr.mxu0 0.0
  %857 = vmatpush2.msra.mxu0 0.0
  %858 = vmatprep.subr.mxu0 0.0
  %859 = vmatpush2.msra.mxu0 0.0
  %860 = vmatprep.subr.mxu0 0.0
  %861 = vmatpush2.msra.mxu0 0.0
  %862 = vmatprep.subr.mxu0 0.0
  %863 = vmatpush2.msra.mxu0 0.0
  %864 = vmatprep.subr.mxu0 0.0
  %865 = vmatpush2.msra.mxu0 0.0
  %866 = vmatprep.subr.mxu0 0.0
  %867 = vmatpush2.msra.mxu0 0.0
  %868 = vmatprep.subr.mxu0 0.0
  %869 = vmatpush2.msra.mxu0 0.0
  %870 = vmatprep.subr.mxu0 0.0
  %871 = vmatpush2.msra.mxu0 0.0
  %872 = vmatprep.subr.mxu0 0.0
  %873 = vmatpush2.msra.mxu0 0.0
  %874 = vmatprep.subr.mxu0 0.0
  %875 = vmatpush2.msra.mxu0 0.0
  %876 = vmatprep.subr.mxu0 0.0
  %877 = vmatpush2.msra.mxu0 0.0
  %878 = vmatprep.subr.mxu0 0.0
  %879 = vmatpush2.msra.mxu0 0.0
  %880 = vmatprep.subr.mxu0 0.0
  %881 = vmatpush2.msra.mxu0 0.0
  %882 = vmatprep.subr.mxu0 0.0
  %883 = vmatpush2.msra.mxu0 0.0
  %884 = vmatprep.mubr.f32.mxu0 0.0
  %885 = vmatmul.mubr.f32.gmra.mxu0 %v229
  %v886 = vpop.f32.mrf.mxu0
  %v887 = vadd.f32 %v225, %v886
  %v888 = vpop.f32.mrf.mxu0
  %889 = vmatprep.mubr.f32.mxu0 0.0
  %890 = vmatmul.mubr.f32.gmra.mxu0 %v232
  %v891 = vpop.f32.mrf.mxu0
  %v892 = vadd.f32 %v225, %v891
  %v893 = vpop.f32.mrf.mxu0
  %894 = vmatprep.mubr.f32.mxu0 0.0
  %895 = vmatmul.mubr.f32.gmra.mxu0 %v235
  %v896 = vpop.f32.mrf.mxu0
  %v897 = vadd.f32 %v225, %v896
  %v898 = vpop.f32.mrf.mxu0
  %899 = vmatprep.mubr.f32.mxu0 0.0
  %900 = vmatmul.mubr.f32.gmra.mxu0 %v238
  %v901 = vpop.f32.mrf.mxu0
  %v902 = vadd.f32 %v225, %v901
  %v903 = vpop.f32.mrf.mxu0
  %904 = vmatprep.mubr.f32.mxu0 0.0
  %905 = vmatmul.mubr.f32.gmra.mxu0 %v241
  %v906 = vpop.f32.mrf.mxu0
  %v907 = vadd.f32 %v225, %v906
  %v908 = vpop.f32.mrf.mxu0
  %909 = vmatprep.mubr.f32.mxu0 0.0
  %910 = vmatmul.mubr.f32.gmra.mxu0 %v244
  %v911 = vpop.f32.mrf.mxu0
  %v912 = vadd.f32 %v225, %v911
  %v913 = vpop.f32.mrf.mxu0
  %914 = vmatprep.mubr.f32.mxu0 0.0
  %915 = vmatmul.mubr.f32.gmra.mxu0 %v247
  %v916 = vpop.f32.mrf.mxu0
  %v917 = vadd.f32 %v225, %v916
  %v918 = vpop.f32.mrf.mxu0
  %919 = vmatprep.mubr.f32.mxu0 0.0
  %920 = vmatmul.mubr.f32.gmra.mxu0 %v250
  %v921 = vpop.f32.mrf.mxu0
  %v922 = vadd.f32 %v225, %v921
  %v923 = vpop.f32.mrf.mxu0
  %924 = vmatprep.mubr.f32.mxu0 0.0
  %925 = vmatmul.mubr.f32.gmra.mxu0 %v253
  %v926 = vpop.f32.mrf.mxu0
  %v927 = vadd.f32 %v225, %v926
  %v928 = vpop.f32.mrf.mxu0
  %929 = vmatprep.mubr.f32.mxu0 0.0
  %930 = vmatmul.mubr.f32.gmra.mxu0 %v256
  %v931 = vpop.f32.mrf.mxu0
  %v932 = vadd.f32 %v225, %v931
  %v933 = vpop.f32.mrf.mxu0
  %934 = vmatprep.mubr.f32.mxu0 0.0
  %935 = vmatmul.mubr.f32.gmra.mxu0 %v259
  %v936 = vpop.f32.mrf.mxu0
  %v937 = vadd.f32 %v225, %v936
  %v938 = vpop.f32.mrf.mxu0
  %939 = vmatprep.mubr.f32.mxu0 0.0
  %940 = vmatmul.mubr.f32.gmra.mxu0 %v262
  %v941 = vpop.f32.mrf.mxu0
  %v942 = vadd.f32 %v225, %v941
  %v943 = vpop.f32.mrf.mxu0
  %944 = vmatprep.mubr.f32.mxu0 0.0
  %945 = vmatmul.mubr.f32.gmra.mxu0 %v265
  %v946 = vpop.f32.mrf.mxu0
  %v947 = vadd.f32 %v225, %v946
  %v948 = vpop.f32.mrf.mxu0
  %949 = vmatprep.mubr.f32.mxu0 0.0
  %950 = vmatmul.mubr.f32.gmra.mxu0 %v268
  %v951 = vpop.f32.mrf.mxu0
  %v952 = vadd.f32 %v225, %v951
  %v953 = vpop.f32.mrf.mxu0
  %954 = vmatprep.mubr.f32.mxu0 0.0
  %955 = vmatmul.mubr.f32.gmra.mxu0 %v271
  %v956 = vpop.f32.mrf.mxu0
  %v957 = vadd.f32 %v225, %v956
  %v958 = vpop.f32.mrf.mxu0
  %959 = vmatprep.mubr.f32.mxu0 0.0
  %960 = vmatmul.mubr.f32.gmra.mxu0 %v274
  %v961 = vpop.f32.mrf.mxu0
  %v962 = vadd.f32 %v225, %v961
  %v963 = vpop.f32.mrf.mxu0
  %964 = vmatprep.mubr.f32.mxu0 0.0
  %965 = vmatmul.mubr.f32.gmra.mxu0 %v277
  %v966 = vpop.f32.mrf.mxu0
  %v967 = vadd.f32 %v225, %v966
  %v968 = vpop.f32.mrf.mxu0
  %969 = vmatprep.mubr.f32.mxu0 0.0
  %970 = vmatmul.mubr.f32.gmra.mxu0 %v280
  %v971 = vpop.f32.mrf.mxu0
  %v972 = vadd.f32 %v225, %v971
  %v973 = vpop.f32.mrf.mxu0
  %974 = vmatprep.mubr.f32.mxu0 0.0
  %975 = vmatmul.mubr.f32.gmra.mxu0 %v283
  %v976 = vpop.f32.mrf.mxu0
  %v977 = vadd.f32 %v225, %v976
  %v978 = vpop.f32.mrf.mxu0
  %979 = vmatprep.mubr.f32.mxu0 0.0
  %980 = vmatmul.mubr.f32.gmra.mxu0 %v286
  %v981 = vpop.f32.mrf.mxu0
  %v982 = vadd.f32 %v225, %v981
  %v983 = vpop.f32.mrf.mxu0
  %984 = vmatprep.mubr.f32.mxu0 0.0
  %985 = vmatmul.mubr.f32.gmra.mxu0 %v289
  %v986 = vpop.f32.mrf.mxu0
  %v987 = vadd.f32 %v225, %v986
  %v988 = vpop.f32.mrf.mxu0
  %989 = vmatprep.mubr.f32.mxu0 0.0
  %990 = vmatmul.mubr.f32.gmra.mxu0 %v292
  %v991 = vpop.f32.mrf.mxu0
  %v992 = vadd.f32 %v225, %v991
  %v993 = vpop.f32.mrf.mxu0
  %994 = vmatprep.mubr.f32.mxu0 0.0
  %995 = vmatmul.mubr.f32.gmra.mxu0 %v295
  %v996 = vpop.f32.mrf.mxu0
  %v997 = vadd.f32 %v225, %v996
  %v998 = vpop.f32.mrf.mxu0
  %999 = vmatprep.mubr.f32.mxu0 0.0
  %1000 = vmatmul.mubr.f32.gmra.mxu0 %v298
  %v1001 = vpop.f32.mrf.mxu0
  %v1002 = vadd.f32 %v225, %v1001
  %v1003 = vpop.f32.mrf.mxu0
  %1004 = vmatprep.mubr.f32.mxu0 0.0
  %1005 = vmatmul.mubr.f32.gmra.mxu0 %v301
  %v1006 = vpop.f32.mrf.mxu0
  %v1007 = vadd.f32 %v225, %v1006
  %v1008 = vpop.f32.mrf.mxu0
  %1009 = vmatprep.mubr.f32.mxu0 0.0
  %1010 = vmatmul.mubr.f32.gmra.mxu0 %v304
  %v1011 = vpop.f32.mrf.mxu0
  %v1012 = vadd.f32 %v225, %v1011
  %v1013 = vpop.f32.mrf.mxu0
  %1014 = vmatprep.mubr.f32.mxu0 0.0
  %1015 = vmatmul.mubr.f32.gmra.mxu0 %v307
  %v1016 = vpop.f32.mrf.mxu0
  %v1017 = vadd.f32 %v225, %v1016
  %v1018 = vpop.f32.mrf.mxu0
  %1019 = vmatprep.mubr.f32.mxu0 0.0
  %1020 = vmatmul.mubr.f32.gmra.mxu0 %v310
  %v1021 = vpop.f32.mrf.mxu0
  %v1022 = vadd.f32 %v225, %v1021
  %v1023 = vpop.f32.mrf.mxu0
  %1024 = vmatprep.mubr.f32.mxu0 0.0
  %1025 = vmatmul.mubr.f32.gmra.mxu0 %v313
  %v1026 = vpop.f32.mrf.mxu0
  %v1027 = vadd.f32 %v225, %v1026
  %v1028 = vpop.f32.mrf.mxu0
  %1029 = vmatprep.mubr.f32.mxu0 0.0
  %1030 = vmatmul.mubr.f32.gmra.mxu0 %v316
  %v1031 = vpop.f32.mrf.mxu0
  %v1032 = vadd.f32 %v225, %v1031
  %v1033 = vpop.f32.mrf.mxu0
  %1034 = vmatprep.mubr.f32.mxu0 0.0
  %1035 = vmatmul.mubr.f32.gmra.mxu0 %v319
  %v1036 = vpop.f32.mrf.mxu0
  %v1037 = vadd.f32 %v225, %v1036
  %v1038 = vpop.f32.mrf.mxu0
  %1039 = vmatprep.mubr.f32.mxu0 0.0
  %1040 = vmatmul.mubr.f32.gmra.mxu0 %v322
  %v1041 = vpop.f32.mrf.mxu0
  %v1042 = vadd.f32 %v225, %v1041
  %v1043 = vpop.f32.mrf.mxu0
  %1044 = vmatprep.mubr.f32.mxu0 0.0
  %1045 = vmatmul.mubr.f32.gmra.mxu0 %v325
  %v1046 = vpop.f32.mrf.mxu0
  %v1047 = vadd.f32 %v225, %v1046
  %v1048 = vpop.f32.mrf.mxu0
  %1049 = vmatprep.mubr.f32.mxu0 0.0
  %1050 = vmatmul.mubr.f32.gmra.mxu0 %v328
  %v1051 = vpop.f32.mrf.mxu0
  %v1052 = vadd.f32 %v225, %v1051
  %v1053 = vpop.f32.mrf.mxu0
  %1054 = vmatprep.mubr.f32.mxu0 0.0
  %1055 = vmatmul.mubr.f32.gmra.mxu0 %v331
  %v1056 = vpop.f32.mrf.mxu0
  %v1057 = vadd.f32 %v225, %v1056
  %v1058 = vpop.f32.mrf.mxu0
  %1059 = vmatprep.mubr.f32.mxu0 0.0
  %1060 = vmatmul.mubr.f32.gmra.mxu0 %v334
  %v1061 = vpop.f32.mrf.mxu0
  %v1062 = vadd.f32 %v225, %v1061
  %v1063 = vpop.f32.mrf.mxu0
  %1064 = vmatprep.mubr.f32.mxu0 0.0
  %1065 = vmatmul.mubr.f32.gmra.mxu0 %v337
  %v1066 = vpop.f32.mrf.mxu0
  %v1067 = vadd.f32 %v225, %v1066
  %v1068 = vpop.f32.mrf.mxu0
  %1069 = vmatprep.mubr.f32.mxu0 0.0
  %1070 = vmatmul.mubr.f32.gmra.mxu0 %v340
  %v1071 = vpop.f32.mrf.mxu0
  %v1072 = vadd.f32 %v225, %v1071
  %v1073 = vpop.f32.mrf.mxu0
  %1074 = vmatprep.mubr.f32.mxu0 0.0
  %1075 = vmatmul.mubr.f32.gmra.mxu0 %v343
  %v1076 = vpop.f32.mrf.mxu0
  %v1077 = vadd.f32 %v225, %v1076
  %v1078 = vpop.f32.mrf.mxu0
  %1079 = vmatprep.mubr.f32.mxu0 0.0
  %1080 = vmatmul.mubr.f32.gmra.mxu0 %v346
  %v1081 = vpop.f32.mrf.mxu0
  %v1082 = vadd.f32 %v225, %v1081
  %v1083 = vpop.f32.mrf.mxu0
  %1084 = vmatprep.mubr.f32.mxu0 0.0
  %1085 = vmatmul.mubr.f32.gmra.mxu0 %v349
  %v1086 = vpop.f32.mrf.mxu0
  %v1087 = vadd.f32 %v225, %v1086
  %v1088 = vpop.f32.mrf.mxu0
  %1089 = vmatprep.mubr.f32.mxu0 0.0
  %1090 = vmatmul.mubr.f32.gmra.mxu0 %v352
  %v1091 = vpop.f32.mrf.mxu0
  %v1092 = vadd.f32 %v225, %v1091
  %v1093 = vpop.f32.mrf.mxu0
  %1094 = vmatprep.mubr.f32.mxu0 0.0
  %1095 = vmatmul.mubr.f32.gmra.mxu0 %v355
  %v1096 = vpop.f32.mrf.mxu0
  %v1097 = vadd.f32 %v225, %v1096
  %v1098 = vpop.f32.mrf.mxu0
  %1099 = vmatprep.mubr.f32.mxu0 0.0
  %1100 = vmatmul.mubr.f32.gmra.mxu0 %v358
  %v1101 = vpop.f32.mrf.mxu0
  %v1102 = vadd.f32 %v225, %v1101
  %v1103 = vpop.f32.mrf.mxu0
  %1104 = vmatprep.mubr.f32.mxu0 0.0
  %1105 = vmatmul.mubr.f32.gmra.mxu0 %v361
  %v1106 = vpop.f32.mrf.mxu0
  %v1107 = vadd.f32 %v225, %v1106
  %v1108 = vpop.f32.mrf.mxu0
  %1109 = vmatprep.mubr.f32.mxu0 0.0
  %1110 = vmatmul.mubr.f32.gmra.mxu0 %v364
  %v1111 = vpop.f32.mrf.mxu0
  %v1112 = vadd.f32 %v225, %v1111
  %v1113 = vpop.f32.mrf.mxu0
  %1114 = vmatprep.mubr.f32.mxu0 0.0
  %1115 = vmatmul.mubr.f32.gmra.mxu0 %v367
  %v1116 = vpop.f32.mrf.mxu0
  %v1117 = vadd.f32 %v225, %v1116
  %v1118 = vpop.f32.mrf.mxu0
  %1119 = vmatprep.mubr.f32.mxu0 0.0
  %1120 = vmatmul.mubr.f32.gmra.mxu0 %v370
  %v1121 = vpop.f32.mrf.mxu0
  %v1122 = vadd.f32 %v225, %v1121
  %v1123 = vpop.f32.mrf.mxu0
  %1124 = vmatprep.mubr.f32.mxu0 0.0
  %1125 = vmatmul.mubr.f32.gmra.mxu0 %v373
  %v1126 = vpop.f32.mrf.mxu0
  %v1127 = vadd.f32 %v225, %v1126
  %v1128 = vpop.f32.mrf.mxu0
  %1129 = vmatprep.mubr.f32.mxu0 0.0
  %1130 = vmatmul.mubr.f32.gmra.mxu0 %v376
  %v1131 = vpop.f32.mrf.mxu0
  %v1132 = vadd.f32 %v225, %v1131
  %v1133 = vpop.f32.mrf.mxu0
  %1134 = vmatprep.mubr.f32.mxu0 0.0
  %1135 = vmatmul.mubr.f32.gmra.mxu0 %v379
  %v1136 = vpop.f32.mrf.mxu0
  %v1137 = vadd.f32 %v225, %v1136
  %v1138 = vpop.f32.mrf.mxu0
  %1139 = vmatprep.mubr.f32.mxu0 0.0
  %1140 = vmatmul.mubr.f32.gmra.mxu0 %v382
  %v1141 = vpop.f32.mrf.mxu0
  %v1142 = vadd.f32 %v225, %v1141
  %v1143 = vpop.f32.mrf.mxu0
  %1144 = vmatprep.mubr.f32.mxu0 0.0
  %1145 = vmatmul.mubr.f32.gmra.mxu0 %v385
  %v1146 = vpop.f32.mrf.mxu0
  %v1147 = vadd.f32 %v225, %v1146
  %v1148 = vpop.f32.mrf.mxu0
  %1149 = vmatprep.mubr.f32.mxu0 0.0
  %1150 = vmatmul.mubr.f32.gmra.mxu0 %v388
  %v1151 = vpop.f32.mrf.mxu0
  %v1152 = vadd.f32 %v225, %v1151
  %v1153 = vpop.f32.mrf.mxu0
  %1154 = vmatprep.mubr.f32.mxu0 0.0
  %1155 = vmatmul.mubr.f32.gmra.mxu0 %v391
  %v1156 = vpop.f32.mrf.mxu0
  %v1157 = vadd.f32 %v225, %v1156
  %v1158 = vpop.f32.mrf.mxu0
  %1159 = vmatprep.mubr.f32.mxu0 0.0
  %1160 = vmatmul.mubr.f32.gmra.mxu0 %v394
  %v1161 = vpop.f32.mrf.mxu0
  %v1162 = vadd.f32 %v225, %v1161
  %v1163 = vpop.f32.mrf.mxu0
  %1164 = vmatprep.mubr.f32.mxu0 0.0
  %1165 = vmatmul.mubr.f32.gmra.mxu0 %v397
  %v1166 = vpop.f32.mrf.mxu0
  %v1167 = vadd.f32 %v225, %v1166
  %v1168 = vpop.f32.mrf.mxu0
  %1169 = vmatprep.mubr.f32.mxu0 0.0
  %1170 = vmatmul.mubr.f32.gmra.mxu0 %v400
  %v1171 = vpop.f32.mrf.mxu0
  %v1172 = vadd.f32 %v225, %v1171
  %v1173 = vpop.f32.mrf.mxu0
  %1174 = vmatprep.mubr.f32.mxu0 0.0
  %1175 = vmatmul.mubr.f32.gmra.mxu0 %v403
  %v1176 = vpop.f32.mrf.mxu0
  %v1177 = vadd.f32 %v225, %v1176
  %v1178 = vpop.f32.mrf.mxu0
  %1179 = vmatprep.mubr.f32.mxu0 0.0
  %1180 = vmatmul.mubr.f32.gmra.mxu0 %v406
  %v1181 = vpop.f32.mrf.mxu0
  %v1182 = vadd.f32 %v225, %v1181
  %v1183 = vpop.f32.mrf.mxu0
  %1184 = vmatprep.mubr.f32.mxu0 0.0
  %1185 = vmatmul.mubr.f32.gmra.mxu0 %v409
  %v1186 = vpop.f32.mrf.mxu0
  %v1187 = vadd.f32 %v225, %v1186
  %v1188 = vpop.f32.mrf.mxu0
  %1189 = vmatprep.mubr.f32.mxu0 0.0
  %1190 = vmatmul.mubr.f32.gmra.mxu0 %v412
  %v1191 = vpop.f32.mrf.mxu0
  %v1192 = vadd.f32 %v225, %v1191
  %v1193 = vpop.f32.mrf.mxu0
  %1194 = vmatprep.mubr.f32.mxu0 0.0
  %1195 = vmatmul.mubr.f32.gmra.mxu0 %v415
  %v1196 = vpop.f32.mrf.mxu0
  %v1197 = vadd.f32 %v225, %v1196
  %v1198 = vpop.f32.mrf.mxu0
  %1199 = vmatprep.mubr.f32.mxu0 0.0
  %1200 = vmatmul.mubr.f32.gmra.mxu0 %v418
  %v1201 = vpop.f32.mrf.mxu0
  %v1202 = vadd.f32 %v225, %v1201
  %v1203 = vpop.f32.mrf.mxu0
  %1204 = vmatprep.mubr.f32.mxu0 0.0
  %1205 = vmatmul.mubr.f32.gmra.mxu0 %v421
  %v1206 = vpop.f32.mrf.mxu0
  %v1207 = vadd.f32 %v225, %v1206
  %v1208 = vpop.f32.mrf.mxu0
  %1209 = vmatprep.mubr.f32.mxu0 0.0
  %1210 = vmatmul.mubr.f32.gmra.mxu0 %v424
  %v1211 = vpop.f32.mrf.mxu0
  %v1212 = vadd.f32 %v225, %v1211
  %v1213 = vpop.f32.mrf.mxu0
  %1214 = vmatprep.mubr.f32.mxu0 0.0
  %1215 = vmatmul.mubr.f32.gmra.mxu0 %v427
  %v1216 = vpop.f32.mrf.mxu0
  %v1217 = vadd.f32 %v225, %v1216
  %v1218 = vpop.f32.mrf.mxu0
  %1219 = vmatprep.mubr.f32.mxu0 0.0
  %1220 = vmatmul.mubr.f32.gmra.mxu0 %v430
  %v1221 = vpop.f32.mrf.mxu0
  %v1222 = vadd.f32 %v225, %v1221
  %v1223 = vpop.f32.mrf.mxu0
  %1224 = vmatprep.mubr.f32.mxu0 0.0
  %1225 = vmatmul.mubr.f32.gmra.mxu0 %v433
  %v1226 = vpop.f32.mrf.mxu0
  %v1227 = vadd.f32 %v225, %v1226
  %v1228 = vpop.f32.mrf.mxu0
  %1229 = vmatprep.mubr.f32.mxu0 0.0
  %1230 = vmatmul.mubr.f32.gmra.mxu0 %v436
  %v1231 = vpop.f32.mrf.mxu0
  %v1232 = vadd.f32 %v225, %v1231
  %v1233 = vpop.f32.mrf.mxu0
  %1234 = vmatprep.mubr.f32.mxu0 0.0
  %1235 = vmatmul.mubr.f32.gmra.mxu0 %v439
  %v1236 = vpop.f32.mrf.mxu0
  %v1237 = vadd.f32 %v225, %v1236
  %v1238 = vpop.f32.mrf.mxu0
  %1239 = vmatprep.mubr.f32.mxu0 0.0
  %1240 = vmatmul.mubr.f32.gmra.mxu0 %v442
  %v1241 = vpop.f32.mrf.mxu0
  %v1242 = vadd.f32 %v225, %v1241
  %v1243 = vpop.f32.mrf.mxu0
  %1244 = vmatprep.mubr.f32.mxu0 0.0
  %1245 = vmatmul.mubr.f32.gmra.mxu0 %v445
  %v1246 = vpop.f32.mrf.mxu0
  %v1247 = vadd.f32 %v225, %v1246
  %v1248 = vpop.f32.mrf.mxu0
  %1249 = vmatprep.mubr.f32.mxu0 0.0
  %1250 = vmatmul.mubr.f32.gmra.mxu0 %v448
  %v1251 = vpop.f32.mrf.mxu0
  %v1252 = vadd.f32 %v225, %v1251
  %v1253 = vpop.f32.mrf.mxu0
  %1254 = vmatprep.mubr.f32.mxu0 0.0
  %1255 = vmatmul.mubr.f32.gmra.mxu0 %v451
  %v1256 = vpop.f32.mrf.mxu0
  %v1257 = vadd.f32 %v225, %v1256
  %v1258 = vpop.f32.mrf.mxu0
  %1259 = vmatprep.mubr.f32.mxu0 0.0
  %1260 = vmatmul.mubr.f32.gmra.mxu0 %v454
  %v1261 = vpop.f32.mrf.mxu0
  %v1262 = vadd.f32 %v225, %v1261
  %v1263 = vpop.f32.mrf.mxu0
  %1264 = vmatprep.mubr.f32.mxu0 0.0
  %1265 = vmatmul.mubr.f32.gmra.mxu0 %v457
  %v1266 = vpop.f32.mrf.mxu0
  %v1267 = vadd.f32 %v225, %v1266
  %v1268 = vpop.f32.mrf.mxu0
  %1269 = vmatprep.mubr.f32.mxu0 0.0
  %1270 = vmatmul.mubr.f32.gmra.mxu0 %v460
  %v1271 = vpop.f32.mrf.mxu0
  %v1272 = vadd.f32 %v225, %v1271
  %v1273 = vpop.f32.mrf.mxu0
  %1274 = vmatprep.mubr.f32.mxu0 0.0
  %1275 = vmatmul.mubr.f32.gmra.mxu0 %v463
  %v1276 = vpop.f32.mrf.mxu0
  %v1277 = vadd.f32 %v225, %v1276
  %v1278 = vpop.f32.mrf.mxu0
  %1279 = vmatprep.mubr.f32.mxu0 0.0
  %1280 = vmatmul.mubr.f32.gmra.mxu0 %v466
  %v1281 = vpop.f32.mrf.mxu0
  %v1282 = vadd.f32 %v225, %v1281
  %v1283 = vpop.f32.mrf.mxu0
  %1284 = vmatprep.mubr.f32.mxu0 0.0
  %1285 = vmatmul.mubr.f32.gmra.mxu0 %v469
  %v1286 = vpop.f32.mrf.mxu0
  %v1287 = vadd.f32 %v225, %v1286
  %v1288 = vpop.f32.mrf.mxu0
  %1289 = vmatprep.mubr.f32.mxu0 0.0
  %1290 = vmatmul.mubr.f32.gmra.mxu0 %v472
  %v1291 = vpop.f32.mrf.mxu0
  %v1292 = vadd.f32 %v225, %v1291
  %v1293 = vpop.f32.mrf.mxu0
  %1294 = vmatprep.mubr.f32.mxu0 0.0
  %1295 = vmatmul.mubr.f32.gmra.mxu0 %v475
  %v1296 = vpop.f32.mrf.mxu0
  %v1297 = vadd.f32 %v225, %v1296
  %v1298 = vpop.f32.mrf.mxu0
  %1299 = vmatprep.mubr.f32.mxu0 0.0
  %1300 = vmatmul.mubr.f32.gmra.mxu0 %v478
  %v1301 = vpop.f32.mrf.mxu0
  %v1302 = vadd.f32 %v225, %v1301
  %v1303 = vpop.f32.mrf.mxu0
  %1304 = vmatprep.mubr.f32.mxu0 0.0
  %1305 = vmatmul.mubr.f32.gmra.mxu0 %v481
  %v1306 = vpop.f32.mrf.mxu0
  %v1307 = vadd.f32 %v225, %v1306
  %v1308 = vpop.f32.mrf.mxu0
  %1309 = vmatprep.mubr.f32.mxu0 0.0
  %1310 = vmatmul.mubr.f32.gmra.mxu0 %v484
  %v1311 = vpop.f32.mrf.mxu0
  %v1312 = vadd.f32 %v225, %v1311
  %v1313 = vpop.f32.mrf.mxu0
  %1314 = vmatprep.mubr.f32.mxu0 0.0
  %1315 = vmatmul.mubr.f32.gmra.mxu0 %v487
  %v1316 = vpop.f32.mrf.mxu0
  %v1317 = vadd.f32 %v225, %v1316
  %v1318 = vpop.f32.mrf.mxu0
  %1319 = vmatprep.mubr.f32.mxu0 0.0
  %1320 = vmatmul.mubr.f32.gmra.mxu0 %v490
  %v1321 = vpop.f32.mrf.mxu0
  %v1322 = vadd.f32 %v225, %v1321
  %v1323 = vpop.f32.mrf.mxu0
  %1324 = vmatprep.mubr.f32.mxu0 0.0
  %1325 = vmatmul.mubr.f32.gmra.mxu0 %v493
  %v1326 = vpop.f32.mrf.mxu0
  %v1327 = vadd.f32 %v225, %v1326
  %v1328 = vpop.f32.mrf.mxu0
  %1329 = vmatprep.mubr.f32.mxu0 0.0
  %1330 = vmatmul.mubr.f32.gmra.mxu0 %v496
  %v1331 = vpop.f32.mrf.mxu0
  %v1332 = vadd.f32 %v225, %v1331
  %v1333 = vpop.f32.mrf.mxu0
  %1334 = vmatprep.mubr.f32.mxu0 0.0
  %1335 = vmatmul.mubr.f32.gmra.mxu0 %v499
  %v1336 = vpop.f32.mrf.mxu0
  %v1337 = vadd.f32 %v225, %v1336
  %v1338 = vpop.f32.mrf.mxu0
  %1339 = vmatprep.mubr.f32.mxu0 0.0
  %1340 = vmatmul.mubr.f32.gmra.mxu0 %v502
  %v1341 = vpop.f32.mrf.mxu0
  %v1342 = vadd.f32 %v225, %v1341
  %v1343 = vpop.f32.mrf.mxu0
  %1344 = vmatprep.mubr.f32.mxu0 0.0
  %1345 = vmatmul.mubr.f32.gmra.mxu0 %v505
  %v1346 = vpop.f32.mrf.mxu0
  %v1347 = vadd.f32 %v225, %v1346
  %v1348 = vpop.f32.mrf.mxu0
  %1349 = vmatprep.mubr.f32.mxu0 0.0
  %1350 = vmatmul.mubr.f32.gmra.mxu0 %v508
  %v1351 = vpop.f32.mrf.mxu0
  %v1352 = vadd.f32 %v225, %v1351
  %v1353 = vpop.f32.mrf.mxu0
  %1354 = vmatprep.mubr.f32.mxu0 0.0
  %1355 = vmatmul.mubr.f32.gmra.mxu0 %v511
  %v1356 = vpop.f32.mrf.mxu0
  %v1357 = vadd.f32 %v225, %v1356
  %v1358 = vpop.f32.mrf.mxu0
  %1359 = vmatprep.mubr.f32.mxu0 0.0
  %1360 = vmatmul.mubr.f32.gmra.mxu0 %v514
  %v1361 = vpop.f32.mrf.mxu0
  %v1362 = vadd.f32 %v225, %v1361
  %v1363 = vpop.f32.mrf.mxu0
  %1364 = vmatprep.mubr.f32.mxu0 0.0
  %1365 = vmatmul.mubr.f32.gmra.mxu0 %v517
  %v1366 = vpop.f32.mrf.mxu0
  %v1367 = vadd.f32 %v225, %v1366
  %v1368 = vpop.f32.mrf.mxu0
  %1369 = vmatprep.mubr.f32.mxu0 0.0
  %1370 = vmatmul.mubr.f32.gmra.mxu0 %v520
  %v1371 = vpop.f32.mrf.mxu0
  %v1372 = vadd.f32 %v225, %v1371
  %v1373 = vpop.f32.mrf.mxu0
  %1374 = vmatprep.mubr.f32.mxu0 0.0
  %1375 = vmatmul.mubr.f32.gmra.mxu0 %v523
  %v1376 = vpop.f32.mrf.mxu0
  %v1377 = vadd.f32 %v225, %v1376
  %v1378 = vpop.f32.mrf.mxu0
  %1379 = vmatprep.mubr.f32.mxu0 0.0
  %1380 = vmatmul.mubr.f32.gmra.mxu0 %v526
  %v1381 = vpop.f32.mrf.mxu0
  %v1382 = vadd.f32 %v225, %v1381
  %v1383 = vpop.f32.mrf.mxu0
  %1384 = vmatprep.mubr.f32.mxu0 0.0
  %1385 = vmatmul.mubr.f32.gmra.mxu0 %v529
  %v1386 = vpop.f32.mrf.mxu0
  %v1387 = vadd.f32 %v225, %v1386
  %v1388 = vpop.f32.mrf.mxu0
  %1389 = vmatprep.mubr.f32.mxu0 0.0
  %1390 = vmatmul.mubr.f32.gmra.mxu0 %v532
  %v1391 = vpop.f32.mrf.mxu0
  %v1392 = vadd.f32 %v225, %v1391
  %v1393 = vpop.f32.mrf.mxu0
  %1394 = vmatprep.mubr.f32.mxu0 0.0
  %1395 = vmatmul.mubr.f32.gmra.mxu0 %v535
  %v1396 = vpop.f32.mrf.mxu0
  %v1397 = vadd.f32 %v225, %v1396
  %v1398 = vpop.f32.mrf.mxu0
  %1399 = vmatprep.mubr.f32.mxu0 0.0
  %1400 = vmatmul.mubr.f32.gmra.mxu0 %v538
  %v1401 = vpop.f32.mrf.mxu0
  %v1402 = vadd.f32 %v225, %v1401
  %v1403 = vpop.f32.mrf.mxu0
  %1404 = vmatprep.mubr.f32.mxu0 0.0
  %1405 = vmatmul.mubr.f32.gmra.mxu0 %v541
  %v1406 = vpop.f32.mrf.mxu0
  %v1407 = vadd.f32 %v225, %v1406
  %v1408 = vpop.f32.mrf.mxu0
  %1409 = vmatprep.mubr.f32.mxu0 0.0
  %1410 = vmatmul.mubr.f32.gmra.mxu0 %v544
  %v1411 = vpop.f32.mrf.mxu0
  %v1412 = vadd.f32 %v225, %v1411
  %v1413 = vpop.f32.mrf.mxu0
  %1414 = vmatprep.mubr.f32.mxu0 0.0
  %1415 = vmatmul.mubr.f32.gmra.mxu0 %v547
  %v1416 = vpop.f32.mrf.mxu0
  %v1417 = vadd.f32 %v225, %v1416
  %v1418 = vpop.f32.mrf.mxu0
  %1419 = vmatprep.mubr.f32.mxu0 0.0
  %1420 = vmatmul.mubr.f32.gmra.mxu0 %v550
  %v1421 = vpop.f32.mrf.mxu0
  %v1422 = vadd.f32 %v225, %v1421
  %v1423 = vpop.f32.mrf.mxu0
  %1424 = vmatprep.mubr.f32.mxu0 0.0
  %1425 = vmatmul.mubr.f32.gmra.mxu0 %v553
  %v1426 = vpop.f32.mrf.mxu0
  %v1427 = vadd.f32 %v225, %v1426
  %v1428 = vpop.f32.mrf.mxu0
  %1429 = vmatprep.mubr.f32.mxu0 0.0
  %1430 = vmatmul.mubr.f32.gmra.mxu0 %v556
  %v1431 = vpop.f32.mrf.mxu0
  %v1432 = vadd.f32 %v225, %v1431
  %v1433 = vpop.f32.mrf.mxu0
  %1434 = vmatprep.mubr.f32.mxu0 0.0
  %1435 = vmatmul.mubr.f32.gmra.mxu0 %v559
  %v1436 = vpop.f32.mrf.mxu0
  %v1437 = vadd.f32 %v225, %v1436
  %v1438 = vpop.f32.mrf.mxu0
  %1439 = vmatprep.mubr.f32.mxu0 0.0
  %1440 = vmatmul.mubr.f32.gmra.mxu0 %v562
  %v1441 = vpop.f32.mrf.mxu0
  %v1442 = vadd.f32 %v225, %v1441
  %v1443 = vpop.f32.mrf.mxu0
  %1444 = vmatprep.mubr.f32.mxu0 0.0
  %1445 = vmatmul.mubr.f32.gmra.mxu0 %v565
  %v1446 = vpop.f32.mrf.mxu0
  %v1447 = vadd.f32 %v225, %v1446
  %v1448 = vpop.f32.mrf.mxu0
  %1449 = vmatprep.mubr.f32.mxu0 0.0
  %1450 = vmatmul.mubr.f32.gmra.mxu0 %v568
  %v1451 = vpop.f32.mrf.mxu0
  %v1452 = vadd.f32 %v225, %v1451
  %v1453 = vpop.f32.mrf.mxu0
  %1454 = vmatprep.mubr.f32.mxu0 0.0
  %1455 = vmatmul.mubr.f32.gmra.mxu0 %v571
  %v1456 = vpop.f32.mrf.mxu0
  %v1457 = vadd.f32 %v225, %v1456
  %v1458 = vpop.f32.mrf.mxu0
  %1459 = vmatprep.mubr.f32.mxu0 0.0
  %1460 = vmatmul.mubr.f32.gmra.mxu0 %v574
  %v1461 = vpop.f32.mrf.mxu0
  %v1462 = vadd.f32 %v225, %v1461
  %v1463 = vpop.f32.mrf.mxu0
  %1464 = vmatprep.mubr.f32.mxu0 0.0
  %1465 = vmatmul.mubr.f32.gmra.mxu0 %v577
  %v1466 = vpop.f32.mrf.mxu0
  %v1467 = vadd.f32 %v225, %v1466
  %v1468 = vpop.f32.mrf.mxu0
  %1469 = vmatprep.mubr.f32.mxu0 0.0
  %1470 = vmatmul.mubr.f32.gmra.mxu0 %v580
  %v1471 = vpop.f32.mrf.mxu0
  %v1472 = vadd.f32 %v225, %v1471
  %v1473 = vpop.f32.mrf.mxu0
  %1474 = vmatprep.mubr.f32.mxu0 0.0
  %1475 = vmatmul.mubr.f32.gmra.mxu0 %v583
  %v1476 = vpop.f32.mrf.mxu0
  %v1477 = vadd.f32 %v225, %v1476
  %v1478 = vpop.f32.mrf.mxu0
  %1479 = vmatprep.mubr.f32.mxu0 0.0
  %1480 = vmatmul.mubr.f32.gmra.mxu0 %v586
  %v1481 = vpop.f32.mrf.mxu0
  %v1482 = vadd.f32 %v225, %v1481
  %v1483 = vpop.f32.mrf.mxu0
  %1484 = vmatprep.mubr.f32.mxu0 0.0
  %1485 = vmatmul.mubr.f32.gmra.mxu0 %v589
  %v1486 = vpop.f32.mrf.mxu0
  %v1487 = vadd.f32 %v225, %v1486
  %v1488 = vpop.f32.mrf.mxu0
  %1489 = vmatprep.mubr.f32.mxu0 0.0
  %1490 = vmatmul.mubr.f32.gmra.mxu0 %v592
  %v1491 = vpop.f32.mrf.mxu0
  %v1492 = vadd.f32 %v225, %v1491
  %v1493 = vpop.f32.mrf.mxu0
  %1494 = vmatprep.mubr.f32.mxu0 0.0
  %1495 = vmatmul.mubr.f32.gmra.mxu0 %v595
  %v1496 = vpop.f32.mrf.mxu0
  %v1497 = vadd.f32 %v225, %v1496
  %v1498 = vpop.f32.mrf.mxu0
  %1499 = vmatprep.mubr.f32.mxu0 0.0
  %1500 = vmatmul.mubr.f32.gmra.mxu0 %v598
  %v1501 = vpop.f32.mrf.mxu0
  %v1502 = vadd.f32 %v225, %v1501
  %v1503 = vpop.f32.mrf.mxu0
  %1504 = vmatprep.mubr.f32.mxu0 0.0
  %1505 = vmatmul.mubr.f32.gmra.mxu0 %v601
  %v1506 = vpop.f32.mrf.mxu0
  %v1507 = vadd.f32 %v225, %v1506
  %v1508 = vpop.f32.mrf.mxu0
  %1509 = vmatprep.mubr.f32.mxu0 0.0
  %1510 = vmatmul.mubr.f32.gmra.mxu0 %v604
  %v1511 = vpop.f32.mrf.mxu0
  %v1512 = vadd.f32 %v225, %v1511
  %v1513 = vpop.f32.mrf.mxu0
  %1514 = vmatprep.mubr.f32.mxu0 0.0
  %1515 = vmatmul.mubr.f32.gmra.mxu0 %v607
  %v1516 = vpop.f32.mrf.mxu0
  %v1517 = vadd.f32 %v225, %v1516
  %v1518 = vpop.f32.mrf.mxu0
  %1519 = vmatprep.mubr.f32.mxu0 0.0
  %1520 = vmatmul.mubr.f32.gmra.mxu0 %v610
  %v1521 = vpop.f32.mrf.mxu0
  %v1522 = vadd.f32 %v225, %v1521
  %v1523 = vpop.f32.mrf.mxu0
  %1524 = vmatprep.mubr.f32.mxu0 0.0
  %1525 = vmatmul.mubr.f32.gmra.mxu0 %v613
  %v1526 = vpop.f32.mrf.mxu0
  %v1527 = vadd.f32 %v225, %v1526
  %v1528 = vpop.f32.mrf.mxu0
  %1529 = vmatprep.mubr.f32.mxu0 0.0
  %1530 = vmatmul.mubr.f32.gmra.mxu0 %v616
  %v1531 = vpop.f32.mrf.mxu0
  %v1532 = vadd.f32 %v225, %v1531
  %v1533 = vpop.f32.mrf.mxu0
  %1534 = vmatprep.mubr.f32.mxu0 0.0
  %1535 = vmatmul.mubr.f32.gmra.mxu0 %v619
  %v1536 = vpop.f32.mrf.mxu0
  %v1537 = vadd.f32 %v225, %v1536
  %v1538 = vpop.f32.mrf.mxu0
  %1539 = vmatprep.mubr.f32.mxu0 0.0
  %1540 = vmatmul.mubr.f32.gmra.mxu0 %v622
  %v1541 = vpop.f32.mrf.mxu0
  %v1542 = vadd.f32 %v225, %v1541
  %v1543 = vpop.f32.mrf.mxu0
  %1544 = vmatprep.mubr.f32.mxu0 0.0
  %1545 = vmatmul.mubr.f32.gmra.mxu0 %v625
  %v1546 = vpop.f32.mrf.mxu0
  %v1547 = vadd.f32 %v225, %v1546
  %v1548 = vpop.f32.mrf.mxu0
  %1549 = vmatprep.mubr.f32.mxu0 0.0
  %1550 = vmatmul.mubr.f32.gmra.mxu0 %v628
  %v1551 = vpop.f32.mrf.mxu0
  %v1552 = vadd.f32 %v225, %v1551
  %v1553 = vpop.f32.mrf.mxu0
  %1554 = vmatprep.mubr.f32.mxu0 0.0
  %1555 = vmatmul.mubr.f32.gmra.mxu0 %v631
  %v1556 = vpop.f32.mrf.mxu0
  %v1557 = vadd.f32 %v225, %v1556
  %v1558 = vpop.f32.mrf.mxu0
  %1559 = vmatprep.mubr.f32.mxu0 0.0
  %1560 = vmatmul.mubr.f32.gmra.mxu0 %v634
  %v1561 = vpop.f32.mrf.mxu0
  %v1562 = vadd.f32 %v225, %v1561
  %v1563 = vpop.f32.mrf.mxu0
  %1564 = vmatprep.mubr.f32.mxu0 0.0
  %1565 = vmatmul.mubr.f32.gmra.mxu0 %v637
  %v1566 = vpop.f32.mrf.mxu0
  %v1567 = vadd.f32 %v225, %v1566
  %v1568 = vpop.f32.mrf.mxu0
  %1569 = vmatprep.mubr.f32.mxu0 0.0
  %1570 = vmatmul.mubr.f32.gmra.mxu0 %v640
  %v1571 = vpop.f32.mrf.mxu0
  %v1572 = vadd.f32 %v225, %v1571
  %v1573 = vpop.f32.mrf.mxu0
  %1574 = vmatprep.mubr.f32.mxu0 0.0
  %1575 = vmatmul.mubr.f32.gmra.mxu0 %v643
  %v1576 = vpop.f32.mrf.mxu0
  %v1577 = vadd.f32 %v225, %v1576
  %v1578 = vpop.f32.mrf.mxu0
  %1579 = vmatprep.mubr.f32.mxu0 0.0
  %1580 = vmatmul.mubr.f32.gmra.mxu0 %v646
  %v1581 = vpop.f32.mrf.mxu0
  %v1582 = vadd.f32 %v225, %v1581
  %v1583 = vpop.f32.mrf.mxu0
  %1584 = vmatprep.mubr.f32.mxu0 0.0
  %1585 = vmatmul.mubr.f32.gmra.mxu0 %v649
  %v1586 = vpop.f32.mrf.mxu0
  %v1587 = vadd.f32 %v225, %v1586
  %v1588 = vpop.f32.mrf.mxu0
  %1589 = vmatprep.mubr.f32.mxu0 0.0
  %1590 = vmatmul.mubr.f32.gmra.mxu0 %v652
  %v1591 = vpop.f32.mrf.mxu0
  %v1592 = vadd.f32 %v225, %v1591
  %v1593 = vpop.f32.mrf.mxu0
  %1594 = vmatprep.mubr.f32.mxu0 0.0
  %1595 = vmatmul.mubr.f32.gmra.mxu0 %v655
  %v1596 = vpop.f32.mrf.mxu0
  %v1597 = vadd.f32 %v225, %v1596
  %v1598 = vpop.f32.mrf.mxu0
  %1599 = vmatprep.mubr.f32.mxu0 0.0
  %1600 = vmatmul.mubr.f32.gmra.mxu0 %v658
  %v1601 = vpop.f32.mrf.mxu0
  %v1602 = vadd.f32 %v225, %v1601
  %v1603 = vpop.f32.mrf.mxu0
  %1604 = vmatprep.mubr.f32.mxu0 0.0
  %1605 = vmatmul.mubr.f32.gmra.mxu0 %v661
  %v1606 = vpop.f32.mrf.mxu0
  %v1607 = vadd.f32 %v225, %v1606
  %v1608 = vpop.f32.mrf.mxu0
  %1609 = vmatprep.mubr.f32.mxu0 0.0
  %1610 = vmatmul.mubr.f32.gmra.mxu0 %v664
  %v1611 = vpop.f32.mrf.mxu0
  %v1612 = vadd.f32 %v225, %v1611
  %v1613 = vpop.f32.mrf.mxu0
  %1614 = vmatprep.mubr.f32.mxu0 0.0
  %1615 = vmatmul.mubr.f32.gmra.mxu0 %v667
  %v1616 = vpop.f32.mrf.mxu0
  %v1617 = vadd.f32 %v225, %v1616
  %v1618 = vpop.f32.mrf.mxu0
  %1619 = vmatprep.mubr.f32.mxu0 0.0
  %1620 = vmatmul.mubr.f32.gmra.mxu0 %v670
  %v1621 = vpop.f32.mrf.mxu0
  %v1622 = vadd.f32 %v225, %v1621
  %v1623 = vpop.f32.mrf.mxu0
  %1624 = vmatprep.mubr.f32.mxu0 0.0
  %1625 = vmatmul.mubr.f32.gmra.mxu0 %v673
  %v1626 = vpop.f32.mrf.mxu0
  %v1627 = vadd.f32 %v225, %v1626
  %v1628 = vpop.f32.mrf.mxu0
  %1629 = vmatprep.mubr.f32.mxu0 0.0
  %1630 = vmatmul.mubr.f32.gmra.mxu0 %v676
  %v1631 = vpop.f32.mrf.mxu0
  %v1632 = vadd.f32 %v225, %v1631
  %v1633 = vpop.f32.mrf.mxu0
  %1634 = vmatprep.mubr.f32.mxu0 0.0
  %1635 = vmatmul.mubr.f32.gmra.mxu0 %v679
  %v1636 = vpop.f32.mrf.mxu0
  %v1637 = vadd.f32 %v225, %v1636
  %v1638 = vpop.f32.mrf.mxu0
  %1639 = vmatprep.mubr.f32.mxu0 0.0
  %1640 = vmatmul.mubr.f32.gmra.mxu0 %v682
  %v1641 = vpop.f32.mrf.mxu0
  %v1642 = vadd.f32 %v225, %v1641
  %v1643 = vpop.f32.mrf.mxu0
  %1644 = vmatprep.mubr.f32.mxu0 0.0
  %1645 = vmatmul.mubr.f32.gmra.mxu0 %v685
  %v1646 = vpop.f32.mrf.mxu0
  %v1647 = vadd.f32 %v225, %v1646
  %v1648 = vpop.f32.mrf.mxu0
  %1649 = vmatprep.mubr.f32.mxu0 0.0
  %1650 = vmatmul.mubr.f32.gmra.mxu0 %v688
  %v1651 = vpop.f32.mrf.mxu0
  %v1652 = vadd.f32 %v225, %v1651
  %v1653 = vpop.f32.mrf.mxu0
  %1654 = vmatprep.mubr.f32.mxu0 0.0
  %1655 = vmatmul.mubr.f32.gmra.mxu0 %v691
  %v1656 = vpop.f32.mrf.mxu0
  %v1657 = vadd.f32 %v225, %v1656
  %v1658 = vpop.f32.mrf.mxu0
  %1659 = vmatprep.mubr.f32.mxu0 0.0
  %1660 = vmatmul.mubr.f32.gmra.mxu0 %v694
  %v1661 = vpop.f32.mrf.mxu0
  %v1662 = vadd.f32 %v225, %v1661
  %v1663 = vpop.f32.mrf.mxu0
  %1664 = vmatprep.mubr.f32.mxu0 0.0
  %1665 = vmatmul.mubr.f32.gmra.mxu0 %v697
  %v1666 = vpop.f32.mrf.mxu0
  %v1667 = vadd.f32 %v225, %v1666
  %v1668 = vpop.f32.mrf.mxu0
  %1669 = vmatprep.mubr.f32.mxu0 0.0
  %1670 = vmatmul.mubr.f32.gmra.mxu0 %v700
  %v1671 = vpop.f32.mrf.mxu0
  %v1672 = vadd.f32 %v225, %v1671
  %v1673 = vpop.f32.mrf.mxu0
  %1674 = vmatprep.mubr.f32.mxu0 0.0
  %1675 = vmatmul.mubr.f32.gmra.mxu0 %v703
  %v1676 = vpop.f32.mrf.mxu0
  %v1677 = vadd.f32 %v225, %v1676
  %v1678 = vpop.f32.mrf.mxu0
  %1679 = vmatprep.mubr.f32.mxu0 0.0
  %1680 = vmatmul.mubr.f32.gmra.mxu0 %v706
  %v1681 = vpop.f32.mrf.mxu0
  %v1682 = vadd.f32 %v225, %v1681
  %v1683 = vpop.f32.mrf.mxu0
  %1684 = vmatprep.mubr.f32.mxu0 0.0
  %1685 = vmatmul.mubr.f32.gmra.mxu0 %v709
  %v1686 = vpop.f32.mrf.mxu0
  %v1687 = vadd.f32 %v225, %v1686
  %v1688 = vpop.f32.mrf.mxu0
  %1689 = vmatprep.mubr.f32.mxu0 0.0
  %1690 = vmatmul.mubr.f32.gmra.mxu0 %v712
  %v1691 = vpop.f32.mrf.mxu0
  %v1692 = vadd.f32 %v225, %v1691
  %v1693 = vpop.f32.mrf.mxu0
  %1694 = vmatprep.mubr.f32.mxu0 0.0
  %1695 = vmatmul.mubr.f32.gmra.mxu0 %v715
  %v1696 = vpop.f32.mrf.mxu0
  %v1697 = vadd.f32 %v225, %v1696
  %v1698 = vpop.f32.mrf.mxu0
  %1699 = vmatprep.mubr.f32.mxu0 0.0
  %1700 = vmatmul.mubr.f32.gmra.mxu0 %v718
  %v1701 = vpop.f32.mrf.mxu0
  %v1702 = vadd.f32 %v225, %v1701
  %v1703 = vpop.f32.mrf.mxu0
  %1704 = vmatprep.mubr.f32.mxu0 0.0
  %1705 = vmatmul.mubr.f32.gmra.mxu0 %v721
  %v1706 = vpop.f32.mrf.mxu0
  %v1707 = vadd.f32 %v225, %v1706
  %v1708 = vpop.f32.mrf.mxu0
  %1709 = vmatprep.mubr.f32.mxu0 0.0
  %1710 = vmatmul.mubr.f32.gmra.mxu0 %v724
  %v1711 = vpop.f32.mrf.mxu0
  %v1712 = vadd.f32 %v225, %v1711
  %v1713 = vpop.f32.mrf.mxu0
  %1714 = vmatprep.mubr.f32.mxu0 0.0
  %1715 = vmatmul.mubr.f32.gmra.mxu0 %v727
  %v1716 = vpop.f32.mrf.mxu0
  %v1717 = vadd.f32 %v225, %v1716
  %v1718 = vpop.f32.mrf.mxu0
  %1719 = vmatprep.mubr.f32.mxu0 0.0
  %1720 = vmatmul.mubr.f32.gmra.mxu0 %v730
  %v1721 = vpop.f32.mrf.mxu0
  %v1722 = vadd.f32 %v225, %v1721
  %v1723 = vpop.f32.mrf.mxu0
  %1724 = vmatprep.mubr.f32.mxu0 0.0
  %1725 = vmatmul.mubr.f32.gmra.mxu0 %v733
  %v1726 = vpop.f32.mrf.mxu0
  %v1727 = vadd.f32 %v225, %v1726
  %v1728 = vpop.f32.mrf.mxu0
  %1729 = vmatprep.mubr.f32.mxu0 0.0
  %1730 = vmatmul.mubr.f32.gmra.mxu0 %v736
  %v1731 = vpop.f32.mrf.mxu0
  %v1732 = vadd.f32 %v225, %v1731
  %v1733 = vpop.f32.mrf.mxu0
  %1734 = vmatprep.mubr.f32.mxu0 0.0
  %1735 = vmatmul.mubr.f32.gmra.mxu0 %v739
  %v1736 = vpop.f32.mrf.mxu0
  %v1737 = vadd.f32 %v225, %v1736
  %v1738 = vpop.f32.mrf.mxu0
  %1739 = vmatprep.mubr.f32.mxu0 0.0
  %1740 = vmatmul.mubr.f32.gmra.mxu0 %v742
  %v1741 = vpop.f32.mrf.mxu0
  %v1742 = vadd.f32 %v225, %v1741
  %v1743 = vpop.f32.mrf.mxu0
  %1744 = vmatprep.mubr.f32.mxu0 0.0
  %1745 = vmatmul.mubr.f32.gmra.mxu0 %v745
  %v1746 = vpop.f32.mrf.mxu0
  %v1747 = vadd.f32 %v225, %v1746
  %v1748 = vpop.f32.mrf.mxu0
  %1749 = vmatprep.mubr.f32.mxu0 0.0
  %1750 = vmatmul.mubr.f32.gmra.mxu0 %v748
  %v1751 = vpop.f32.mrf.mxu0
  %v1752 = vadd.f32 %v225, %v1751
  %v1753 = vpop.f32.mrf.mxu0
  %1754 = vmatprep.mubr.f32.mxu0 0.0
  %1755 = vmatmul.mubr.f32.gmra.mxu0 %v751
  %v1756 = vpop.f32.mrf.mxu0
  %v1757 = vadd.f32 %v225, %v1756
  %v1758 = vpop.f32.mrf.mxu0
  %1759 = vmatprep.mubr.f32.mxu0 0.0
  %1760 = vmatmul.mubr.f32.gmra.mxu0 %v754
  %v1761 = vpop.f32.mrf.mxu0
  %v1762 = vadd.f32 %v225, %v1761
  %v1763 = vpop.f32.mrf.mxu0
  %1764 = vmatprep.mubr.f32.mxu0 0.0
  %1765 = vmatmul.mubr.f32.gmra.mxu0 %v757
  %v1766 = vpop.f32.mrf.mxu0
  %v1767 = vadd.f32 %v225, %v1766
  %v1768 = vpop.f32.mrf.mxu0
  %1769 = vmatprep.mubr.f32.mxu0 0.0
  %1770 = vmatmul.mubr.f32.gmra.mxu0 %v760
  %v1771 = vpop.f32.mrf.mxu0
  %v1772 = vadd.f32 %v225, %v1771
  %v1773 = vpop.f32.mrf.mxu0
  %1774 = vmatprep.mubr.f32.mxu0 0.0
  %1775 = vmatmul.mubr.f32.gmra.mxu0 %v763
  %v1776 = vpop.f32.mrf.mxu0
  %v1777 = vadd.f32 %v225, %v1776
  %v1778 = vpop.f32.mrf.mxu0
  %1779 = vmatprep.mubr.f32.mxu0 0.0
  %1780 = vmatmul.mubr.f32.gmra.mxu0 %v766
  %v1781 = vpop.f32.mrf.mxu0
  %v1782 = vadd.f32 %v225, %v1781
  %v1783 = vpop.f32.mrf.mxu0
  %1784 = vmatprep.mubr.f32.mxu0 0.0
  %1785 = vmatmul.mubr.f32.gmra.mxu0 %v769
  %v1786 = vpop.f32.mrf.mxu0
  %v1787 = vadd.f32 %v225, %v1786
  %v1788 = vpop.f32.mrf.mxu0
  %1789 = vmatprep.mubr.f32.mxu0 0.0
  %1790 = vmatmul.mubr.f32.gmra.mxu0 %v772
  %v1791 = vpop.f32.mrf.mxu0
  %v1792 = vadd.f32 %v225, %v1791
  %v1793 = vpop.f32.mrf.mxu0
  %1794 = vmatprep.mubr.f32.mxu0 0.0
  %1795 = vmatmul.mubr.f32.gmra.mxu0 %v775
  %v1796 = vpop.f32.mrf.mxu0
  %v1797 = vadd.f32 %v225, %v1796
  %v1798 = vpop.f32.mrf.mxu0
  %1799 = vmatprep.mubr.f32.mxu0 0.0
  %1800 = vmatmul.mubr.f32.gmra.mxu0 %v778
  %v1801 = vpop.f32.mrf.mxu0
  %v1802 = vadd.f32 %v225, %v1801
  %v1803 = vpop.f32.mrf.mxu0
  %1804 = vmatprep.mubr.f32.mxu0 0.0
  %1805 = vmatmul.mubr.f32.gmra.mxu0 %v781
  %v1806 = vpop.f32.mrf.mxu0
  %v1807 = vadd.f32 %v225, %v1806
  %v1808 = vpop.f32.mrf.mxu0
  %1809 = vmatprep.mubr.f32.mxu0 0.0
  %1810 = vmatmul.mubr.f32.gmra.mxu0 %v784
  %v1811 = vpop.f32.mrf.mxu0
  %v1812 = vadd.f32 %v225, %v1811
  %v1813 = vpop.f32.mrf.mxu0
  %1814 = vmatprep.mubr.f32.mxu0 0.0
  %1815 = vmatmul.mubr.f32.gmra.mxu0 %v787
  %v1816 = vpop.f32.mrf.mxu0
  %v1817 = vadd.f32 %v225, %v1816
  %v1818 = vpop.f32.mrf.mxu0
  %1819 = vmatprep.mubr.f32.mxu0 0.0
  %1820 = vmatmul.mubr.f32.gmra.mxu0 %v790
  %v1821 = vpop.f32.mrf.mxu0
  %v1822 = vadd.f32 %v225, %v1821
  %v1823 = vpop.f32.mrf.mxu0
  %1824 = vmatprep.mubr.f32.mxu0 0.0
  %1825 = vmatmul.mubr.f32.gmra.mxu0 %v793
  %v1826 = vpop.f32.mrf.mxu0
  %v1827 = vadd.f32 %v225, %v1826
  %v1828 = vpop.f32.mrf.mxu0
  %1829 = vmatprep.mubr.f32.mxu0 0.0
  %1830 = vmatmul.mubr.f32.gmra.mxu0 %v796
  %v1831 = vpop.f32.mrf.mxu0
  %v1832 = vadd.f32 %v225, %v1831
  %v1833 = vpop.f32.mrf.mxu0
  %1834 = vmatprep.mubr.f32.mxu0 0.0
  %1835 = vmatmul.mubr.f32.gmra.mxu0 %v799
  %v1836 = vpop.f32.mrf.mxu0
  %v1837 = vadd.f32 %v225, %v1836
  %v1838 = vpop.f32.mrf.mxu0
  %1839 = vmatprep.mubr.f32.mxu0 0.0
  %1840 = vmatmul.mubr.f32.gmra.mxu0 %v802
  %v1841 = vpop.f32.mrf.mxu0
  %v1842 = vadd.f32 %v225, %v1841
  %v1843 = vpop.f32.mrf.mxu0
  %1844 = vmatprep.mubr.f32.mxu0 0.0
  %1845 = vmatmul.mubr.f32.gmra.mxu0 %v805
  %v1846 = vpop.f32.mrf.mxu0
  %v1847 = vadd.f32 %v225, %v1846
  %v1848 = vpop.f32.mrf.mxu0
  %1849 = vmatprep.mubr.f32.mxu0 0.0
  %1850 = vmatmul.mubr.f32.gmra.mxu0 %v808
  %v1851 = vpop.f32.mrf.mxu0
  %v1852 = vadd.f32 %v225, %v1851
  %v1853 = vpop.f32.mrf.mxu0
  %1854 = vmatprep.mubr.f32.mxu0 0.0
  %1855 = vmatmul.mubr.f32.gmra.mxu0 %v811
  %v1856 = vpop.f32.mrf.mxu0
  %v1857 = vadd.f32 %v225, %v1856
  %v1858 = vpop.f32.mrf.mxu0
  %1859 = vmatprep.mubr.f32.mxu0 0.0
  %1860 = vmatmul.mubr.f32.gmra.mxu0 %v814
  %v1861 = vpop.f32.mrf.mxu0
  %v1862 = vadd.f32 %v225, %v1861
  %v1863 = vpop.f32.mrf.mxu0
  %1864 = vdwg.mxu0
  %v1865 = vmax.f32 %v887, 0.0
  %v1866 = vmax.f32 %v892, 0.0
  %v1867 = vmax.f32 %v897, 0.0
  %v1868 = vmax.f32 %v902, 0.0
  %v1869 = vmax.f32 %v907, 0.0
  %v1870 = vmax.f32 %v912, 0.0
  %v1871 = vmax.f32 %v917, 0.0
  %v1872 = vmax.f32 %v922, 0.0
  %v1873 = vmax.f32 %v927, 0.0
  %v1874 = vmax.f32 %v932, 0.0
  %v1875 = vmax.f32 %v937, 0.0
  %v1876 = vmax.f32 %v942, 0.0
  %v1877 = vmax.f32 %v947, 0.0
  %v1878 = vmax.f32 %v952, 0.0
  %v1879 = vmax.f32 %v957, 0.0
  %v1880 = vmax.f32 %v962, 0.0
  %v1881 = vmax.f32 %v967, 0.0
  %v1882 = vmax.f32 %v972, 0.0
  %v1883 = vmax.f32 %v977, 0.0
  %v1884 = vmax.f32 %v982, 0.0
  %v1885 = vmax.f32 %v987, 0.0
  %v1886 = vmax.f32 %v992, 0.0
  %v1887 = vmax.f32 %v997, 0.0
  %v1888 = vmax.f32 %v1002, 0.0
  %v1889 = vmax.f32 %v1007, 0.0
  %v1890 = vmax.f32 %v1012, 0.0
  %v1891 = vmax.f32 %v1017, 0.0
  %v1892 = vmax.f32 %v1022, 0.0
  %v1893 = vmax.f32 %v1027, 0.0
  %v1894 = vmax.f32 %v1032, 0.0
  %v1895 = vmax.f32 %v1037, 0.0
  %v1896 = vmax.f32 %v1042, 0.0
  %v1897 = vmax.f32 %v1047, 0.0
  %v1898 = vmax.f32 %v1052, 0.0
  %v1899 = vmax.f32 %v1057, 0.0
  %v1900 = vmax.f32 %v1062, 0.0
  %v1901 = vmax.f32 %v1067, 0.0
  %v1902 = vmax.f32 %v1072, 0.0
  %v1903 = vmax.f32 %v1077, 0.0
  %v1904 = vmax.f32 %v1082, 0.0
  %v1905 = vmax.f32 %v1087, 0.0
  %v1906 = vmax.f32 %v1092, 0.0
  %v1907 = vmax.f32 %v1097, 0.0
  %v1908 = vmax.f32 %v1102, 0.0
  %v1909 = vmax.f32 %v1107, 0.0
  %v1910 = vmax.f32 %v1112, 0.0
  %v1911 = vmax.f32 %v1117, 0.0
  %v1912 = vmax.f32 %v1122, 0.0
  %v1913 = vmax.f32 %v1127, 0.0
  %v1914 = vmax.f32 %v1132, 0.0
  %v1915 = vmax.f32 %v1137, 0.0
  %v1916 = vmax.f32 %v1142, 0.0
  %v1917 = vmax.f32 %v1147, 0.0
  %v1918 = vmax.f32 %v1152, 0.0
  %v1919 = vmax.f32 %v1157, 0.0
  %v1920 = vmax.f32 %v1162, 0.0
  %v1921 = vmax.f32 %v1167, 0.0
  %v1922 = vmax.f32 %v1172, 0.0
  %v1923 = vmax.f32 %v1177, 0.0
  %v1924 = vmax.f32 %v1182, 0.0
  %v1925 = vmax.f32 %v1187, 0.0
  %v1926 = vmax.f32 %v1192, 0.0
  %v1927 = vmax.f32 %v1197, 0.0
  %v1928 = vmax.f32 %v1202, 0.0
  %v1929 = vmax.f32 %v1207, 0.0
  %v1930 = vmax.f32 %v1212, 0.0
  %v1931 = vmax.f32 %v1217, 0.0
  %v1932 = vmax.f32 %v1222, 0.0
  %v1933 = vmax.f32 %v1227, 0.0
  %v1934 = vmax.f32 %v1232, 0.0
  %v1935 = vmax.f32 %v1237, 0.0
  %v1936 = vmax.f32 %v1242, 0.0
  %v1937 = vmax.f32 %v1247, 0.0
  %v1938 = vmax.f32 %v1252, 0.0
  %v1939 = vmax.f32 %v1257, 0.0
  %v1940 = vmax.f32 %v1262, 0.0
  %v1941 = vmax.f32 %v1267, 0.0
  %v1942 = vmax.f32 %v1272, 0.0
  %v1943 = vmax.f32 %v1277, 0.0
  %v1944 = vmax.f32 %v1282, 0.0
  %v1945 = vmax.f32 %v1287, 0.0
  %v1946 = vmax.f32 %v1292, 0.0
  %v1947 = vmax.f32 %v1297, 0.0
  %v1948 = vmax.f32 %v1302, 0.0
  %v1949 = vmax.f32 %v1307, 0.0
  %v1950 = vmax.f32 %v1312, 0.0
  %v1951 = vmax.f32 %v1317, 0.0
  %v1952 = vmax.f32 %v1322, 0.0
  %v1953 = vmax.f32 %v1327, 0.0
  %v1954 = vmax.f32 %v1332, 0.0
  %v1955 = vmax.f32 %v1337, 0.0
  %v1956 = vmax.f32 %v1342, 0.0
  %v1957 = vmax.f32 %v1347, 0.0
  %v1958 = vmax.f32 %v1352, 0.0
  %v1959 = vmax.f32 %v1357, 0.0
  %v1960 = vmax.f32 %v1362, 0.0
  %v1961 = vmax.f32 %v1367, 0.0
  %v1962 = vmax.f32 %v1372, 0.0
  %v1963 = vmax.f32 %v1377, 0.0
  %v1964 = vmax.f32 %v1382, 0.0
  %v1965 = vmax.f32 %v1387, 0.0
  %v1966 = vmax.f32 %v1392, 0.0
  %v1967 = vmax.f32 %v1397, 0.0
  %v1968 = vmax.f32 %v1402, 0.0
  %v1969 = vmax.f32 %v1407, 0.0
  %v1970 = vmax.f32 %v1412, 0.0
  %v1971 = vmax.f32 %v1417, 0.0
  %v1972 = vmax.f32 %v1422, 0.0
  %v1973 = vmax.f32 %v1427, 0.0
  %v1974 = vmax.f32 %v1432, 0.0
  %v1975 = vmax.f32 %v1437, 0.0
  %v1976 = vmax.f32 %v1442, 0.0
  %v1977 = vmax.f32 %v1447, 0.0
  %v1978 = vmax.f32 %v1452, 0.0
  %v1979 = vmax.f32 %v1457, 0.0
  %v1980 = vmax.f32 %v1462, 0.0
  %v1981 = vmax.f32 %v1467, 0.0
  %v1982 = vmax.f32 %v1472, 0.0
  %v1983 = vmax.f32 %v1477, 0.0
  %v1984 = vmax.f32 %v1482, 0.0
  %v1985 = vmax.f32 %v1487, 0.0
  %v1986 = vmax.f32 %v1492, 0.0
  %v1987 = vmax.f32 %v1497, 0.0
  %v1988 = vmax.f32 %v1502, 0.0
  %v1989 = vmax.f32 %v1507, 0.0
  %v1990 = vmax.f32 %v1512, 0.0
  %v1991 = vmax.f32 %v1517, 0.0
  %v1992 = vmax.f32 %v1522, 0.0
  %v1993 = vmax.f32 %v1527, 0.0
  %v1994 = vmax.f32 %v1532, 0.0
  %v1995 = vmax.f32 %v1537, 0.0
  %v1996 = vmax.f32 %v1542, 0.0
  %v1997 = vmax.f32 %v1547, 0.0
  %v1998 = vmax.f32 %v1552, 0.0
  %v1999 = vmax.f32 %v1557, 0.0
  %v2000 = vmax.f32 %v1562, 0.0
  %v2001 = vmax.f32 %v1567, 0.0
  %v2002 = vmax.f32 %v1572, 0.0
  %v2003 = vmax.f32 %v1577, 0.0
  %v2004 = vmax.f32 %v1582, 0.0
  %v2005 = vmax.f32 %v1587, 0.0
  %v2006 = vmax.f32 %v1592, 0.0
  %v2007 = vmax.f32 %v1597, 0.0
  %v2008 = vmax.f32 %v1602, 0.0
  %v2009 = vmax.f32 %v1607, 0.0
  %v2010 = vmax.f32 %v1612, 0.0
  %v2011 = vmax.f32 %v1617, 0.0
  %v2012 = vmax.f32 %v1622, 0.0
  %v2013 = vmax.f32 %v1627, 0.0
  %v2014 = vmax.f32 %v1632, 0.0
  %v2015 = vmax.f32 %v1637, 0.0
  %v2016 = vmax.f32 %v1642, 0.0
  %v2017 = vmax.f32 %v1647, 0.0
  %v2018 = vmax.f32 %v1652, 0.0
  %v2019 = vmax.f32 %v1657, 0.0
  %v2020 = vmax.f32 %v1662, 0.0
  %v2021 = vmax.f32 %v1667, 0.0
  %v2022 = vmax.f32 %v1672, 0.0
  %v2023 = vmax.f32 %v1677, 0.0
  %v2024 = vmax.f32 %v1682, 0.0
  %v2025 = vmax.f32 %v1687, 0.0
  %v2026 = vmax.f32 %v1692, 0.0
  %v2027 = vmax.f32 %v1697, 0.0
  %v2028 = vmax.f32 %v1702, 0.0
  %v2029 = vmax.f32 %v1707, 0.0
  %v2030 = vmax.f32 %v1712, 0.0
  %v2031 = vmax.f32 %v1717, 0.0
  %v2032 = vmax.f32 %v1722, 0.0
  %v2033 = vmax.f32 %v1727, 0.0
  %v2034 = vmax.f32 %v1732, 0.0
  %v2035 = vmax.f32 %v1737, 0.0
  %v2036 = vmax.f32 %v1742, 0.0
  %v2037 = vmax.f32 %v1747, 0.0
  %v2038 = vmax.f32 %v1752, 0.0
  %v2039 = vmax.f32 %v1757, 0.0
  %v2040 = vmax.f32 %v1762, 0.0
  %v2041 = vmax.f32 %v1767, 0.0
  %v2042 = vmax.f32 %v1772, 0.0
  %v2043 = vmax.f32 %v1777, 0.0
  %v2044 = vmax.f32 %v1782, 0.0
  %v2045 = vmax.f32 %v1787, 0.0
  %v2046 = vmax.f32 %v1792, 0.0
  %v2047 = vmax.f32 %v1797, 0.0
  %v2048 = vmax.f32 %v1802, 0.0
  %v2049 = vmax.f32 %v1807, 0.0
  %v2050 = vmax.f32 %v1812, 0.0
  %v2051 = vmax.f32 %v1817, 0.0
  %v2052 = vmax.f32 %v1822, 0.0
  %v2053 = vmax.f32 %v1827, 0.0
  %v2054 = vmax.f32 %v1832, 0.0
  %v2055 = vmax.f32 %v1837, 0.0
  %v2056 = vmax.f32 %v1842, 0.0
  %v2057 = vmax.f32 %v1847, 0.0
  %v2058 = vmax.f32 %v1852, 0.0
  %v2059 = vmax.f32 %v1857, 0.0
  %v2060 = vmax.f32 %v1862, 0.0
  %v2061 = vmax.f32 %v1865, %v1914
  %v2062 = vmax.f32 %v1866, %v1915
  %v2063 = vmax.f32 %v1867, %v1916
  %v2064 = vmax.f32 %v1868, %v1917
  %v2065 = vmax.f32 %v1869, %v1918
  %v2066 = vmax.f32 %v1870, %v1919
  %v2067 = vmax.f32 %v1871, %v1920
  %v2068 = vmax.f32 %v1872, %v1921
  %v2069 = vmax.f32 %v1873, %v1922
  %v2070 = vmax.f32 %v1874, %v1923
  %v2071 = vmax.f32 %v1875, %v1924
  %v2072 = vmax.f32 %v1876, %v1925
  %v2073 = vmax.f32 %v1877, %v1926
  %v2074 = vmax.f32 %v1878, %v1927
  %v2075 = vmax.f32 %v1879, %v1928
  %v2076 = vmax.f32 %v1880, %v1929
  %v2077 = vmax.f32 %v1881, %v1930
  %v2078 = vmax.f32 %v1882, %v1931
  %v2079 = vmax.f32 %v1883, %v1932
  %v2080 = vmax.f32 %v1884, %v1933
  %v2081 = vmax.f32 %v1885, %v1934
  %v2082 = vmax.f32 %v1886, %v1935
  %v2083 = vmax.f32 %v1887, %v1936
  %v2084 = vmax.f32 %v1888, %v1937
  %v2085 = vmax.f32 %v1889, %v1938
  %v2086 = vmax.f32 %v1890, %v1939
  %v2087 = vmax.f32 %v1891, %v1940
  %v2088 = vmax.f32 %v1892, %v1941
  %v2089 = vmax.f32 %v1893, %v1942
  %v2090 = vmax.f32 %v1894, %v1943
  %v2091 = vmax.f32 %v1895, %v1944
  %v2092 = vmax.f32 %v1896, %v1945
  %v2093 = vmax.f32 %v1897, %v1946
  %v2094 = vmax.f32 %v1898, %v1947
  %v2095 = vmax.f32 %v1899, %v1948
  %v2096 = vmax.f32 %v1900, %v1949
  %v2097 = vmax.f32 %v1901, %v1950
  %v2098 = vmax.f32 %v1902, %v1951
  %v2099 = vmax.f32 %v1903, %v1952
  %v2100 = vmax.f32 %v1904, %v1953
  %v2101 = vmax.f32 %v1905, %v1954
  %v2102 = vmax.f32 %v1906, %v1955
  %v2103 = vmax.f32 %v1907, %v1956
  %v2104 = vmax.f32 %v1908, %v1957
  %v2105 = vmax.f32 %v1909, %v1958
  %v2106 = vmax.f32 %v1910, %v1959
  %v2107 = vmax.f32 %v1911, %v1960
  %v2108 = vmax.f32 %v1912, %v1961
  %v2109 = vmax.f32 %v1913, %v1962
  %v2110 = vmax.f32 %v1963, %v2012
  %v2111 = vmax.f32 %v1964, %v2013
  %v2112 = vmax.f32 %v1965, %v2014
  %v2113 = vmax.f32 %v1966, %v2015
  %v2114 = vmax.f32 %v1967, %v2016
  %v2115 = vmax.f32 %v1968, %v2017
  %v2116 = vmax.f32 %v1969, %v2018
  %v2117 = vmax.f32 %v1970, %v2019
  %v2118 = vmax.f32 %v1971, %v2020
  %v2119 = vmax.f32 %v1972, %v2021
  %v2120 = vmax.f32 %v1973, %v2022
  %v2121 = vmax.f32 %v1974, %v2023
  %v2122 = vmax.f32 %v1975, %v2024
  %v2123 = vmax.f32 %v1976, %v2025
  %v2124 = vmax.f32 %v1977, %v2026
  %v2125 = vmax.f32 %v1978, %v2027
  %v2126 = vmax.f32 %v1979, %v2028
  %v2127 = vmax.f32 %v1980, %v2029
  %v2128 = vmax.f32 %v1981, %v2030
  %v2129 = vmax.f32 %v1982, %v2031
  %v2130 = vmax.f32 %v1983, %v2032
  %v2131 = vmax.f32 %v1984, %v2033
  %v2132 = vmax.f32 %v1985, %v2034
  %v2133 = vmax.f32 %v1986, %v2035
  %v2134 = vmax.f32 %v1987, %v2036
  %v2135 = vmax.f32 %v1988, %v2037
  %v2136 = vmax.f32 %v1989, %v2038
  %v2137 = vmax.f32 %v1990, %v2039
  %v2138 = vmax.f32 %v1991, %v2040
  %v2139 = vmax.f32 %v1992, %v2041
  %v2140 = vmax.f32 %v1993, %v2042
  %v2141 = vmax.f32 %v1994, %v2043
  %v2142 = vmax.f32 %v1995, %v2044
  %v2143 = vmax.f32 %v1996, %v2045
  %v2144 = vmax.f32 %v1997, %v2046
  %v2145 = vmax.f32 %v1998, %v2047
  %v2146 = vmax.f32 %v1999, %v2048
  %v2147 = vmax.f32 %v2000, %v2049
  %v2148 = vmax.f32 %v2001, %v2050
  %v2149 = vmax.f32 %v2002, %v2051
  %v2150 = vmax.f32 %v2003, %v2052
  %v2151 = vmax.f32 %v2004, %v2053
  %v2152 = vmax.f32 %v2005, %v2054
  %v2153 = vmax.f32 %v2006, %v2055
  %v2154 = vmax.f32 %v2007, %v2056
  %v2155 = vmax.f32 %v2008, %v2057
  %v2156 = vmax.f32 %v2009, %v2058
  %v2157 = vmax.f32 %v2010, %v2059
  %v2158 = vmax.f32 %v2011, %v2060
  %v2159 = vmax.f32 %v2061, %v2110
  %v2160 = vmax.f32 %v2062, %v2111
  %v2161 = vmax.f32 %v2063, %v2112
  %v2162 = vmax.f32 %v2064, %v2113
  %v2163 = vmax.f32 %v2065, %v2114
  %v2164 = vmax.f32 %v2066, %v2115
  %v2165 = vmax.f32 %v2067, %v2116
  %v2166 = vmax.f32 %v2068, %v2117
  %v2167 = vmax.f32 %v2069, %v2118
  %v2168 = vmax.f32 %v2070, %v2119
  %v2169 = vmax.f32 %v2071, %v2120
  %v2170 = vmax.f32 %v2072, %v2121
  %v2171 = vmax.f32 %v2073, %v2122
  %v2172 = vmax.f32 %v2074, %v2123
  %v2173 = vmax.f32 %v2075, %v2124
  %v2174 = vmax.f32 %v2076, %v2125
  %v2175 = vmax.f32 %v2077, %v2126
  %v2176 = vmax.f32 %v2078, %v2127
  %v2177 = vmax.f32 %v2079, %v2128
  %v2178 = vmax.f32 %v2080, %v2129
  %v2179 = vmax.f32 %v2081, %v2130
  %v2180 = vmax.f32 %v2082, %v2131
  %v2181 = vmax.f32 %v2083, %v2132
  %v2182 = vmax.f32 %v2084, %v2133
  %v2183 = vmax.f32 %v2085, %v2134
  %v2184 = vmax.f32 %v2086, %v2135
  %v2185 = vmax.f32 %v2087, %v2136
  %v2186 = vmax.f32 %v2088, %v2137
  %v2187 = vmax.f32 %v2089, %v2138
  %v2188 = vmax.f32 %v2090, %v2139
  %v2189 = vmax.f32 %v2091, %v2140
  %v2190 = vmax.f32 %v2092, %v2141
  %v2191 = vmax.f32 %v2093, %v2142
  %v2192 = vmax.f32 %v2094, %v2143
  %v2193 = vmax.f32 %v2095, %v2144
  %v2194 = vmax.f32 %v2096, %v2145
  %v2195 = vmax.f32 %v2097, %v2146
  %v2196 = vmax.f32 %v2098, %v2147
  %v2197 = vmax.f32 %v2099, %v2148
  %v2198 = vmax.f32 %v2100, %v2149
  %v2199 = vmax.f32 %v2101, %v2150
  %v2200 = vmax.f32 %v2102, %v2151
  %v2201 = vmax.f32 %v2103, %v2152
  %v2202 = vmax.f32 %v2104, %v2153
  %v2203 = vmax.f32 %v2105, %v2154
  %v2204 = vmax.f32 %v2106, %v2155
  %v2205 = vmax.f32 %v2107, %v2156
  %v2206 = vmax.f32 %v2108, %v2157
  %v2207 = vmax.f32 %v2109, %v2158
  %vm2208 = vcmask 48128
  %2209 = vst.msk [vmem:[%s3] sm:$0xff] %vm2208, %v2159
  %2210 = vst.msk [vmem:[%s3 + $0x8] sm:$0xff] %vm2208, %v2160
  %2211 = vst.msk [vmem:[%s3 + $0x10] sm:$0xff] %vm2208, %v2161
  %2212 = vst.msk [vmem:[%s3 + $0x18] sm:$0xff] %vm2208, %v2162
  %2213 = vst.msk [vmem:[%s3 + $0x20] sm:$0xff] %vm2208, %v2163
  %2214 = vst.msk [vmem:[%s3 + $0x28] sm:$0xff] %vm2208, %v2164
  %2215 = vst.msk [vmem:[%s3 + $0x30] sm:$0xff] %vm2208, %v2165
  %2216 = vst.msk [vmem:[%s3 + $0x38] sm:$0xff] %vm2208, %v2166
  %2217 = vst.msk [vmem:[%s3 + $0x40] sm:$0xff] %vm2208, %v2167
  %2218 = vst.msk [vmem:[%s3 + $0x48] sm:$0xff] %vm2208, %v2168
  %2219 = vst.msk [vmem:[%s3 + $0x50] sm:$0xff] %vm2208, %v2169
  %2220 = vst.msk [vmem:[%s3 + $0x58] sm:$0xff] %vm2208, %v2170
  %2221 = vst.msk [vmem:[%s3 + $0x60] sm:$0xff] %vm2208, %v2171
  %2222 = vst.msk [vmem:[%s3 + $0x68] sm:$0xff] %vm2208, %v2172
  %2223 = vst.msk [vmem:[%s3 + $0x70] sm:$0xff] %vm2208, %v2173
  %2224 = vst.msk [vmem:[%s3 + $0x78] sm:$0xff] %vm2208, %v2174
  %2225 = vst.msk [vmem:[%s3 + $0x80] sm:$0xff] %vm2208, %v2175
  %2226 = vst.msk [vmem:[%s3 + $0x88] sm:$0xff] %vm2208, %v2176
  %2227 = vst.msk [vmem:[%s3 + $0x90] sm:$0xff] %vm2208, %v2177
  %2228 = vst.msk [vmem:[%s3 + $0x98] sm:$0xff] %vm2208, %v2178
  %2229 = vst.msk [vmem:[%s3 + $0xa0] sm:$0xff] %vm2208, %v2179
  %2230 = vst.msk [vmem:[%s3 + $0xa8] sm:$0xff] %vm2208, %v2180
  %2231 = vst.msk [vmem:[%s3 + $0xb0] sm:$0xff] %vm2208, %v2181
  %2232 = vst.msk [vmem:[%s3 + $0xb8] sm:$0xff] %vm2208, %v2182
  %2233 = vst.msk [vmem:[%s3 + $0xc0] sm:$0xff] %vm2208, %v2183
  %2234 = vst.msk [vmem:[%s3 + $0xc8] sm:$0xff] %vm2208, %v2184
  %2235 = vst.msk [vmem:[%s3 + $0xd0] sm:$0xff] %vm2208, %v2185
  %2236 = vst.msk [vmem:[%s3 + $0xd8] sm:$0xff] %vm2208, %v2186
  %2237 = vst.msk [vmem:[%s3 + $0xe0] sm:$0xff] %vm2208, %v2187
  %2238 = vst.msk [vmem:[%s3 + $0xe8] sm:$0xff] %vm2208, %v2188
  %2239 = vst.msk [vmem:[%s3 + $0xf0] sm:$0xff] %vm2208, %v2189
  %2240 = vst.msk [vmem:[%s3 + $0xf8] sm:$0xff] %vm2208, %v2190
  %2241 = vst.msk [vmem:[%s3 + $0x100] sm:$0xff] %vm2208, %v2191
  %2242 = vst.msk [vmem:[%s3 + $0x108] sm:$0xff] %vm2208, %v2192
  %2243 = vst.msk [vmem:[%s3 + $0x110] sm:$0xff] %vm2208, %v2193
  %2244 = vst.msk [vmem:[%s3 + $0x118] sm:$0xff] %vm2208, %v2194
  %2245 = vst.msk [vmem:[%s3 + $0x120] sm:$0xff] %vm2208, %v2195
  %2246 = vst.msk [vmem:[%s3 + $0x128] sm:$0xff] %vm2208, %v2196
  %2247 = vst.msk [vmem:[%s3 + $0x130] sm:$0xff] %vm2208, %v2197
  %2248 = vst.msk [vmem:[%s3 + $0x138] sm:$0xff] %vm2208, %v2198
  %2249 = vst.msk [vmem:[%s3 + $0x140] sm:$0xff] %vm2208, %v2199
  %2250 = vst.msk [vmem:[%s3 + $0x148] sm:$0xff] %vm2208, %v2200
  %2251 = vst.msk [vmem:[%s3 + $0x150] sm:$0xff] %vm2208, %v2201
  %2252 = vst.msk [vmem:[%s3 + $0x158] sm:$0xff] %vm2208, %v2202
  %2253 = vst.msk [vmem:[%s3 + $0x160] sm:$0xff] %vm2208, %v2203
  %2254 = vst.msk [vmem:[%s3 + $0x168] sm:$0xff] %vm2208, %v2204
  %2255 = vst.msk [vmem:[%s3 + $0x170] sm:$0xff] %vm2208, %v2205
  %2256 = vst.msk [vmem:[%s3 + $0x178] sm:$0xff] %vm2208, %v2206
  %2257 = vst.msk [vmem:[%s3 + $0x180] sm:$0xff] %vm2208, %v2207
  // Predicated region
  $region14: #{cnn_forward.3} parent=0 // pred_check
    _
  $region15: #{cnn_forward.3} parent=0 // pred_check_branch
    %2259 = sbr.rel (0) target = $region17
  $region16: #{cnn_forward.3} parent=0 // pred_region
    _
  $region17: #{cnn_forward.3} parent=0 // pred_fallthru
    _
  // Predicated region
  $region18: #{cnn_forward.3} parent=0 // pred_check
    _
  $region19: #{cnn_forward.3} parent=0 // pred_check_branch
    %2261 = sbr.rel (0) target = $region21
  $region20: #{cnn_forward.3} parent=0 // pred_region
    _
  $region21: #{cnn_forward.3} parent=0 // pred_fallthru
    _

// kernel: cnn_forward.4
$region0: #{cnn_forward.4}
  #allocation0 [shape = 'u32[]', space=smem, size = 0x4, offset = 0x4, fixed_abs, tag = 'smem constant byte address 0x4 - core index']
  #allocation1 [shape = 'u32[144,128]{1,0:T(1,128)}', space=vmem, size = 0x12000, scoped, tag = 'internal scratch']
  %s0 = inlined_call_operand.vmem [shape: f32[4,56,150], index: 0, kind: input, shape index: {}]
  %s1 = inlined_call_operand.vmem [shape: f32[150,16], index: 1, kind: input, shape index: {}]
  %s2 = inlined_call_operand.vmem [shape: f32[1,16], index: 2, kind: input, shape index: {}]
  %s3 = inlined_call_operand.vmem [shape: f32[56,16], index: 3, kind: output, shape index: {}]
  %s4 = sld [smem:[#allocation0]]
  $region22: #{cnn_forward.4} parent=0
    _
  %s6 = ssub.s32 1, %s4
  %s7 = scalar_select 0, %s6, %s4
  // Predicated region
  $region2: #{cnn_forward.4} parent=0 // pred_check
    _
  $region3: #{cnn_forward.4} parent=0 // pred_check_branch
    %9 = sbr.rel (0) target = $region5
  $region4: #{cnn_forward.4} parent=0 // pred_region
    _
  $region5: #{cnn_forward.4} parent=0 // pred_fallthru
    _
  // Predicated region
  $region6: #{cnn_forward.4} parent=0 // pred_check
    _
  $region7: #{cnn_forward.4} parent=0 // pred_check_branch
    %11 = sbr.rel (0) target = $region9
  $region8: #{cnn_forward.4} parent=0 // pred_region
    _
  $region9: #{cnn_forward.4} parent=0 // pred_fallthru
    _
  // Predicated region
  $region10: #{cnn_forward.4} parent=0 // pred_check
    _
  $region11: #{cnn_forward.4} parent=0 // pred_check_branch
    %13 = sbr.rel (0) target = $region13
  $region12: #{cnn_forward.4} parent=0 // pred_region
    _
  $region13: #{cnn_forward.4} parent=0 // pred_fallthru
    _
  %v14 = vld [vmem:[%s0] sm:$0xff]
  %v15 = vld [vmem:[%s0 + $0x8] sm:$0xff]
  %v16 = vld [vmem:[%s0 + $0x10] sm:$0xff]
  %v17 = vld [vmem:[%s0 + $0x18] sm:$0xff]
  %v18 = vld [vmem:[%s0 + $0x20] sm:$0xff]
  %v19 = vld [vmem:[%s0 + $0x28] sm:$0xff]
  %v20 = vld [vmem:[%s0 + $0x30] sm:$0xff]
  %v21 = vld [vmem:[%s0 + $0x38] sm:$0xff]
  %v22 = vld [vmem:[%s0 + $0x40] sm:$0xff]
  %v23 = vld [vmem:[%s0 + $0x48] sm:$0xff]
  %v24 = vld [vmem:[%s0 + $0x50] sm:$0xff]
  %v25 = vld [vmem:[%s0 + $0x58] sm:$0xff]
  %v26 = vld [vmem:[%s0 + $0x60] sm:$0xff]
  %v27 = vld [vmem:[%s0 + $0x68] sm:$0xff]
  %v28 = vld [vmem:[%s0 + $0x70] sm:$0xff]
  %v29 = vld [vmem:[%s0 + $0x78] sm:$0xff]
  %v30 = vld [vmem:[%s0 + $0x80] sm:$0xff]
  %v31 = vld [vmem:[%s0 + $0x88] sm:$0xff]
  %v32 = vld [vmem:[%s0 + $0x90] sm:$0xff]
  %v33 = vld [vmem:[%s0 + $0x98] sm:$0xff]
  %v34 = vld [vmem:[%s0 + $0xa0] sm:$0xff]
  %v35 = vld [vmem:[%s0 + $0xa8] sm:$0xff]
  %v36 = vld [vmem:[%s0 + $0xb0] sm:$0xff]
  %v37 = vld [vmem:[%s0 + $0xb8] sm:$0xff]
  %v38 = vld [vmem:[%s0 + $0xc0] sm:$0xff]
  %v39 = vld [vmem:[%s0 + $0xc8] sm:$0xff]
  %v40 = vld [vmem:[%s0 + $0xd0] sm:$0xff]
  %v41 = vld [vmem:[%s0 + $0xd8] sm:$0xff]
  %v42 = vld [vmem:[%s0 + $0xe0] sm:$0xff]
  %v43 = vld [vmem:[%s0 + $0xe8] sm:$0xff]
  %v44 = vld [vmem:[%s0 + $0xf0] sm:$0xff]
  %v45 = vld [vmem:[%s0 + $0xf8] sm:$0xff]
  %v46 = vld [vmem:[%s0 + $0x100] sm:$0xff]
  %v47 = vld [vmem:[%s0 + $0x108] sm:$0xff]
  %v48 = vld [vmem:[%s0 + $0x110] sm:$0xff]
  %v49 = vld [vmem:[%s0 + $0x118] sm:$0xff]
  %v50 = vld [vmem:[%s0 + $0x120] sm:$0xff]
  %v51 = vld [vmem:[%s0 + $0x128] sm:$0xff]
  %v52 = vld [vmem:[%s0 + $0x130] sm:$0xff]
  %v53 = vld [vmem:[%s0 + $0x138] sm:$0xff]
  %v54 = vld [vmem:[%s0 + $0x140] sm:$0xff]
  %v55 = vld [vmem:[%s0 + $0x148] sm:$0xff]
  %v56 = vld [vmem:[%s0 + $0x150] sm:$0xff]
  %v57 = vld [vmem:[%s0 + $0x158] sm:$0xff]
  %v58 = vld [vmem:[%s0 + $0x160] sm:$0xff]
  %v59 = vld [vmem:[%s0 + $0x168] sm:$0xff]
  %v60 = vld [vmem:[%s0 + $0x170] sm:$0xff]
  %v61 = vld [vmem:[%s0 + $0x178] sm:$0xff]
  %v62 = vld [vmem:[%s0 + $0x180] sm:$0xff]
  %v63 = vld [vmem:[%s0 + $0x188] sm:$0xff]
  %v64 = vld [vmem:[%s0 + $0x190] sm:$0xff]
  %v65 = vld [vmem:[%s0 + $0x198] sm:$0xff]
  %v66 = vld [vmem:[%s0 + $0x1a0] sm:$0xff]
  %v67 = vld [vmem:[%s0 + $0x1a8] sm:$0xff]
  %v68 = vld [vmem:[%s0 + $0x1b0] sm:$0xff]
  %v69 = vld [vmem:[%s0 + $0x1b8] sm:$0xff]
  %v70 = vld [vmem:[%s1] sm:$0xff]
  %v71 = vld [vmem:[%s1 + $0x8] sm:$0xff]
  %v72 = vld [vmem:[%s1 + $0x10] sm:$0xff]
  %v73 = vld [vmem:[%s1 + $0x18] sm:$0xff]
  %v74 = vld [vmem:[%s1 + $0x20] sm:$0xff]
  %v75 = vld [vmem:[%s1 + $0x28] sm:$0xff]
  %v76 = vld [vmem:[%s1 + $0x30] sm:$0xff]
  %v77 = vld [vmem:[%s1 + $0x38] sm:$0xff]
  %v78 = vld [vmem:[%s1 + $0x40] sm:$0xff]
  %v79 = vld [vmem:[%s1 + $0x48] sm:$0xff]
  %v80 = vld [vmem:[%s1 + $0x50] sm:$0xff]
  %v81 = vld [vmem:[%s1 + $0x58] sm:$0xff]
  %v82 = vld [vmem:[%s1 + $0x60] sm:$0xff]
  %v83 = vld [vmem:[%s1 + $0x68] sm:$0xff]
  %v84 = vld [vmem:[%s1 + $0x70] sm:$0xff]
  %v85 = vld [vmem:[%s1 + $0x78] sm:$0xff]
  %v86 = vld [vmem:[%s1 + $0x80] sm:$0xff]
  %v87 = vld [vmem:[%s1 + $0x88] sm:$0xff]
  %v88 = vld [vmem:[%s1 + $0x90] sm:$0x3f]
  %v89 = vld [vmem:[%s2] sm:$0x1]
  %v91 = vlaneseq
  %v92 = vshrl.u32 %v91, 7
  %v93 = vsub.s32 0, %v92
  %v94 = vrot.slane %v89, %v93
  %vm96 = vcmask 179200
  %v98 = vsel %vm96, %v15, 0
  %v101 = vsel %vm96, %v17, 0
  %v104 = vsel %vm96, %v19, 0
  %v107 = vsel %vm96, %v21, 0
  %v110 = vsel %vm96, %v23, 0
  %v113 = vsel %vm96, %v25, 0
  %v116 = vsel %vm96, %v27, 0
  %v119 = vsel %vm96, %v29, 0
  %v122 = vsel %vm96, %v31, 0
  %v125 = vsel %vm96, %v33, 0
  %v128 = vsel %vm96, %v35, 0
  %v131 = vsel %vm96, %v37, 0
  %v134 = vsel %vm96, %v39, 0
  %v137 = vsel %vm96, %v41, 0
  %v140 = vsel %vm96, %v43, 0
  %v143 = vsel %vm96, %v45, 0
  %v146 = vsel %vm96, %v47, 0
  %v149 = vsel %vm96, %v49, 0
  %v152 = vsel %vm96, %v51, 0
  %v155 = vsel %vm96, %v53, 0
  %v158 = vsel %vm96, %v55, 0
  %v161 = vsel %vm96, %v57, 0
  %v164 = vsel %vm96, %v59, 0
  %v167 = vsel %vm96, %v61, 0
  %v170 = vsel %vm96, %v63, 0
  %v173 = vsel %vm96, %v65, 0
  %v176 = vsel %vm96, %v67, 0
  %v179 = vsel %vm96, %v69, 0
  %vm181 = vcmask 1045504
  %v183 = vsel %vm181, %v88, 0
  %185 = vmatprep.subr.mxu0 0.0
  %186 = vmatpush1.msra.mxu0 %v85
  %187 = vmatprep.subr.mxu0 0.0
  %188 = vmatpush1.msra.mxu0 %v84
  %189 = vmatprep.subr.mxu0 0.0
  %190 = vmatpush1.msra.mxu0 %v83
  %191 = vmatprep.subr.mxu0 0.0
  %192 = vmatpush1.msra.mxu0 %v82
  %193 = vmatprep.subr.mxu0 0.0
  %194 = vmatpush1.msra.mxu0 %v81
  %195 = vmatprep.subr.mxu0 0.0
  %196 = vmatpush1.msra.mxu0 %v80
  %197 = vmatprep.subr.mxu0 0.0
  %198 = vmatpush1.msra.mxu0 %v79
  %199 = vmatprep.subr.mxu0 0.0
  %200 = vmatpush1.msra.mxu0 %v78
  %201 = vmatprep.subr.mxu0 0.0
  %202 = vmatpush1.msra.mxu0 %v77
  %203 = vmatprep.subr.mxu0 0.0
  %204 = vmatpush1.msra.mxu0 %v76
  %205 = vmatprep.subr.mxu0 0.0
  %206 = vmatpush1.msra.mxu0 %v75
  %207 = vmatprep.subr.mxu0 0.0
  %208 = vmatpush1.msra.mxu0 %v74
  %209 = vmatprep.subr.mxu0 0.0
  %210 = vmatpush1.msra.mxu0 %v73
  %211 = vmatprep.subr.mxu0 0.0
  %212 = vmatpush1.msra.mxu0 %v72
  %213 = vmatprep.subr.mxu0 0.0
  %214 = vmatpush1.msra.mxu0 %v71
  %215 = vmatprep.subr.mxu0 0.0
  %216 = vmatpush1.msra.mxu0 %v70
  %217 = vmatprep.subr.mxu0 0.0
  %218 = vmatpush2.msra.mxu0 0.0
  %219 = vmatprep.subr.mxu0 0.0
  %220 = vmatpush2.msra.mxu0 0.0
  %221 = vmatprep.subr.mxu0 0.0
  %222 = vmatpush2.msra.mxu0 0.0
  %223 = vmatprep.subr.mxu0 0.0
  %224 = vmatpush2.msra.mxu0 0.0
  %225 = vmatprep.subr.mxu0 0.0
  %226 = vmatpush2.msra.mxu0 0.0
  %227 = vmatprep.subr.mxu0 0.0
  %228 = vmatpush2.msra.mxu0 0.0
  %229 = vmatprep.subr.mxu0 0.0
  %230 = vmatpush2.msra.mxu0 0.0
  %231 = vmatprep.subr.mxu0 0.0
  %232 = vmatpush2.msra.mxu0 0.0
  %233 = vmatprep.subr.mxu0 0.0
  %234 = vmatpush2.msra.mxu0 0.0
  %235 = vmatprep.subr.mxu0 0.0
  %236 = vmatpush2.msra.mxu0 0.0
  %237 = vmatprep.subr.mxu0 0.0
  %238 = vmatpush2.msra.mxu0 0.0
  %239 = vmatprep.subr.mxu0 0.0
  %240 = vmatpush2.msra.mxu0 0.0
  %241 = vmatprep.subr.mxu0 0.0
  %242 = vmatpush2.msra.mxu0 0.0
  %243 = vmatprep.subr.mxu0 0.0
  %244 = vmatpush2.msra.mxu0 %v183
  %245 = vmatprep.subr.mxu0 0.0
  %246 = vmatpush2.msra.mxu0 %v87
  %247 = vmatprep.subr.mxu0 0.0
  %248 = vmatpush2.msra.mxu0 %v86
  %249 = vmatprep.mubr.f32.mxu0 %v98
  %250 = vmatmul.mubr.f32.gmra.mxu0 %v14
  %v251 = vpop.f32.mrf.mxu0
  %v252 = vadd.f32 %v94, %v251
  %v253 = vpop.f32.mrf.mxu0
  %254 = vmatprep.mubr.f32.mxu0 %v101
  %255 = vmatmul.mubr.f32.gmra.mxu0 %v16
  %v256 = vpop.f32.mrf.mxu0
  %v257 = vadd.f32 %v94, %v256
  %v258 = vpop.f32.mrf.mxu0
  %259 = vmatprep.mubr.f32.mxu0 %v104
  %260 = vmatmul.mubr.f32.gmra.mxu0 %v18
  %v261 = vpop.f32.mrf.mxu0
  %v262 = vadd.f32 %v94, %v261
  %v263 = vpop.f32.mrf.mxu0
  %264 = vmatprep.mubr.f32.mxu0 %v107
  %265 = vmatmul.mubr.f32.gmra.mxu0 %v20
  %v266 = vpop.f32.mrf.mxu0
  %v267 = vadd.f32 %v94, %v266
  %v268 = vpop.f32.mrf.mxu0
  %269 = vmatprep.mubr.f32.mxu0 %v110
  %270 = vmatmul.mubr.f32.gmra.mxu0 %v22
  %v271 = vpop.f32.mrf.mxu0
  %v272 = vadd.f32 %v94, %v271
  %v273 = vpop.f32.mrf.mxu0
  %274 = vmatprep.mubr.f32.mxu0 %v113
  %275 = vmatmul.mubr.f32.gmra.mxu0 %v24
  %v276 = vpop.f32.mrf.mxu0
  %v277 = vadd.f32 %v94, %v276
  %v278 = vpop.f32.mrf.mxu0
  %279 = vmatprep.mubr.f32.mxu0 %v116
  %280 = vmatmul.mubr.f32.gmra.mxu0 %v26
  %v281 = vpop.f32.mrf.mxu0
  %v282 = vadd.f32 %v94, %v281
  %v283 = vpop.f32.mrf.mxu0
  %284 = vmatprep.mubr.f32.mxu0 %v119
  %285 = vmatmul.mubr.f32.gmra.mxu0 %v28
  %v286 = vpop.f32.mrf.mxu0
  %v287 = vadd.f32 %v94, %v286
  %v288 = vpop.f32.mrf.mxu0
  %289 = vmatprep.mubr.f32.mxu0 %v122
  %290 = vmatmul.mubr.f32.gmra.mxu0 %v30
  %v291 = vpop.f32.mrf.mxu0
  %v292 = vadd.f32 %v94, %v291
  %v293 = vpop.f32.mrf.mxu0
  %294 = vmatprep.mubr.f32.mxu0 %v125
  %295 = vmatmul.mubr.f32.gmra.mxu0 %v32
  %v296 = vpop.f32.mrf.mxu0
  %v297 = vadd.f32 %v94, %v296
  %v298 = vpop.f32.mrf.mxu0
  %299 = vmatprep.mubr.f32.mxu0 %v128
  %300 = vmatmul.mubr.f32.gmra.mxu0 %v34
  %v301 = vpop.f32.mrf.mxu0
  %v302 = vadd.f32 %v94, %v301
  %v303 = vpop.f32.mrf.mxu0
  %304 = vmatprep.mubr.f32.mxu0 %v131
  %305 = vmatmul.mubr.f32.gmra.mxu0 %v36
  %v306 = vpop.f32.mrf.mxu0
  %v307 = vadd.f32 %v94, %v306
  %v308 = vpop.f32.mrf.mxu0
  %309 = vmatprep.mubr.f32.mxu0 %v134
  %310 = vmatmul.mubr.f32.gmra.mxu0 %v38
  %v311 = vpop.f32.mrf.mxu0
  %v312 = vadd.f32 %v94, %v311
  %v313 = vpop.f32.mrf.mxu0
  %314 = vmatprep.mubr.f32.mxu0 %v137
  %315 = vmatmul.mubr.f32.gmra.mxu0 %v40
  %v316 = vpop.f32.mrf.mxu0
  %v317 = vadd.f32 %v94, %v316
  %v318 = vpop.f32.mrf.mxu0
  %319 = vmatprep.mubr.f32.mxu0 %v140
  %320 = vmatmul.mubr.f32.gmra.mxu0 %v42
  %v321 = vpop.f32.mrf.mxu0
  %v322 = vadd.f32 %v94, %v321
  %v323 = vpop.f32.mrf.mxu0
  %324 = vmatprep.mubr.f32.mxu0 %v143
  %325 = vmatmul.mubr.f32.gmra.mxu0 %v44
  %v326 = vpop.f32.mrf.mxu0
  %v327 = vadd.f32 %v94, %v326
  %v328 = vpop.f32.mrf.mxu0
  %329 = vmatprep.mubr.f32.mxu0 %v146
  %330 = vmatmul.mubr.f32.gmra.mxu0 %v46
  %v331 = vpop.f32.mrf.mxu0
  %v332 = vadd.f32 %v94, %v331
  %v333 = vpop.f32.mrf.mxu0
  %334 = vmatprep.mubr.f32.mxu0 %v149
  %335 = vmatmul.mubr.f32.gmra.mxu0 %v48
  %v336 = vpop.f32.mrf.mxu0
  %v337 = vadd.f32 %v94, %v336
  %v338 = vpop.f32.mrf.mxu0
  %339 = vmatprep.mubr.f32.mxu0 %v152
  %340 = vmatmul.mubr.f32.gmra.mxu0 %v50
  %v341 = vpop.f32.mrf.mxu0
  %v342 = vadd.f32 %v94, %v341
  %v343 = vpop.f32.mrf.mxu0
  %344 = vmatprep.mubr.f32.mxu0 %v155
  %345 = vmatmul.mubr.f32.gmra.mxu0 %v52
  %v346 = vpop.f32.mrf.mxu0
  %v347 = vadd.f32 %v94, %v346
  %v348 = vpop.f32.mrf.mxu0
  %349 = vmatprep.mubr.f32.mxu0 %v158
  %350 = vmatmul.mubr.f32.gmra.mxu0 %v54
  %v351 = vpop.f32.mrf.mxu0
  %v352 = vadd.f32 %v94, %v351
  %v353 = vpop.f32.mrf.mxu0
  %354 = vmatprep.mubr.f32.mxu0 %v161
  %355 = vmatmul.mubr.f32.gmra.mxu0 %v56
  %v356 = vpop.f32.mrf.mxu0
  %v357 = vadd.f32 %v94, %v356
  %v358 = vpop.f32.mrf.mxu0
  %359 = vmatprep.mubr.f32.mxu0 %v164
  %360 = vmatmul.mubr.f32.gmra.mxu0 %v58
  %v361 = vpop.f32.mrf.mxu0
  %v362 = vadd.f32 %v94, %v361
  %v363 = vpop.f32.mrf.mxu0
  %364 = vmatprep.mubr.f32.mxu0 %v167
  %365 = vmatmul.mubr.f32.gmra.mxu0 %v60
  %v366 = vpop.f32.mrf.mxu0
  %v367 = vadd.f32 %v94, %v366
  %v368 = vpop.f32.mrf.mxu0
  %369 = vmatprep.mubr.f32.mxu0 %v170
  %370 = vmatmul.mubr.f32.gmra.mxu0 %v62
  %v371 = vpop.f32.mrf.mxu0
  %v372 = vadd.f32 %v94, %v371
  %v373 = vpop.f32.mrf.mxu0
  %374 = vmatprep.mubr.f32.mxu0 %v173
  %375 = vmatmul.mubr.f32.gmra.mxu0 %v64
  %v376 = vpop.f32.mrf.mxu0
  %v377 = vadd.f32 %v94, %v376
  %v378 = vpop.f32.mrf.mxu0
  %379 = vmatprep.mubr.f32.mxu0 %v176
  %380 = vmatmul.mubr.f32.gmra.mxu0 %v66
  %v381 = vpop.f32.mrf.mxu0
  %v382 = vadd.f32 %v94, %v381
  %v383 = vpop.f32.mrf.mxu0
  %384 = vmatprep.mubr.f32.mxu0 %v179
  %385 = vmatmul.mubr.f32.gmra.mxu0 %v68
  %v386 = vpop.f32.mrf.mxu0
  %v387 = vadd.f32 %v94, %v386
  %v388 = vpop.f32.mrf.mxu0
  %389 = vdwg.mxu0
  %v390 = vmax.f32 %v252, 0.0
  %v391 = vmax.f32 %v257, 0.0
  %v392 = vmax.f32 %v262, 0.0
  %v393 = vmax.f32 %v267, 0.0
  %v394 = vmax.f32 %v272, 0.0
  %v395 = vmax.f32 %v277, 0.0
  %v396 = vmax.f32 %v282, 0.0
  %v397 = vmax.f32 %v287, 0.0
  %v398 = vmax.f32 %v292, 0.0
  %v399 = vmax.f32 %v297, 0.0
  %v400 = vmax.f32 %v302, 0.0
  %v401 = vmax.f32 %v307, 0.0
  %v402 = vmax.f32 %v312, 0.0
  %v403 = vmax.f32 %v317, 0.0
  %v404 = vmax.f32 %v322, 0.0
  %v405 = vmax.f32 %v327, 0.0
  %v406 = vmax.f32 %v332, 0.0
  %v407 = vmax.f32 %v337, 0.0
  %v408 = vmax.f32 %v342, 0.0
  %v409 = vmax.f32 %v347, 0.0
  %v410 = vmax.f32 %v352, 0.0
  %v411 = vmax.f32 %v357, 0.0
  %v412 = vmax.f32 %v362, 0.0
  %v413 = vmax.f32 %v367, 0.0
  %v414 = vmax.f32 %v372, 0.0
  %v415 = vmax.f32 %v377, 0.0
  %v416 = vmax.f32 %v382, 0.0
  %v417 = vmax.f32 %v387, 0.0
  %v418 = vmax.f32 %v390, %v397
  %v419 = vmax.f32 %v391, %v398
  %v420 = vmax.f32 %v392, %v399
  %v421 = vmax.f32 %v393, %v400
  %v422 = vmax.f32 %v394, %v401
  %v423 = vmax.f32 %v395, %v402
  %v424 = vmax.f32 %v396, %v403
  %v425 = vmax.f32 %v404, %v411
  %v426 = vmax.f32 %v405, %v412
  %v427 = vmax.f32 %v406, %v413
  %v428 = vmax.f32 %v407, %v414
  %v429 = vmax.f32 %v408, %v415
  %v430 = vmax.f32 %v409, %v416
  %v431 = vmax.f32 %v410, %v417
  %v432 = vmax.f32 %v418, %v425
  %v433 = vmax.f32 %v419, %v426
  %v434 = vmax.f32 %v420, %v427
  %v435 = vmax.f32 %v421, %v428
  %v436 = vmax.f32 %v422, %v429
  %v437 = vmax.f32 %v423, %v430
  %v438 = vmax.f32 %v424, %v431
  %vm439 = vcmask 130048
  %440 = vst.msk [vmem:[%s3] sm:$0xff] %vm439, %v432
  %441 = vst.msk [vmem:[%s3 + $0x8] sm:$0xff] %vm439, %v433
  %442 = vst.msk [vmem:[%s3 + $0x10] sm:$0xff] %vm439, %v434
  %443 = vst.msk [vmem:[%s3 + $0x18] sm:$0xff] %vm439, %v435
  %444 = vst.msk [vmem:[%s3 + $0x20] sm:$0xff] %vm439, %v436
  %445 = vst.msk [vmem:[%s3 + $0x28] sm:$0xff] %vm439, %v437
  %446 = vst.msk [vmem:[%s3 + $0x30] sm:$0xff] %vm439, %v438
  // Predicated region
  $region14: #{cnn_forward.4} parent=0 // pred_check
    _
  $region15: #{cnn_forward.4} parent=0 // pred_check_branch
    %448 = sbr.rel (0) target = $region17
  $region16: #{cnn_forward.4} parent=0 // pred_region
    _
  $region17: #{cnn_forward.4} parent=0 // pred_fallthru
    _
  // Predicated region
  $region18: #{cnn_forward.4} parent=0 // pred_check
    _
  $region19: #{cnn_forward.4} parent=0 // pred_check_branch
    %450 = sbr.rel (0) target = $region21
  $region20: #{cnn_forward.4} parent=0 // pred_region
    _
  $region21: #{cnn_forward.4} parent=0 // pred_fallthru
    _

// kernel: cnn_forward.5
$region0: #{cnn_forward.5}
  #allocation0 [shape = 'u32[]', space=smem, size = 0x4, offset = 0x4, fixed_abs, tag = 'smem constant byte address 0x4 - core index']
  #allocation1 [shape = 'u32[144,128]{1,0:T(1,128)}', space=vmem, size = 0x12000, scoped, tag = 'internal scratch']
  %s0 = inlined_call_operand.vmem [shape: f32[8,400], index: 0, kind: input, shape index: {}]
  %s1 = inlined_call_operand.vmem [shape: f32[400,120], index: 1, kind: input, shape index: {}]
  %s2 = inlined_call_operand.vmem [shape: f32[1,120], index: 2, kind: input, shape index: {}]
  %s3 = inlined_call_operand.vmem [shape: f32[120,84], index: 3, kind: input, shape index: {}]
  %s4 = inlined_call_operand.vmem [shape: f32[1,84], index: 4, kind: input, shape index: {}]
  %s5 = inlined_call_operand.vmem [shape: f32[84,10], index: 5, kind: input, shape index: {}]
  %s6 = inlined_call_operand.vmem [shape: f32[1,10], index: 6, kind: input, shape index: {}]
  %s7 = inlined_call_operand.vmem [shape: f32[8,10], index: 7, kind: output, shape index: {}]
  %s8 = sld [smem:[#allocation0]]
  $region38: #{cnn_forward.5} parent=0
    _
  %s10 = ssub.s32 1, %s8
  %s11 = scalar_select 0, %s10, %s8
  // Predicated region
  $region2: #{cnn_forward.5} parent=0 // pred_check
    _
  $region3: #{cnn_forward.5} parent=0 // pred_check_branch
    %13 = sbr.rel (0) target = $region5
  $region4: #{cnn_forward.5} parent=0 // pred_region
    _
  $region5: #{cnn_forward.5} parent=0 // pred_fallthru
    _
  // Predicated region
  $region6: #{cnn_forward.5} parent=0 // pred_check
    _
  $region7: #{cnn_forward.5} parent=0 // pred_check_branch
    %15 = sbr.rel (0) target = $region9
  $region8: #{cnn_forward.5} parent=0 // pred_region
    _
  $region9: #{cnn_forward.5} parent=0 // pred_fallthru
    _
  // Predicated region
  $region10: #{cnn_forward.5} parent=0 // pred_check
    _
  $region11: #{cnn_forward.5} parent=0 // pred_check_branch
    %17 = sbr.rel (0) target = $region13
  $region12: #{cnn_forward.5} parent=0 // pred_region
    _
  $region13: #{cnn_forward.5} parent=0 // pred_fallthru
    _
  // Predicated region
  $region14: #{cnn_forward.5} parent=0 // pred_check
    _
  $region15: #{cnn_forward.5} parent=0 // pred_check_branch
    %19 = sbr.rel (0) target = $region17
  $region16: #{cnn_forward.5} parent=0 // pred_region
    _
  $region17: #{cnn_forward.5} parent=0 // pred_fallthru
    _
  // Predicated region
  $region18: #{cnn_forward.5} parent=0 // pred_check
    _
  $region19: #{cnn_forward.5} parent=0 // pred_check_branch
    %21 = sbr.rel (0) target = $region21
  $region20: #{cnn_forward.5} parent=0 // pred_region
    _
  $region21: #{cnn_forward.5} parent=0 // pred_fallthru
    _
  // Predicated region
  $region22: #{cnn_forward.5} parent=0 // pred_check
    _
  $region23: #{cnn_forward.5} parent=0 // pred_check_branch
    %23 = sbr.rel (0) target = $region25
  $region24: #{cnn_forward.5} parent=0 // pred_region
    _
  $region25: #{cnn_forward.5} parent=0 // pred_fallthru
    _
  // Predicated region
  $region26: #{cnn_forward.5} parent=0 // pred_check
    _
  $region27: #{cnn_forward.5} parent=0 // pred_check_branch
    %25 = sbr.rel (0) target = $region29
  $region28: #{cnn_forward.5} parent=0 // pred_region
    _
  $region29: #{cnn_forward.5} parent=0 // pred_fallthru
    _
  %v26 = vld [vmem:[%s0] sm:$0xff]
  %v27 = vld [vmem:[%s0 + $0x8] sm:$0xff]
  %v28 = vld [vmem:[%s0 + $0x10] sm:$0xff]
  %v29 = vld [vmem:[%s0 + $0x18] sm:$0xff]
  %v30 = vld [vmem:[%s1] sm:$0xff]
  %v31 = vld [vmem:[%s1 + $0x8] sm:$0xff]
  %v32 = vld [vmem:[%s1 + $0x10] sm:$0xff]
  %v33 = vld [vmem:[%s1 + $0x18] sm:$0xff]
  %v34 = vld [vmem:[%s1 + $0x20] sm:$0xff]
  %v35 = vld [vmem:[%s1 + $0x28] sm:$0xff]
  %v36 = vld [vmem:[%s1 + $0x30] sm:$0xff]
  %v37 = vld [vmem:[%s1 + $0x38] sm:$0xff]
  %v38 = vld [vmem:[%s1 + $0x40] sm:$0xff]
  %v39 = vld [vmem:[%s1 + $0x48] sm:$0xff]
  %v40 = vld [vmem:[%s1 + $0x50] sm:$0xff]
  %v41 = vld [vmem:[%s1 + $0x58] sm:$0xff]
  %v42 = vld [vmem:[%s1 + $0x60] sm:$0xff]
  %v43 = vld [vmem:[%s1 + $0x68] sm:$0xff]
  %v44 = vld [vmem:[%s1 + $0x70] sm:$0xff]
  %v45 = vld [vmem:[%s1 + $0x78] sm:$0xff]
  %v46 = vld [vmem:[%s1 + $0x80] sm:$0xff]
  %v47 = vld [vmem:[%s1 + $0x88] sm:$0xff]
  %v48 = vld [vmem:[%s1 + $0x90] sm:$0xff]
  %v49 = vld [vmem:[%s1 + $0x98] sm:$0xff]
  %v50 = vld [vmem:[%s1 + $0xa0] sm:$0xff]
  %v51 = vld [vmem:[%s1 + $0xa8] sm:$0xff]
  %v52 = vld [vmem:[%s1 + $0xb0] sm:$0xff]
  %v53 = vld [vmem:[%s1 + $0xb8] sm:$0xff]
  %v54 = vld [vmem:[%s1 + $0xc0] sm:$0xff]
  %v55 = vld [vmem:[%s1 + $0xc8] sm:$0xff]
  %v56 = vld [vmem:[%s1 + $0xd0] sm:$0xff]
  %v57 = vld [vmem:[%s1 + $0xd8] sm:$0xff]
  %v58 = vld [vmem:[%s1 + $0xe0] sm:$0xff]
  %v59 = vld [vmem:[%s1 + $0xe8] sm:$0xff]
  %v60 = vld [vmem:[%s1 + $0xf0] sm:$0xff]
  %v61 = vld [vmem:[%s1 + $0xf8] sm:$0xff]
  %v62 = vld [vmem:[%s1 + $0x100] sm:$0xff]
  %v63 = vld [vmem:[%s1 + $0x108] sm:$0xff]
  %v64 = vld [vmem:[%s1 + $0x110] sm:$0xff]
  %v65 = vld [vmem:[%s1 + $0x118] sm:$0xff]
  %v66 = vld [vmem:[%s1 + $0x120] sm:$0xff]
  %v67 = vld [vmem:[%s1 + $0x128] sm:$0xff]
  %v68 = vld [vmem:[%s1 + $0x130] sm:$0xff]
  %v69 = vld [vmem:[%s1 + $0x138] sm:$0xff]
  %v70 = vld [vmem:[%s1 + $0x140] sm:$0xff]
  %v71 = vld [vmem:[%s1 + $0x148] sm:$0xff]
  %v72 = vld [vmem:[%s1 + $0x150] sm:$0xff]
  %v73 = vld [vmem:[%s1 + $0x158] sm:$0xff]
  %v74 = vld [vmem:[%s1 + $0x160] sm:$0xff]
  %v75 = vld [vmem:[%s1 + $0x168] sm:$0xff]
  %v76 = vld [vmem:[%s1 + $0x170] sm:$0xff]
  %v77 = vld [vmem:[%s1 + $0x178] sm:$0xff]
  %v78 = vld [vmem:[%s1 + $0x180] sm:$0xff]
  %v79 = vld [vmem:[%s1 + $0x188] sm:$0xff]
  %v80 = vld [vmem:[%s2] sm:$0x1]
  %v82 = vlaneseq
  %v83 = vshrl.u32 %v82, 7
  %v84 = vsub.s32 0, %v83
  %v85 = vrot.slane %v80, %v84
  %vm87 = vcmask 130048
  %v89 = vsel %vm87, %v29, 0
  %91 = vmatprep.subr.mxu0 0.0
  %92 = vmatpush1.msra.mxu0 %v45
  %93 = vmatprep.subr.mxu0 0.0
  %94 = vmatpush1.msra.mxu0 %v44
  %95 = vmatprep.subr.mxu0 0.0
  %96 = vmatpush1.msra.mxu0 %v43
  %97 = vmatprep.subr.mxu0 0.0
  %98 = vmatpush1.msra.mxu0 %v42
  %99 = vmatprep.subr.mxu0 0.0
  %100 = vmatpush1.msra.mxu0 %v41
  %101 = vmatprep.subr.mxu0 0.0
  %102 = vmatpush1.msra.mxu0 %v40
  %103 = vmatprep.subr.mxu0 0.0
  %104 = vmatpush1.msra.mxu0 %v39
  %105 = vmatprep.subr.mxu0 0.0
  %106 = vmatpush1.msra.mxu0 %v38
  %107 = vmatprep.subr.mxu0 0.0
  %108 = vmatpush1.msra.mxu0 %v37
  %109 = vmatprep.subr.mxu0 0.0
  %110 = vmatpush1.msra.mxu0 %v36
  %111 = vmatprep.subr.mxu0 0.0
  %112 = vmatpush1.msra.mxu0 %v35
  %113 = vmatprep.subr.mxu0 0.0
  %114 = vmatpush1.msra.mxu0 %v34
  %115 = vmatprep.subr.mxu0 0.0
  %116 = vmatpush1.msra.mxu0 %v33
  %117 = vmatprep.subr.mxu0 0.0
  %118 = vmatpush1.msra.mxu0 %v32
  %119 = vmatprep.subr.mxu0 0.0
  %120 = vmatpush1.msra.mxu0 %v31
  %121 = vmatprep.subr.mxu0 0.0
  %122 = vmatpush1.msra.mxu0 %v30
  %123 = vmatprep.subr.mxu0 0.0
  %124 = vmatpush2.msra.mxu0 %v61
  %125 = vmatprep.subr.mxu0 0.0
  %126 = vmatpush2.msra.mxu0 %v60
  %127 = vmatprep.subr.mxu0 0.0
  %128 = vmatpush2.msra.mxu0 %v59
  %129 = vmatprep.subr.mxu0 0.0
  %130 = vmatpush2.msra.mxu0 %v58
  %131 = vmatprep.subr.mxu0 0.0
  %132 = vmatpush2.msra.mxu0 %v57
  %133 = vmatprep.subr.mxu0 0.0
  %134 = vmatpush2.msra.mxu0 %v56
  %135 = vmatprep.subr.mxu0 0.0
  %136 = vmatpush2.msra.mxu0 %v55
  %137 = vmatprep.subr.mxu0 0.0
  %138 = vmatpush2.msra.mxu0 %v54
  %139 = vmatprep.subr.mxu0 0.0
  %140 = vmatpush2.msra.mxu0 %v53
  %141 = vmatprep.subr.mxu0 0.0
  %142 = vmatpush2.msra.mxu0 %v52
  %143 = vmatprep.subr.mxu0 0.0
  %144 = vmatpush2.msra.mxu0 %v51
  %145 = vmatprep.subr.mxu0 0.0
  %146 = vmatpush2.msra.mxu0 %v50
  %147 = vmatprep.subr.mxu0 0.0
  %148 = vmatpush2.msra.mxu0 %v49
  %149 = vmatprep.subr.mxu0 0.0
  %150 = vmatpush2.msra.mxu0 %v48
  %151 = vmatprep.subr.mxu0 0.0
  %152 = vmatpush2.msra.mxu0 %v47
  %153 = vmatprep.subr.mxu0 0.0
  %154 = vmatpush2.msra.mxu0 %v46
  %155 = vmatprep.mubr.f32.mxu0 %v27
  %156 = vmatmul.mubr.f32.gmra.mxu0 %v26
  %v157 = vpop.f32.mrf.mxu0
  %v158 = vadd.f32 %v85, %v157
  %v159 = vpop.f32.mrf.mxu0
  %160 = vdwg.mxu0
  %161 = vmatprep.subr.mxu0 0.0
  %162 = vmatpush1.msra.mxu0 %v77
  %163 = vmatprep.subr.mxu0 0.0
  %164 = vmatpush1.msra.mxu0 %v76
  %165 = vmatprep.subr.mxu0 0.0
  %166 = vmatpush1.msra.mxu0 %v75
  %167 = vmatprep.subr.mxu0 0.0
  %168 = vmatpush1.msra.mxu0 %v74
  %169 = vmatprep.subr.mxu0 0.0
  %170 = vmatpush1.msra.mxu0 %v73
  %171 = vmatprep.subr.mxu0 0.0
  %172 = vmatpush1.msra.mxu0 %v72
  %173 = vmatprep.subr.mxu0 0.0
  %174 = vmatpush1.msra.mxu0 %v71
  %175 = vmatprep.subr.mxu0 0.0
  %176 = vmatpush1.msra.mxu0 %v70
  %177 = vmatprep.subr.mxu0 0.0
  %178 = vmatpush1.msra.mxu0 %v69
  %179 = vmatprep.subr.mxu0 0.0
  %180 = vmatpush1.msra.mxu0 %v68
  %181 = vmatprep.subr.mxu0 0.0
  %182 = vmatpush1.msra.mxu0 %v67
  %183 = vmatprep.subr.mxu0 0.0
  %184 = vmatpush1.msra.mxu0 %v66
  %185 = vmatprep.subr.mxu0 0.0
  %186 = vmatpush1.msra.mxu0 %v65
  %187 = vmatprep.subr.mxu0 0.0
  %188 = vmatpush1.msra.mxu0 %v64
  %189 = vmatprep.subr.mxu0 0.0
  %190 = vmatpush1.msra.mxu0 %v63
  %191 = vmatprep.subr.mxu0 0.0
  %192 = vmatpush1.msra.mxu0 %v62
  %193 = vmatprep.subr.mxu0 0.0
  %194 = vmatpush2.msra.mxu0 0.0
  %195 = vmatprep.subr.mxu0 0.0
  %196 = vmatpush2.msra.mxu0 0.0
  %197 = vmatprep.subr.mxu0 0.0
  %198 = vmatpush2.msra.mxu0 0.0
  %199 = vmatprep.subr.mxu0 0.0
  %200 = vmatpush2.msra.mxu0 0.0
  %201 = vmatprep.subr.mxu0 0.0
  %202 = vmatpush2.msra.mxu0 0.0
  %203 = vmatprep.subr.mxu0 0.0
  %204 = vmatpush2.msra.mxu0 0.0
  %205 = vmatprep.subr.mxu0 0.0
  %206 = vmatpush2.msra.mxu0 0.0
  %207 = vmatprep.subr.mxu0 0.0
  %208 = vmatpush2.msra.mxu0 0.0
  %209 = vmatprep.subr.mxu0 0.0
  %210 = vmatpush2.msra.mxu0 0.0
  %211 = vmatprep.subr.mxu0 0.0
  %212 = vmatpush2.msra.mxu0 0.0
  %213 = vmatprep.subr.mxu0 0.0
  %214 = vmatpush2.msra.mxu0 0.0
  %215 = vmatprep.subr.mxu0 0.0
  %216 = vmatpush2.msra.mxu0 0.0
  %217 = vmatprep.subr.mxu0 0.0
  %218 = vmatpush2.msra.mxu0 0.0
  %219 = vmatprep.subr.mxu0 0.0
  %220 = vmatpush2.msra.mxu0 0.0
  %221 = vmatprep.subr.mxu0 0.0
  %222 = vmatpush2.msra.mxu0 %v79
  %223 = vmatprep.subr.mxu0 0.0
  %224 = vmatpush2.msra.mxu0 %v78
  %225 = vmatprep.mubr.f32.mxu0 %v89
  %226 = vmatmul.mubr.f32.gmra.mxu0 %v28
  %v227 = vpop.f32.mrf.mxu0
  %v228 = vadd.f32 %v158, %v227
  %v229 = vpop.f32.mrf.mxu0
  %230 = vdwg.mxu0
  %v231 = vmax.f32 %v228, 0.0
  %v232 = vld [vmem:[%s3] sm:$0xff]
  %v233 = vld [vmem:[%s3 + $0x8] sm:$0xff]
  %v234 = vld [vmem:[%s3 + $0x10] sm:$0xff]
  %v235 = vld [vmem:[%s3 + $0x18] sm:$0xff]
  %v236 = vld [vmem:[%s3 + $0x20] sm:$0xff]
  %v237 = vld [vmem:[%s3 + $0x28] sm:$0xff]
  %v238 = vld [vmem:[%s3 + $0x30] sm:$0xff]
  %v239 = vld [vmem:[%s3 + $0x38] sm:$0xff]
  %v240 = vld [vmem:[%s3 + $0x40] sm:$0xff]
  %v241 = vld [vmem:[%s3 + $0x48] sm:$0xff]
  %v242 = vld [vmem:[%s3 + $0x50] sm:$0xff]
  %v243 = vld [vmem:[%s3 + $0x58] sm:$0xff]
  %v244 = vld [vmem:[%s3 + $0x60] sm:$0xff]
  %v245 = vld [vmem:[%s3 + $0x68] sm:$0xff]
  %v246 = vld [vmem:[%s3 + $0x70] sm:$0xff]
  %v247 = vld [vmem:[%s4] sm:$0x1]
  %v249 = vlaneseq
  %v250 = vshrl.u32 %v249, 7
  %v251 = vsub.s32 0, %v250
  %v252 = vrot.slane %v247, %v251
  %vm254 = vcmask 982016
  %v256 = vsel %vm254, %v231, 0
  %258 = vmatprep.subr.mxu0 0.0
  %259 = vmatpush1.msra.mxu0 0.0
  %260 = vmatprep.subr.mxu0 0.0
  %261 = vmatpush1.msra.mxu0 %v246
  %262 = vmatprep.subr.mxu0 0.0
  %263 = vmatpush1.msra.mxu0 %v245
  %264 = vmatprep.subr.mxu0 0.0
  %265 = vmatpush1.msra.mxu0 %v244
  %266 = vmatprep.subr.mxu0 0.0
  %267 = vmatpush1.msra.mxu0 %v243
  %268 = vmatprep.subr.mxu0 0.0
  %269 = vmatpush1.msra.mxu0 %v242
  %270 = vmatprep.subr.mxu0 0.0
  %271 = vmatpush1.msra.mxu0 %v241
  %272 = vmatprep.subr.mxu0 0.0
  %273 = vmatpush1.msra.mxu0 %v240
  %274 = vmatprep.subr.mxu0 0.0
  %275 = vmatpush1.msra.mxu0 %v239
  %276 = vmatprep.subr.mxu0 0.0
  %277 = vmatpush1.msra.mxu0 %v238
  %278 = vmatprep.subr.mxu0 0.0
  %279 = vmatpush1.msra.mxu0 %v237
  %280 = vmatprep.subr.mxu0 0.0
  %281 = vmatpush1.msra.mxu0 %v236
  %282 = vmatprep.subr.mxu0 0.0
  %283 = vmatpush1.msra.mxu0 %v235
  %284 = vmatprep.subr.mxu0 0.0
  %285 = vmatpush1.msra.mxu0 %v234
  %286 = vmatprep.subr.mxu0 0.0
  %287 = vmatpush1.msra.mxu0 %v233
  %288 = vmatprep.subr.mxu0 0.0
  %289 = vmatpush1.msra.mxu0 %v232
  %290 = vmatprep.subr.mxu0 0.0
  %291 = vmatpush2.msra.mxu0 0.0
  %292 = vmatprep.subr.mxu0 0.0
  %293 = vmatpush2.msra.mxu0 0.0
  %294 = vmatprep.subr.mxu0 0.0
  %295 = vmatpush2.msra.mxu0 0.0
  %296 = vmatprep.subr.mxu0 0.0
  %297 = vmatpush2.msra.mxu0 0.0
  %298 = vmatprep.subr.mxu0 0.0
  %299 = vmatpush2.msra.mxu0 0.0
  %300 = vmatprep.subr.mxu0 0.0
  %301 = vmatpush2.msra.mxu0 0.0
  %302 = vmatprep.subr.mxu0 0.0
  %303 = vmatpush2.msra.mxu0 0.0
  %304 = vmatprep.subr.mxu0 0.0
  %305 = vmatpush2.msra.mxu0 0.0
  %306 = vmatprep.subr.mxu0 0.0
  %307 = vmatpush2.msra.mxu0 0.0
  %308 = vmatprep.subr.mxu0 0.0
  %309 = vmatpush2.msra.mxu0 0.0
  %310 = vmatprep.subr.mxu0 0.0
  %311 = vmatpush2.msra.mxu0 0.0
  %312 = vmatprep.subr.mxu0 0.0
  %313 = vmatpush2.msra.mxu0 0.0
  %314 = vmatprep.subr.mxu0 0.0
  %315 = vmatpush2.msra.mxu0 0.0
  %316 = vmatprep.subr.mxu0 0.0
  %317 = vmatpush2.msra.mxu0 0.0
  %318 = vmatprep.subr.mxu0 0.0
  %319 = vmatpush2.msra.mxu0 0.0
  %320 = vmatprep.subr.mxu0 0.0
  %321 = vmatpush2.msra.mxu0 0.0
  %322 = vmatprep.mubr.f32.mxu0 0.0
  %323 = vmatmul.mubr.f32.gmra.mxu0 %v256
  %v324 = vpop.f32.mrf.mxu0
  %v325 = vadd.f32 %v252, %v324
  %v326 = vpop.f32.mrf.mxu0
  %327 = vdwg.mxu0
  %v328 = vmax.f32 %v325, 0.0
  %v329 = vld [vmem:[%s5] sm:$0xff]
  %v330 = vld [vmem:[%s5 + $0x8] sm:$0xff]
  %v331 = vld [vmem:[%s5 + $0x10] sm:$0xff]
  %v332 = vld [vmem:[%s5 + $0x18] sm:$0xff]
  %v333 = vld [vmem:[%s5 + $0x20] sm:$0xff]
  %v334 = vld [vmem:[%s5 + $0x28] sm:$0xff]
  %v335 = vld [vmem:[%s5 + $0x30] sm:$0xff]
  %v336 = vld [vmem:[%s5 + $0x38] sm:$0xff]
  %v337 = vld [vmem:[%s5 + $0x40] sm:$0xff]
  %v338 = vld [vmem:[%s5 + $0x48] sm:$0xff]
  %v339 = vld [vmem:[%s5 + $0x50] sm:$0xf]
  %v340 = vld [vmem:[%s6] sm:$0x1]
  %v342 = vlaneseq
  %v343 = vshrl.u32 %v342, 7
  %v344 = vsub.s32 0, %v343
  %v345 = vrot.slane %v340, %v344
  %vm347 = vcmask 687104
  %v349 = vsel %vm347, %v328, 0
  %vm351 = vcmask 1043456
  %v353 = vsel %vm351, %v339, 0
  %355 = vmatprep.subr.mxu0 0.0
  %356 = vmatpush1.msra.mxu0 0.0
  %357 = vmatprep.subr.mxu0 0.0
  %358 = vmatpush1.msra.mxu0 0.0
  %359 = vmatprep.subr.mxu0 0.0
  %360 = vmatpush1.msra.mxu0 0.0
  %361 = vmatprep.subr.mxu0 0.0
  %362 = vmatpush1.msra.mxu0 0.0
  %363 = vmatprep.subr.mxu0 0.0
  %364 = vmatpush1.msra.mxu0 0.0
  %365 = vmatprep.subr.mxu0 0.0
  %366 = vmatpush1.msra.mxu0 %v353
  %367 = vmatprep.subr.mxu0 0.0
  %368 = vmatpush1.msra.mxu0 %v338
  %369 = vmatprep.subr.mxu0 0.0
  %370 = vmatpush1.msra.mxu0 %v337
  %371 = vmatprep.subr.mxu0 0.0
  %372 = vmatpush1.msra.mxu0 %v336
  %373 = vmatprep.subr.mxu0 0.0
  %374 = vmatpush1.msra.mxu0 %v335
  %375 = vmatprep.subr.mxu0 0.0
  %376 = vmatpush1.msra.mxu0 %v334
  %377 = vmatprep.subr.mxu0 0.0
  %378 = vmatpush1.msra.mxu0 %v333
  %379 = vmatprep.subr.mxu0 0.0
  %380 = vmatpush1.msra.mxu0 %v332
  %381 = vmatprep.subr.mxu0 0.0
  %382 = vmatpush1.msra.mxu0 %v331
  %383 = vmatprep.subr.mxu0 0.0
  %384 = vmatpush1.msra.mxu0 %v330
  %385 = vmatprep.subr.mxu0 0.0
  %386 = vmatpush1.msra.mxu0 %v329
  %387 = vmatprep.subr.mxu0 0.0
  %388 = vmatpush2.msra.mxu0 0.0
  %389 = vmatprep.subr.mxu0 0.0
  %390 = vmatpush2.msra.mxu0 0.0
  %391 = vmatprep.subr.mxu0 0.0
  %392 = vmatpush2.msra.mxu0 0.0
  %393 = vmatprep.subr.mxu0 0.0
  %394 = vmatpush2.msra.mxu0 0.0
  %395 = vmatprep.subr.mxu0 0.0
  %396 = vmatpush2.msra.mxu0 0.0
  %397 = vmatprep.subr.mxu0 0.0
  %398 = vmatpush2.msra.mxu0 0.0
  %399 = vmatprep.subr.mxu0 0.0
  %400 = vmatpush2.msra.mxu0 0.0
  %401 = vmatprep.subr.mxu0 0.0
  %402 = vmatpush2.msra.mxu0 0.0
  %403 = vmatprep.subr.mxu0 0.0
  %404 = vmatpush2.msra.mxu0 0.0
  %405 = vmatprep.subr.mxu0 0.0
  %406 = vmatpush2.msra.mxu0 0.0
  %407 = vmatprep.subr.mxu0 0.0
  %408 = vmatpush2.msra.mxu0 0.0
  %409 = vmatprep.subr.mxu0 0.0
  %410 = vmatpush2.msra.mxu0 0.0
  %411 = vmatprep.subr.mxu0 0.0
  %412 = vmatpush2.msra.mxu0 0.0
  %413 = vmatprep.subr.mxu0 0.0
  %414 = vmatpush2.msra.mxu0 0.0
  %415 = vmatprep.subr.mxu0 0.0
  %416 = vmatpush2.msra.mxu0 0.0
  %417 = vmatprep.subr.mxu0 0.0
  %418 = vmatpush2.msra.mxu0 0.0
  %419 = vmatprep.mubr.f32.mxu0 0.0
  %420 = vmatmul.mubr.f32.gmra.mxu0 %v349
  %v421 = vpop.f32.mrf.mxu0
  %v422 = vadd.f32 %v345, %v421
  %v423 = vpop.f32.mrf.mxu0
  %424 = vdwg.mxu0
  %vm425 = vcmask 80896
  %426 = vst.msk [vmem:[%s7] sm:$0xff] %vm425, %v422
  // Predicated region
  $region30: #{cnn_forward.5} parent=0 // pred_check
    _
  $region31: #{cnn_forward.5} parent=0 // pred_check_branch
    %428 = sbr.rel (0) target = $region33
  $region32: #{cnn_forward.5} parent=0 // pred_region
    _
  $region33: #{cnn_forward.5} parent=0 // pred_fallthru
    _
  // Predicated region
  $region34: #{cnn_forward.5} parent=0 // pred_check
    _
  $region35: #{cnn_forward.5} parent=0 // pred_check_branch
    %430 = sbr.rel (0) target = $region37
  $region36: #{cnn_forward.5} parent=0 // pred_region
    _
  $region37: #{cnn_forward.5} parent=0 // pred_fallthru
    _

</llo_original>
